<compile_context>
chip_gen: v6e
topology: v6e:2x2x1
jax: 0.10.0
libtpu: 0.0.40
codegen_flags: <defaults>
</compile_context>

<pallas_src>
import jax
import jax.numpy as jnp
from jax import lax
from jax.experimental import pallas as pl
from jax.experimental.pallas import tpu as pltpu

HIDDEN1, HIDDEN2, HIDDEN3 = 512, 128, 32

VMEM_TILE_BUDGET = 40 * 1024 * 1024   # tile-selection budget (safe on v7x: 64 MiB physical)
VMEM_LIMIT_BYTES = 48 * 1024 * 1024   # scoped-VMEM limit handed to Mosaic


def _round_up(x, m):
    return ((x + m - 1) // m) * m


# ----------------------------- kernels ---------------------------------------

def _mlp_resident_kernel(x_ref, w1_ref, b1_ref, w2_ref, b2_ref, w3_ref, b3_ref,
                         w4_ref, b4_ref, o_ref):
    """Grid = (batch_tiles,). w1 is VMEM-resident (constant index_map -> DMA'd once)."""
    # Layer 1: x cast to bf16 in-kernel (avoids a wrapper-side pad/cast pass over x).
    h1 = jnp.dot(x_ref[...].astype(jnp.bfloat16), w1_ref[...],
                 preferred_element_type=jnp.float32) + b1_ref[...]
    h1 = jnp.maximum(h1, 0.0)                       # Dropout(0.3): identity at inference
    # Layer 2
    h2 = jnp.dot(h1.astype(jnp.bfloat16), w2_ref[...],
                 preferred_element_type=jnp.float32) + b2_ref[...]
    h2 = jnp.maximum(h2, 0.0)                       # Dropout(0.2): identity at inference
    # Layer 3
    h3 = jnp.dot(h2.astype(jnp.bfloat16), w3_ref[...],
                 preferred_element_type=jnp.float32) + b3_ref[...]
    h3 = jnp.maximum(h3, 0.0)
    # Classifier Linear(32,1): contract the 32-feature axis with the batch in lanes
    # -> (1, TILE_B) lane-dense logits (unmasked vector stores).
    logits = lax.dot_general(
        w4_ref[...], h3.astype(jnp.bfloat16),
        dimension_numbers=(((1,), (1,)), ((), ())),
        preferred_element_type=jnp.float32) + b4_ref[0, 0]
    o_ref[...] = jax.nn.sigmoid(logits).astype(o_ref.dtype)


def _mlp_ktiled_kernel(x_ref, w1_ref, b1_ref, w2_ref, b2_ref, w3_ref, b3_ref,
                       w4_ref, b4_ref, o_ref, h1_acc):
    """Fallback for very large D. Grid = (batch_tiles, k_tiles); layer-1 K reduction is
    tiled into an f32 VMEM accumulator; layers 2-4 + sigmoid run on the last K step."""
    k = pl.program_id(1)
    part = jnp.dot(x_ref[...].astype(jnp.bfloat16), w1_ref[...],
                   preferred_element_type=jnp.float32)

    @pl.when(k == 0)
    def _first():
        h1_acc[...] = part            # direct write: saves a zero-init store + reload

    @pl.when(k > 0)
    def _accum():
        h1_acc[...] += part

    # NOTE: o_ref / h1_acc stay resident across the trailing "arbitrary" k axis because
    # their block indices are constant in k. Do not reorder the grid to (nk, nb).
    @pl.when(k == pl.num_programs(1) - 1)
    def _finish():
        h1 = jnp.maximum(h1_acc[...] + b1_ref[...], 0.0)
        h2 = jnp.maximum(jnp.dot(h1.astype(jnp.bfloat16), w2_ref[...],
                                 preferred_element_type=jnp.float32) + b2_ref[...], 0.0)
        h3 = jnp.maximum(jnp.dot(h2.astype(jnp.bfloat16), w3_ref[...],
                                 preferred_element_type=jnp.float32) + b3_ref[...], 0.0)
        logits = lax.dot_general(
            w4_ref[...], h3.astype(jnp.bfloat16),
            dimension_numbers=(((1,), (1,)), ((), ())),
            preferred_element_type=jnp.float32) + b4_ref[0, 0]
        o_ref[...] = jax.nn.sigmoid(logits).astype(o_ref.dtype)


# ----------------------------- tiling selection -------------------------------

def _resident_bytes(tile_b, d_pad, x_itemsize):
    x_buf = 2 * tile_b * d_pad * x_itemsize                 # x tile, double-buffered
    x_cast = tile_b * d_pad * 2                             # in-kernel bf16 copy of x tile
    w1_buf = 2 * d_pad * HIDDEN1 * 2                        # w1 bf16 (counted 2x to be safe)
    small = 2 * 2 * (HIDDEN1 * HIDDEN2 + HIDDEN2 * HIDDEN3 + HIDDEN3) \
            + 2 * 4 * (HIDDEN1 + HIDDEN2 + HIDDEN3 + 1)
    act = 6 * tile_b * (HIDDEN1 + HIDDEN2 + HIDDEN3)        # intermediate-activation headroom
    out = 2 * tile_b * 4
    return x_buf + x_cast + w1_buf + small + act + out


def _select_config(B, D, x_itemsize, tile_b_max, tile_k_max):
    b128 = _round_up(B, 128)
    d128 = _round_up(D, 128)
    tb_cap = min(tile_b_max, b128)
    # keep >=2 batch tiles when the batch allows it, so v7x megacore can split the
    # "parallel" axis across its two TensorCores (no extra padding introduced).
    if b128 >= 256:
        tb_cap = min(tb_cap, max(128, (b128 // 256) * 128))
    for tb in sorted({tb_cap, min(tb_cap, 256), 128}, reverse=True):
        if tb >= 128 and _resident_bytes(tb, d128, x_itemsize) <= VMEM_TILE_BUDGET:
            return {"mode": "resident", "tile_b": tb, "D_pad": d128}
    tk = min(tile_k_max, d128)
    return {"mode": "ktiled", "tile_b": tb_cap, "tile_k": tk,
            "D_pad": _round_up(D, tk)}


# ----------------------------- wrapper ----------------------------------------

def simple_mri_model_forward(x, params, *, tile_b=512, tile_k=2048):
    """x: (B, C, H, W) or (B, D). Returns (B, 1) float32 sigmoid probabilities."""
    if x.ndim > 2:
        x = x.reshape(x.shape[0], -1)           # matches torch x.view(B, -1)
    B, D = x.shape
    w1, b1, w2, b2, w3, b3, w4, b4 = params

    cfg = _select_config(B, D, jnp.dtype(x.dtype).itemsize, tile_b, tile_k)
    tile_b = cfg["tile_b"]
    D_pad = cfg["D_pad"]
    B_pad = _round_up(B, tile_b)
    nb = B_pad // tile_b

    # Pad only when shapes are misaligned (no copies for aligned inputs / pre-padded weights).
    if (B_pad, D_pad) != (B, D):
        x = jnp.pad(x, ((0, B_pad - B), (0, D_pad - D)))
    if w1.shape[0] != D_pad:
        w1 = jnp.pad(w1, ((0, D_pad - w1.shape[0]), (0, 0)))
    w1 = w1.astype(jnp.bfloat16)
    w2 = w2.astype(jnp.bfloat16)
    w3 = w3.astype(jnp.bfloat16)
    w4 = w4.astype(jnp.bfloat16)
    b1 = b1.reshape(1, HIDDEN1).astype(jnp.float32)
    b2 = b2.reshape(1, HIDDEN2).astype(jnp.float32)
    b3 = b3.reshape(1, HIDDEN3).astype(jnp.float32)
    b4 = b4.reshape(1, 1).astype(jnp.float32)

    small_bytes = 2 * (w2.size + w3.size + w4.size) + 4 * (b1.size + b2.size + b3.size + b4.size)
    flops = 2 * B_pad * (D_pad * HIDDEN1 + HIDDEN1 * HIDDEN2 + HIDDEN2 * HIDDEN3 + HIDDEN3)
    x_bytes = x.size * jnp.dtype(x.dtype).itemsize

    if cfg["mode"] == "resident":
        grid_spec = pltpu.PrefetchScalarGridSpec(
            num_scalar_prefetch=0,
            grid=(nb,),
            in_specs=[
                pl.BlockSpec((tile_b, D_pad), lambda i: (i, 0)),       # x batch tile
                pl.BlockSpec((D_pad, HIDDEN1), lambda i: (0, 0)),      # w1: VMEM-resident, DMA'd once
                pl.BlockSpec((1, HIDDEN1), lambda i: (0, 0)),          # b1
                pl.BlockSpec((HIDDEN1, HIDDEN2), lambda i: (0, 0)),    # w2
                pl.BlockSpec((1, HIDDEN2), lambda i: (0, 0)),          # b2
                pl.BlockSpec((HIDDEN2, HIDDEN3), lambda i: (0, 0)),    # w3
                pl.BlockSpec((1, HIDDEN3), lambda i: (0, 0)),          # b3
                pl.BlockSpec((1, HIDDEN3), lambda i: (0, 0)),          # w4 (out, in)
                pl.BlockSpec(memory_space=pltpu.MemorySpace.SMEM),     # b4 scalar
            ],
            out_specs=pl.BlockSpec((1, tile_b), lambda i: (0, i)),     # lane-dense output
        )
        kernel = _mlp_resident_kernel
        dims = ("parallel",)
        bytes_accessed = int(x_bytes + 2 * w1.size + small_bytes + 4 * B_pad)
    else:
        tk = cfg["tile_k"]
        nk = D_pad // tk
        grid_spec = pltpu.PrefetchScalarGridSpec(
            num_scalar_prefetch=0,
            grid=(nb, nk),
            in_specs=[
                pl.BlockSpec((tile_b, tk), lambda i, k: (i, k)),        # x tile
                pl.BlockSpec((tk, HIDDEN1), lambda i, k: (k, 0)),       # w1 K-tile
                pl.BlockSpec((1, HIDDEN1), lambda i, k: (0, 0)),        # b1
                pl.BlockSpec((HIDDEN1, HIDDEN2), lambda i, k: (0, 0)),  # w2
                pl.BlockSpec((1, HIDDEN2), lambda i, k: (0, 0)),        # b2
                pl.BlockSpec((HIDDEN2, HIDDEN3), lambda i, k: (0, 0)),  # w3
                pl.BlockSpec((1, HIDDEN3), lambda i, k: (0, 0)),        # b3
                pl.BlockSpec((1, HIDDEN3), lambda i, k: (0, 0)),        # w4
                pl.BlockSpec(memory_space=pltpu.MemorySpace.SMEM),      # b4 scalar
            ],
            out_specs=pl.BlockSpec((1, tile_b), lambda i, k: (0, i)),
            scratch_shapes=[pltpu.VMEM((tile_b, HIDDEN1), jnp.float32)],
        )
        kernel = _mlp_ktiled_kernel
        dims = ("parallel", "arbitrary")
        bytes_accessed = int(x_bytes + nb * 2 * w1.size + small_bytes + 4 * B_pad)

    out = pl.pallas_call(
        kernel,
        out_shape=jax.ShapeDtypeStruct((1, B_pad), jnp.float32),
        grid_spec=grid_spec,
        compiler_params=pltpu.CompilerParams(
            dimension_semantics=dims,
            vmem_limit_bytes=VMEM_LIMIT_BYTES),
        cost_estimate=pl.CostEstimate(flops=int(flops), transcendentals=int(B_pad),
                                      bytes_accessed=bytes_accessed),
    )(x, w1, b1, w2, b2, w3, b3, w4, b4)

    return out[0, :B].reshape(B, 1)


# ----------------------------- params / reference -----------------------------

def init_params(input_dim, key):
    """PyTorch-style U(-1/sqrt(fan_in), 1/sqrt(fan_in)) init. Hidden weights stored
    (in, out) (pre-transposed vs torch); classifier weight kept (out=1, in=32).
    w1 is pre-padded to a 128-multiple of rows and all weights are cast to bf16 ONCE
    here, so the per-call wrapper does no pad/cast copies. Biases stay f32."""
    d_pad = _round_up(input_dim, 128)
    shapes = [((input_dim, HIDDEN1), input_dim),
              ((HIDDEN1, HIDDEN2), HIDDEN1),
              ((HIDDEN2, HIDDEN3), HIDDEN2),
              ((1, HIDDEN3), HIDDEN3)]          # classifier, torch (out, in) layout
    bias_shapes = [(1, HIDDEN1), (1, HIDDEN2), (1, HIDDEN3), (1, 1)]
    params = []
    for idx, ((w_shape, fan_in), b_shape) in enumerate(zip(shapes, bias_shapes)):
        key, kw, kb = jax.random.split(key, 3)
        bound = 1.0 / float(fan_in) ** 0.5
        w = jax.random.uniform(kw, w_shape, jnp.float32, -bound, bound)
        b = jax.random.uniform(kb, b_shape, jnp.float32, -bound, bound)
        if idx == 0 and d_pad != input_dim:
            w = jnp.pad(w, ((0, d_pad - input_dim), (0, 0)))
        params.extend([w.astype(jnp.bfloat16), b])
    return tuple(params)


def _reference_forward(x, params):
    """Pure-JAX (non-Pallas) reference mirroring the kernel's bf16/f32-accumulate math."""
    if x.ndim > 2:
        x = x.reshape(x.shape[0], -1)
    w1, b1, w2, b2, w3, b3, w4, b4 = params
    w1 = w1[: x.shape[1]]                       # drop zero rows added by init-time padding

    def mm(a, w):
        return jnp.dot(a.astype(jnp.bfloat16), w.astype(jnp.bfloat16),
                       preferred_element_type=jnp.float32)

    h1 = jnp.maximum(mm(x, w1) + b1, 0.0)
    h2 = jnp.maximum(mm(h1, w2) + b2, 0.0)
    h3 = jnp.maximum(mm(h2, w3) + b3, 0.0)
    logits = mm(h3, w4.T) + b4
    return jax.nn.sigmoid(logits)


if __name__ == "__main__":
    key = jax.random.PRNGKey(0)
    k_x, k_p = jax.random.split(key)

    # Small NCHW MRI-like input: batch=2, channels=4, spatial=16x16 -> D = 1024
    B, C, H, W = 2, 4, 16, 16
    x = jax.random.normal(k_x, (B, C, H, W), dtype=jnp.float32)
    params = init_params(C * H * W, k_p)

    probs = simple_mri_model_forward(x, params)
    probs = jax.block_until_ready(probs)

    assert probs.shape == (B, 1)
    assert bool(jnp.all((probs >= 0.0) & (probs <= 1.0)))

    ref = _reference_forward(x, params)
    max_err = float(jnp.max(jnp.abs(probs - ref)))
    assert max_err < 5e-2, f"kernel/reference mismatch: {max_err}"

    print("KERNEL_OK")
</pallas_src>

<mosaic_0001>
module attributes {stable_mosaic.version = 11 : i64} {
  func.func @_mlp_resident_kernel(%arg0: i32, %arg1: memref<128x1024xf32, #tpu.memory_space<vmem>>, %arg2: memref<1024x512xbf16, #tpu.memory_space<vmem>>, %arg3: memref<1x512xf32, #tpu.memory_space<vmem>>, %arg4: memref<512x128xbf16, #tpu.memory_space<vmem>>, %arg5: memref<1x128xf32, #tpu.memory_space<vmem>>, %arg6: memref<128x32xbf16, #tpu.memory_space<vmem>>, %arg7: memref<1x32xf32, #tpu.memory_space<vmem>>, %arg8: memref<1x32xbf16, #tpu.memory_space<vmem>>, %arg9: memref<1x1xf32, #tpu.memory_space<smem>>, %arg10: memref<1x128xf32, #tpu.memory_space<vmem>>) attributes {dimension_semantics = [#tpu.dimension_semantics<parallel>], iteration_bounds = array<i64: 1>, scalar_prefetch = 0 : i64, scratch_operands = 0 : i64, tpu.core_type = #tpu.core_type<tc>, window_params = [{transform_indices = @transform_0, window_bounds = array<i64: 128, 1024>}, {pipeline_mode = #tpu.pipeline_mode<synchronous>, transform_indices = @transform_1, window_bounds = array<i64: 1024, 512>}, {pipeline_mode = #tpu.pipeline_mode<synchronous>, transform_indices = @transform_2, window_bounds = array<i64: 1, 512>}, {pipeline_mode = #tpu.pipeline_mode<synchronous>, transform_indices = @transform_3, window_bounds = array<i64: 512, 128>}, {pipeline_mode = #tpu.pipeline_mode<synchronous>, transform_indices = @transform_4, window_bounds = array<i64: 1, 128>}, {pipeline_mode = #tpu.pipeline_mode<synchronous>, transform_indices = @transform_5, window_bounds = array<i64: 128, 32>}, {pipeline_mode = #tpu.pipeline_mode<synchronous>, transform_indices = @transform_6, window_bounds = array<i64: 1, 32>}, {pipeline_mode = #tpu.pipeline_mode<synchronous>, transform_indices = @transform_7, window_bounds = array<i64: 1, 32>}, {transform_indices = @transform_8, window_bounds = array<i64: 1, 1>}, {transform_indices = @transform_9, window_bounds = array<i64: 1, 128>}]} {
    %c0 = arith.constant 0 : index
    %c0_0 = arith.constant 0 : index
    %0 = vector.load %arg1[%c0, %c0_0] : memref<128x1024xf32, #tpu.memory_space<vmem>>, vector<128x1024xf32>
    %1 = arith.truncf %0 : vector<128x1024xf32> to vector<128x1024xbf16>
    %c0_1 = arith.constant 0 : index
    %c0_2 = arith.constant 0 : index
    %2 = vector.load %arg2[%c0_1, %c0_2] : memref<1024x512xbf16, #tpu.memory_space<vmem>>, vector<1024x512xbf16>
    %cst = arith.constant dense<0.000000e+00> : vector<128x512xf32>
    %3 = tpu.matmul %1, %2, %cst {dimension_numbers = #tpu.dot_dimension_numbers<[1], [0], [0], [1], [0, 0, 1, 1], [], []>} : vector<128x1024xbf16>, vector<1024x512xbf16>, vector<128x512xf32> -> vector<128x512xf32>
    %c0_3 = arith.constant 0 : index
    %c0_4 = arith.constant 0 : index
    %4 = vector.load %arg3[%c0_3, %c0_4] : memref<1x512xf32, #tpu.memory_space<vmem>>, vector<1x512xf32>
    %5 = vector.broadcast %4 : vector<1x512xf32> to vector<128x512xf32>
    %6 = arith.addf %3, %5 : vector<128x512xf32>
    %cst_5 = arith.constant 0.000000e+00 : f32
    %7 = vector.broadcast %cst_5 : f32 to vector<128x512xf32>
    %8 = arith.maximumf %6, %7 : vector<128x512xf32>
    %9 = arith.truncf %8 : vector<128x512xf32> to vector<128x512xbf16>
    %c0_6 = arith.constant 0 : index
    %c0_7 = arith.constant 0 : index
    %10 = vector.load %arg4[%c0_6, %c0_7] : memref<512x128xbf16, #tpu.memory_space<vmem>>, vector<512x128xbf16>
    %cst_8 = arith.constant dense<0.000000e+00> : vector<128x128xf32>
    %11 = tpu.matmul %9, %10, %cst_8 {dimension_numbers = #tpu.dot_dimension_numbers<[1], [0], [0], [1], [0, 0, 1, 1], [], []>} : vector<128x512xbf16>, vector<512x128xbf16>, vector<128x128xf32> -> vector<128x128xf32>
    %c0_9 = arith.constant 0 : index
    %c0_10 = arith.constant 0 : index
    %12 = vector.load %arg5[%c0_9, %c0_10] : memref<1x128xf32, #tpu.memory_space<vmem>>, vector<1x128xf32>
    %13 = vector.broadcast %12 : vector<1x128xf32> to vector<128x128xf32>
    %14 = arith.addf %11, %13 : vector<128x128xf32>
    %cst_11 = arith.constant 0.000000e+00 : f32
    %15 = vector.broadcast %cst_11 : f32 to vector<128x128xf32>
    %16 = arith.maximumf %14, %15 : vector<128x128xf32>
    %17 = arith.truncf %16 : vector<128x128xf32> to vector<128x128xbf16>
    %c0_12 = arith.constant 0 : index
    %c0_13 = arith.constant 0 : index
    %18 = vector.load %arg6[%c0_12, %c0_13] : memref<128x32xbf16, #tpu.memory_space<vmem>>, vector<128x32xbf16>
    %cst_14 = arith.constant dense<0.000000e+00> : vector<128x32xf32>
    %19 = tpu.matmul %17, %18, %cst_14 {dimension_numbers = #tpu.dot_dimension_numbers<[1], [0], [0], [1], [0, 0, 1, 1], [], []>} : vector<128x128xbf16>, vector<128x32xbf16>, vector<128x32xf32> -> vector<128x32xf32>
    %c0_15 = arith.constant 0 : index
    %c0_16 = arith.constant 0 : index
    %20 = vector.load %arg7[%c0_15, %c0_16] : memref<1x32xf32, #tpu.memory_space<vmem>>, vector<1x32xf32>
    %21 = vector.broadcast %20 : vector<1x32xf32> to vector<128x32xf32>
    %22 = arith.addf %19, %21 : vector<128x32xf32>
    %cst_17 = arith.constant 0.000000e+00 : f32
    %23 = vector.broadcast %cst_17 : f32 to vector<128x32xf32>
    %24 = arith.maximumf %22, %23 : vector<128x32xf32>
    %c0_18 = arith.constant 0 : index
    %c0_19 = arith.constant 0 : index
    %25 = vector.load %arg8[%c0_18, %c0_19] : memref<1x32xbf16, #tpu.memory_space<vmem>>, vector<1x32xbf16>
    %26 = arith.truncf %24 : vector<128x32xf32> to vector<128x32xbf16>
    %cst_20 = arith.constant dense<0.000000e+00> : vector<1x128xf32>
    %27 = tpu.matmul %25, %26, %cst_20 {dimension_numbers = #tpu.dot_dimension_numbers<[1], [1], [0], [0], [0, 0, 1, 0], [], []>} : vector<1x32xbf16>, vector<128x32xbf16>, vector<1x128xf32> -> vector<1x128xf32>
    %c0_21 = arith.constant 0 : index
    %c0_22 = arith.constant 0 : index
    %28 = memref.load %arg9[%c0_21, %c0_22] : memref<1x1xf32, #tpu.memory_space<smem>>
    %29 = vector.broadcast %28 : f32 to vector<1x128xf32>
    %30 = arith.addf %27, %29 : vector<1x128xf32>
    %31 = arith.negf %30 : vector<1x128xf32>
    %32 = math.exp %31 : vector<1x128xf32>
    %cst_23 = arith.constant 1.000000e+00 : f32
    %33 = vector.broadcast %cst_23 : f32 to vector<1x128xf32>
    %34 = arith.addf %33, %32 : vector<1x128xf32>
    %35 = arith.divf %33, %34 : vector<1x128xf32>
    %c0_24 = arith.constant 0 : index
    %c0_25 = arith.constant 0 : index
    %36 = vector.load %arg10[%c0_24, %c0_25] : memref<1x128xf32, #tpu.memory_space<vmem>>, vector<1x128xf32>
    tpu.vector_store %arg10[%c0_24, %c0_25], %35 {strides = array<i32>} : memref<1x128xf32, #tpu.memory_space<vmem>>, vector<1x128xf32>,
    return
  }
  func.func @transform_0(%arg0: i32) -> (i32, i32) {
    %c0_i32 = arith.constant 0 : i32
    %c0_i32_0 = arith.constant 0 : i32
    return %arg0, %c0_i32 : i32, i32
  }
  func.func @transform_1(%arg0: i32) -> (i32, i32) {
    %c0_i32 = arith.constant 0 : i32
    %c0_i32_0 = arith.constant 0 : i32
    %c0_i32_1 = arith.constant 0 : i32
    return %c0_i32, %c0_i32_0 : i32, i32
  }
  func.func @transform_2(%arg0: i32) -> (i32, i32) {
    %c0_i32 = arith.constant 0 : i32
    %c0_i32_0 = arith.constant 0 : i32
    %c0_i32_1 = arith.constant 0 : i32
    return %c0_i32, %c0_i32_0 : i32, i32
  }
  func.func @transform_3(%arg0: i32) -> (i32, i32) {
    %c0_i32 = arith.constant 0 : i32
    %c0_i32_0 = arith.constant 0 : i32
    %c0_i32_1 = arith.constant 0 : i32
    return %c0_i32, %c0_i32_0 : i32, i32
  }
  func.func @transform_4(%arg0: i32) -> (i32, i32) {
    %c0_i32 = arith.constant 0 : i32
    %c0_i32_0 = arith.constant 0 : i32
    %c0_i32_1 = arith.constant 0 : i32
    return %c0_i32, %c0_i32_0 : i32, i32
  }
  func.func @transform_5(%arg0: i32) -> (i32, i32) {
    %c0_i32 = arith.constant 0 : i32
    %c0_i32_0 = arith.constant 0 : i32
    %c0_i32_1 = arith.constant 0 : i32
    return %c0_i32, %c0_i32_0 : i32, i32
  }
  func.func @transform_6(%arg0: i32) -> (i32, i32) {
    %c0_i32 = arith.constant 0 : i32
    %c0_i32_0 = arith.constant 0 : i32
    %c0_i32_1 = arith.constant 0 : i32
    return %c0_i32, %c0_i32_0 : i32, i32
  }
  func.func @transform_7(%arg0: i32) -> (i32, i32) {
    %c0_i32 = arith.constant 0 : i32
    %c0_i32_0 = arith.constant 0 : i32
    %c0_i32_1 = arith.constant 0 : i32
    return %c0_i32, %c0_i32_0 : i32, i32
  }
  func.func @transform_8(%arg0: i32) -> (i32, i32) {
    %c0_i32 = arith.constant 0 : i32
    %c0_i32_0 = arith.constant 0 : i32
    %c0_i32_1 = arith.constant 0 : i32
    return %c0_i32, %c0_i32_0 : i32, i32
  }
  func.func @transform_9(%arg0: i32) -> (i32, i32) {
    %c0_i32 = arith.constant 0 : i32
    %c0_i32_0 = arith.constant 0 : i32
    return %c0_i32, %arg0 : i32, i32
  }
}

</mosaic_0001>

<llo_original>
// kernel: tpu_custom_call.1
$region0: #{tpu_custom_call.1}
  #allocation0 [shape = 'u32[]', space=smem, size = 0x4, offset = 0x4, fixed_abs, tag = 'smem constant byte address 0x4 - core index']
  #allocation1 [shape = 'u32[144,128]{1,0:T(1,128)}', space=vmem, size = 0x12000, scoped, tag = 'internal scratch']
  #allocation2 [shape = 'f32[1,1]{1,0:T(1,128)S(6)}', space=smem, size = 0x200, scoped, tag = 'scoped memory for tpu_custom_call.1']
  %s0 = inlined_call_operand.hbm [shape: f32[128,1024], index: 0, kind: input, shape index: {}]
  %s1 = inlined_call_operand.hbm [shape: bf16[1024,512], index: 1, kind: input, shape index: {}]
  %s2 = inlined_call_operand.vmem [shape: f32[1,512], index: 2, kind: input, shape index: {}]
  %s3 = inlined_call_operand.hbm [shape: bf16[512,128], index: 3, kind: input, shape index: {}]
  %s4 = inlined_call_operand.vmem [shape: f32[1,128], index: 4, kind: input, shape index: {}]
  %s5 = inlined_call_operand.vmem [shape: bf16[128,32], index: 5, kind: input, shape index: {}]
  %s6 = inlined_call_operand.vmem [shape: f32[1,32], index: 6, kind: input, shape index: {}]
  %s7 = inlined_call_operand.vmem [shape: bf16[1,32], index: 7, kind: input, shape index: {}]
  %s8 = inlined_call_operand.<no memory space> [shape: f32[1,1], index: 8, kind: input, shape index: {}]
  %s9 = inlined_call_operand.hbm [shape: f32[1,128], index: 9, kind: output, shape index: {}]
  %s10 = sld [smem:[#allocation0]]
  $region58: #{tpu_custom_call.1} parent=0
    _
  %s12 = ssub.s32 1, %s10
  %s13 = scalar_select 0, %s12, %s10
  %14 = sst [smem:[#allocation2]] %s8
  $region1: #{tpu_custom_call.1} parent=0
    #allocation3 [shape = 'u8[524288]{0}', space=vmem, size = 0x80000, scoped, tag = 'input window, operand 0, single buffered']
    #allocation4 [shape = 's32[1]{0}', space=sflag, size = 0x4, scoped, tag = 'scoped memory for tpu_custom_call.1']
    #allocation5 [shape = 's32[1]{0}', space=sflag, size = 0x4, scoped, tag = 'scoped memory for tpu_custom_call.1']
    #allocation6 [shape = 'u8[1048576]{0}', space=vmem, size = 0x100000, scoped, tag = 'input window, operand 1, single buffered']
    #allocation7 [shape = 's32[1]{0}', space=sflag, size = 0x4, scoped, tag = 'scoped memory for tpu_custom_call.1']
    #allocation8 [shape = 'u8[131072]{0}', space=vmem, size = 0x20000, scoped, tag = 'input window, operand 3, single buffered']
    #allocation9 [shape = 'u8[512]{0}', space=vmem, size = 0x400, scoped, tag = 'output window, operand 0, single buffered']
    %15 = vsyncpa [#allocation4], 0
    %16 = vsyncpa [#allocation7], 0
    %17 = vsyncpa [#allocation5], 0
    // Predicated region
    $region2: #{tpu_custom_call.1} parent=1 // pred_check
      _
    $region3: #{tpu_custom_call.1} parent=1 // pred_check_branch
      %19 = sbr.rel (0) target = $region5
    $region4: #{tpu_custom_call.1} parent=1 // pred_region
      %s21 = ssub.s32 16384, 16384
      %22 = vsyncadd [#allocation4], %s21
      %s23 = sshll.u32 [#allocation3], 4
      %s24 = int_to_ptr.vmem [resolvable:$true] %s23
      %29 = dma.hbm_to_vmem [thread:$0]  %s0, 16384, %s24, [#allocation4], 1024, 1024, 64
    $region5: #{tpu_custom_call.1} parent=1 // pred_fallthru
      _
    // Predicated region
    $region6: #{tpu_custom_call.1} parent=1 // pred_check
      _
    $region7: #{tpu_custom_call.1} parent=1 // pred_check_branch
      %31 = sbr.rel (0) target = $region9
    $region8: #{tpu_custom_call.1} parent=1 // pred_region
      %s33 = ssub.s32 32768, 32768
      %34 = vsyncadd [#allocation7], %s33
      %s35 = sshll.u32 [#allocation6], 4
      %s36 = int_to_ptr.vmem [resolvable:$true] %s35
      %41 = dma.hbm_to_vmem [thread:$0]  %s1, 32768, %s36, [#allocation7], 256, 256, 16
    $region9: #{tpu_custom_call.1} parent=1 // pred_fallthru
      _
    // Predicated region
    $region10: #{tpu_custom_call.1} parent=1 // pred_check
      _
    $region11: #{tpu_custom_call.1} parent=1 // pred_check_branch
      %43 = sbr.rel (0) target = $region13
    $region12: #{tpu_custom_call.1} parent=1 // pred_region
      _
    $region13: #{tpu_custom_call.1} parent=1 // pred_fallthru
      _
    // Predicated region
    $region14: #{tpu_custom_call.1} parent=1 // pred_check
      _
    $region15: #{tpu_custom_call.1} parent=1 // pred_check_branch
      %45 = sbr.rel (0) target = $region17
    $region16: #{tpu_custom_call.1} parent=1 // pred_region
      %s47 = ssub.s32 4096, 4096
      %48 = vsyncadd [#allocation7], %s47
      %s49 = sshll.u32 [#allocation8], 4
      %s50 = int_to_ptr.vmem [resolvable:$true] %s49
      %55 = dma.hbm_to_vmem [thread:$0]  %s3, 4096, %s50, [#allocation7], 64, 64, 4
    $region17: #{tpu_custom_call.1} parent=1 // pred_fallthru
      _
    // Predicated region
    $region18: #{tpu_custom_call.1} parent=1 // pred_check
      _
    $region19: #{tpu_custom_call.1} parent=1 // pred_check_branch
      %57 = sbr.rel (0) target = $region21
    $region20: #{tpu_custom_call.1} parent=1 // pred_region
      _
    $region21: #{tpu_custom_call.1} parent=1 // pred_fallthru
      _
    // Predicated region
    $region22: #{tpu_custom_call.1} parent=1 // pred_check
      _
    $region23: #{tpu_custom_call.1} parent=1 // pred_check_branch
      %59 = sbr.rel (0) target = $region25
    $region24: #{tpu_custom_call.1} parent=1 // pred_region
      _
    $region25: #{tpu_custom_call.1} parent=1 // pred_fallthru
      _
    // Predicated region
    $region26: #{tpu_custom_call.1} parent=1 // pred_check
      _
    $region27: #{tpu_custom_call.1} parent=1 // pred_check_branch
      %61 = sbr.rel (0) target = $region29
    $region28: #{tpu_custom_call.1} parent=1 // pred_region
      _
    $region29: #{tpu_custom_call.1} parent=1 // pred_fallthru
      _
    // Predicated region
    $region30: #{tpu_custom_call.1} parent=1 // pred_check
      _
    $region31: #{tpu_custom_call.1} parent=1 // pred_check_branch
      %63 = sbr.rel (0) target = $region33
    $region32: #{tpu_custom_call.1} parent=1 // pred_region
      _
    $region33: #{tpu_custom_call.1} parent=1 // pred_fallthru
      _
    // Predicated region
    $region34: #{tpu_custom_call.1} parent=1 // pred_check
      _
    $region35: #{tpu_custom_call.1} parent=1 // pred_check_branch
      %65 = sbr.rel (0) target = $region37
    $region36: #{tpu_custom_call.1} parent=1 // pred_region
      _
    $region37: #{tpu_custom_call.1} parent=1 // pred_fallthru
      _
    // Predicated region
    $region38: #{tpu_custom_call.1} parent=1 // pred_check
      _
    $region39: #{tpu_custom_call.1} parent=1 // pred_check_branch
      %67 = sbr.rel (0) target = $region41
    $region40: #{tpu_custom_call.1} parent=1 // pred_region
      %68 = dma.done [#allocation4], 16384
    $region41: #{tpu_custom_call.1} parent=1 // pred_fallthru
      _
    // Predicated region
    $region42: #{tpu_custom_call.1} parent=1 // pred_check
      _
    $region43: #{tpu_custom_call.1} parent=1 // pred_check_branch
      %70 = sbr.rel (0) target = $region45
    $region44: #{tpu_custom_call.1} parent=1 // pred_region
      %71 = dma.done [#allocation7], 32768
    $region45: #{tpu_custom_call.1} parent=1 // pred_fallthru
      _
    // Predicated region
    $region46: #{tpu_custom_call.1} parent=1 // pred_check
      _
    $region47: #{tpu_custom_call.1} parent=1 // pred_check_branch
      %73 = sbr.rel (0) target = $region49
    $region48: #{tpu_custom_call.1} parent=1 // pred_region
      %74 = dma.done [#allocation7], 4096
    $region49: #{tpu_custom_call.1} parent=1 // pred_fallthru
      _
    %v76 = vld [vmem:[#allocation3] sm:$0xff]
    %v77 = vld [vmem:[#allocation3 + $0x8] sm:$0xff]
    %v78 = vld [vmem:[#allocation3 + $0x10] sm:$0xff]
    %v79 = vld [vmem:[#allocation3 + $0x18] sm:$0xff]
    %v80 = vld [vmem:[#allocation3 + $0x20] sm:$0xff]
    %v81 = vld [vmem:[#allocation3 + $0x28] sm:$0xff]
    %v82 = vld [vmem:[#allocation3 + $0x30] sm:$0xff]
    %v83 = vld [vmem:[#allocation3 + $0x38] sm:$0xff]
    %v84 = vld [vmem:[#allocation3 + $0x40] sm:$0xff]
    %v85 = vld [vmem:[#allocation3 + $0x48] sm:$0xff]
    %v86 = vld [vmem:[#allocation3 + $0x50] sm:$0xff]
    %v87 = vld [vmem:[#allocation3 + $0x58] sm:$0xff]
    %v88 = vld [vmem:[#allocation3 + $0x60] sm:$0xff]
    %v89 = vld [vmem:[#allocation3 + $0x68] sm:$0xff]
    %v90 = vld [vmem:[#allocation3 + $0x70] sm:$0xff]
    %v91 = vld [vmem:[#allocation3 + $0x78] sm:$0xff]
    %v92 = vld [vmem:[#allocation3 + $0x80] sm:$0xff]
    %v93 = vld [vmem:[#allocation3 + $0x88] sm:$0xff]
    %v94 = vld [vmem:[#allocation3 + $0x90] sm:$0xff]
    %v95 = vld [vmem:[#allocation3 + $0x98] sm:$0xff]
    %v96 = vld [vmem:[#allocation3 + $0xa0] sm:$0xff]
    %v97 = vld [vmem:[#allocation3 + $0xa8] sm:$0xff]
    %v98 = vld [vmem:[#allocation3 + $0xb0] sm:$0xff]
    %v99 = vld [vmem:[#allocation3 + $0xb8] sm:$0xff]
    %v100 = vld [vmem:[#allocation3 + $0xc0] sm:$0xff]
    %v101 = vld [vmem:[#allocation3 + $0xc8] sm:$0xff]
    %v102 = vld [vmem:[#allocation3 + $0xd0] sm:$0xff]
    %v103 = vld [vmem:[#allocation3 + $0xd8] sm:$0xff]
    %v104 = vld [vmem:[#allocation3 + $0xe0] sm:$0xff]
    %v105 = vld [vmem:[#allocation3 + $0xe8] sm:$0xff]
    %v106 = vld [vmem:[#allocation3 + $0xf0] sm:$0xff]
    %v107 = vld [vmem:[#allocation3 + $0xf8] sm:$0xff]
    %v108 = vld [vmem:[#allocation3 + $0x100] sm:$0xff]
    %v109 = vld [vmem:[#allocation3 + $0x108] sm:$0xff]
    %v110 = vld [vmem:[#allocation3 + $0x110] sm:$0xff]
    %v111 = vld [vmem:[#allocation3 + $0x118] sm:$0xff]
    %v112 = vld [vmem:[#allocation3 + $0x120] sm:$0xff]
    %v113 = vld [vmem:[#allocation3 + $0x128] sm:$0xff]
    %v114 = vld [vmem:[#allocation3 + $0x130] sm:$0xff]
    %v115 = vld [vmem:[#allocation3 + $0x138] sm:$0xff]
    %v116 = vld [vmem:[#allocation3 + $0x140] sm:$0xff]
    %v117 = vld [vmem:[#allocation3 + $0x148] sm:$0xff]
    %v118 = vld [vmem:[#allocation3 + $0x150] sm:$0xff]
    %v119 = vld [vmem:[#allocation3 + $0x158] sm:$0xff]
    %v120 = vld [vmem:[#allocation3 + $0x160] sm:$0xff]
    %v121 = vld [vmem:[#allocation3 + $0x168] sm:$0xff]
    %v122 = vld [vmem:[#allocation3 + $0x170] sm:$0xff]
    %v123 = vld [vmem:[#allocation3 + $0x178] sm:$0xff]
    %v124 = vld [vmem:[#allocation3 + $0x180] sm:$0xff]
    %v125 = vld [vmem:[#allocation3 + $0x188] sm:$0xff]
    %v126 = vld [vmem:[#allocation3 + $0x190] sm:$0xff]
    %v127 = vld [vmem:[#allocation3 + $0x198] sm:$0xff]
    %v128 = vld [vmem:[#allocation3 + $0x1a0] sm:$0xff]
    %v129 = vld [vmem:[#allocation3 + $0x1a8] sm:$0xff]
    %v130 = vld [vmem:[#allocation3 + $0x1b0] sm:$0xff]
    %v131 = vld [vmem:[#allocation3 + $0x1b8] sm:$0xff]
    %v132 = vld [vmem:[#allocation3 + $0x1c0] sm:$0xff]
    %v133 = vld [vmem:[#allocation3 + $0x1c8] sm:$0xff]
    %v134 = vld [vmem:[#allocation3 + $0x1d0] sm:$0xff]
    %v135 = vld [vmem:[#allocation3 + $0x1d8] sm:$0xff]
    %v136 = vld [vmem:[#allocation3 + $0x1e0] sm:$0xff]
    %v137 = vld [vmem:[#allocation3 + $0x1e8] sm:$0xff]
    %v138 = vld [vmem:[#allocation3 + $0x1f0] sm:$0xff]
    %v139 = vld [vmem:[#allocation3 + $0x1f8] sm:$0xff]
    %v140 = vld [vmem:[#allocation3 + $0x200] sm:$0xff]
    %v141 = vld [vmem:[#allocation3 + $0x208] sm:$0xff]
    %v142 = vld [vmem:[#allocation3 + $0x210] sm:$0xff]
    %v143 = vld [vmem:[#allocation3 + $0x218] sm:$0xff]
    %v144 = vld [vmem:[#allocation3 + $0x220] sm:$0xff]
    %v145 = vld [vmem:[#allocation3 + $0x228] sm:$0xff]
    %v146 = vld [vmem:[#allocation3 + $0x230] sm:$0xff]
    %v147 = vld [vmem:[#allocation3 + $0x238] sm:$0xff]
    %v148 = vld [vmem:[#allocation3 + $0x240] sm:$0xff]
    %v149 = vld [vmem:[#allocation3 + $0x248] sm:$0xff]
    %v150 = vld [vmem:[#allocation3 + $0x250] sm:$0xff]
    %v151 = vld [vmem:[#allocation3 + $0x258] sm:$0xff]
    %v152 = vld [vmem:[#allocation3 + $0x260] sm:$0xff]
    %v153 = vld [vmem:[#allocation3 + $0x268] sm:$0xff]
    %v154 = vld [vmem:[#allocation3 + $0x270] sm:$0xff]
    %v155 = vld [vmem:[#allocation3 + $0x278] sm:$0xff]
    %v156 = vld [vmem:[#allocation3 + $0x280] sm:$0xff]
    %v157 = vld [vmem:[#allocation3 + $0x288] sm:$0xff]
    %v158 = vld [vmem:[#allocation3 + $0x290] sm:$0xff]
    %v159 = vld [vmem:[#allocation3 + $0x298] sm:$0xff]
    %v160 = vld [vmem:[#allocation3 + $0x2a0] sm:$0xff]
    %v161 = vld [vmem:[#allocation3 + $0x2a8] sm:$0xff]
    %v162 = vld [vmem:[#allocation3 + $0x2b0] sm:$0xff]
    %v163 = vld [vmem:[#allocation3 + $0x2b8] sm:$0xff]
    %v164 = vld [vmem:[#allocation3 + $0x2c0] sm:$0xff]
    %v165 = vld [vmem:[#allocation3 + $0x2c8] sm:$0xff]
    %v166 = vld [vmem:[#allocation3 + $0x2d0] sm:$0xff]
    %v167 = vld [vmem:[#allocation3 + $0x2d8] sm:$0xff]
    %v168 = vld [vmem:[#allocation3 + $0x2e0] sm:$0xff]
    %v169 = vld [vmem:[#allocation3 + $0x2e8] sm:$0xff]
    %v170 = vld [vmem:[#allocation3 + $0x2f0] sm:$0xff]
    %v171 = vld [vmem:[#allocation3 + $0x2f8] sm:$0xff]
    %v172 = vld [vmem:[#allocation3 + $0x300] sm:$0xff]
    %v173 = vld [vmem:[#allocation3 + $0x308] sm:$0xff]
    %v174 = vld [vmem:[#allocation3 + $0x310] sm:$0xff]
    %v175 = vld [vmem:[#allocation3 + $0x318] sm:$0xff]
    %v176 = vld [vmem:[#allocation3 + $0x320] sm:$0xff]
    %v177 = vld [vmem:[#allocation3 + $0x328] sm:$0xff]
    %v178 = vld [vmem:[#allocation3 + $0x330] sm:$0xff]
    %v179 = vld [vmem:[#allocation3 + $0x338] sm:$0xff]
    %v180 = vld [vmem:[#allocation3 + $0x340] sm:$0xff]
    %v181 = vld [vmem:[#allocation3 + $0x348] sm:$0xff]
    %v182 = vld [vmem:[#allocation3 + $0x350] sm:$0xff]
    %v183 = vld [vmem:[#allocation3 + $0x358] sm:$0xff]
    %v184 = vld [vmem:[#allocation3 + $0x360] sm:$0xff]
    %v185 = vld [vmem:[#allocation3 + $0x368] sm:$0xff]
    %v186 = vld [vmem:[#allocation3 + $0x370] sm:$0xff]
    %v187 = vld [vmem:[#allocation3 + $0x378] sm:$0xff]
    %v188 = vld [vmem:[#allocation3 + $0x380] sm:$0xff]
    %v189 = vld [vmem:[#allocation3 + $0x388] sm:$0xff]
    %v190 = vld [vmem:[#allocation3 + $0x390] sm:$0xff]
    %v191 = vld [vmem:[#allocation3 + $0x398] sm:$0xff]
    %v192 = vld [vmem:[#allocation3 + $0x3a0] sm:$0xff]
    %v193 = vld [vmem:[#allocation3 + $0x3a8] sm:$0xff]
    %v194 = vld [vmem:[#allocation3 + $0x3b0] sm:$0xff]
    %v195 = vld [vmem:[#allocation3 + $0x3b8] sm:$0xff]
    %v196 = vld [vmem:[#allocation3 + $0x3c0] sm:$0xff]
    %v197 = vld [vmem:[#allocation3 + $0x3c8] sm:$0xff]
    %v198 = vld [vmem:[#allocation3 + $0x3d0] sm:$0xff]
    %v199 = vld [vmem:[#allocation3 + $0x3d8] sm:$0xff]
    %v200 = vld [vmem:[#allocation3 + $0x3e0] sm:$0xff]
    %v201 = vld [vmem:[#allocation3 + $0x3e8] sm:$0xff]
    %v202 = vld [vmem:[#allocation3 + $0x3f0] sm:$0xff]
    %v203 = vld [vmem:[#allocation3 + $0x3f8] sm:$0xff]
    %v204 = vpack.c.bf16 %v84, %v76
    %v205 = vpack.c.bf16 %v85, %v77
    %v206 = vpack.c.bf16 %v86, %v78
    %v207 = vpack.c.bf16 %v87, %v79
    %v208 = vpack.c.bf16 %v88, %v80
    %v209 = vpack.c.bf16 %v89, %v81
    %v210 = vpack.c.bf16 %v90, %v82
    %v211 = vpack.c.bf16 %v91, %v83
    %v212 = vpack.c.bf16 %v100, %v92
    %v213 = vpack.c.bf16 %v101, %v93
    %v214 = vpack.c.bf16 %v102, %v94
    %v215 = vpack.c.bf16 %v103, %v95
    %v216 = vpack.c.bf16 %v104, %v96
    %v217 = vpack.c.bf16 %v105, %v97
    %v218 = vpack.c.bf16 %v106, %v98
    %v219 = vpack.c.bf16 %v107, %v99
    %v220 = vpack.c.bf16 %v116, %v108
    %v221 = vpack.c.bf16 %v117, %v109
    %v222 = vpack.c.bf16 %v118, %v110
    %v223 = vpack.c.bf16 %v119, %v111
    %v224 = vpack.c.bf16 %v120, %v112
    %v225 = vpack.c.bf16 %v121, %v113
    %v226 = vpack.c.bf16 %v122, %v114
    %v227 = vpack.c.bf16 %v123, %v115
    %v228 = vpack.c.bf16 %v132, %v124
    %v229 = vpack.c.bf16 %v133, %v125
    %v230 = vpack.c.bf16 %v134, %v126
    %v231 = vpack.c.bf16 %v135, %v127
    %v232 = vpack.c.bf16 %v136, %v128
    %v233 = vpack.c.bf16 %v137, %v129
    %v234 = vpack.c.bf16 %v138, %v130
    %v235 = vpack.c.bf16 %v139, %v131
    %v236 = vpack.c.bf16 %v148, %v140
    %v237 = vpack.c.bf16 %v149, %v141
    %v238 = vpack.c.bf16 %v150, %v142
    %v239 = vpack.c.bf16 %v151, %v143
    %v240 = vpack.c.bf16 %v152, %v144
    %v241 = vpack.c.bf16 %v153, %v145
    %v242 = vpack.c.bf16 %v154, %v146
    %v243 = vpack.c.bf16 %v155, %v147
    %v244 = vpack.c.bf16 %v164, %v156
    %v245 = vpack.c.bf16 %v165, %v157
    %v246 = vpack.c.bf16 %v166, %v158
    %v247 = vpack.c.bf16 %v167, %v159
    %v248 = vpack.c.bf16 %v168, %v160
    %v249 = vpack.c.bf16 %v169, %v161
    %v250 = vpack.c.bf16 %v170, %v162
    %v251 = vpack.c.bf16 %v171, %v163
    %v252 = vpack.c.bf16 %v180, %v172
    %v253 = vpack.c.bf16 %v181, %v173
    %v254 = vpack.c.bf16 %v182, %v174
    %v255 = vpack.c.bf16 %v183, %v175
    %v256 = vpack.c.bf16 %v184, %v176
    %v257 = vpack.c.bf16 %v185, %v177
    %v258 = vpack.c.bf16 %v186, %v178
    %v259 = vpack.c.bf16 %v187, %v179
    %v260 = vpack.c.bf16 %v196, %v188
    %v261 = vpack.c.bf16 %v197, %v189
    %v262 = vpack.c.bf16 %v198, %v190
    %v263 = vpack.c.bf16 %v199, %v191
    %v264 = vpack.c.bf16 %v200, %v192
    %v265 = vpack.c.bf16 %v201, %v193
    %v266 = vpack.c.bf16 %v202, %v194
    %v267 = vpack.c.bf16 %v203, %v195
    %v268 = vld [vmem:[#allocation6] sm:$0xff]
    %v269 = vld [vmem:[#allocation6 + $0x8] sm:$0xff]
    %v270 = vld [vmem:[#allocation6 + $0x10] sm:$0xff]
    %v271 = vld [vmem:[#allocation6 + $0x18] sm:$0xff]
    %v272 = vld [vmem:[#allocation6 + $0x20] sm:$0xff]
    %v273 = vld [vmem:[#allocation6 + $0x28] sm:$0xff]
    %v274 = vld [vmem:[#allocation6 + $0x30] sm:$0xff]
    %v275 = vld [vmem:[#allocation6 + $0x38] sm:$0xff]
    %v276 = vld [vmem:[#allocation6 + $0x40] sm:$0xff]
    %v277 = vld [vmem:[#allocation6 + $0x48] sm:$0xff]
    %v278 = vld [vmem:[#allocation6 + $0x50] sm:$0xff]
    %v279 = vld [vmem:[#allocation6 + $0x58] sm:$0xff]
    %v280 = vld [vmem:[#allocation6 + $0x60] sm:$0xff]
    %v281 = vld [vmem:[#allocation6 + $0x68] sm:$0xff]
    %v282 = vld [vmem:[#allocation6 + $0x70] sm:$0xff]
    %v283 = vld [vmem:[#allocation6 + $0x78] sm:$0xff]
    %v284 = vld [vmem:[#allocation6 + $0x80] sm:$0xff]
    %v285 = vld [vmem:[#allocation6 + $0x88] sm:$0xff]
    %v286 = vld [vmem:[#allocation6 + $0x90] sm:$0xff]
    %v287 = vld [vmem:[#allocation6 + $0x98] sm:$0xff]
    %v288 = vld [vmem:[#allocation6 + $0xa0] sm:$0xff]
    %v289 = vld [vmem:[#allocation6 + $0xa8] sm:$0xff]
    %v290 = vld [vmem:[#allocation6 + $0xb0] sm:$0xff]
    %v291 = vld [vmem:[#allocation6 + $0xb8] sm:$0xff]
    %v292 = vld [vmem:[#allocation6 + $0xc0] sm:$0xff]
    %v293 = vld [vmem:[#allocation6 + $0xc8] sm:$0xff]
    %v294 = vld [vmem:[#allocation6 + $0xd0] sm:$0xff]
    %v295 = vld [vmem:[#allocation6 + $0xd8] sm:$0xff]
    %v296 = vld [vmem:[#allocation6 + $0xe0] sm:$0xff]
    %v297 = vld [vmem:[#allocation6 + $0xe8] sm:$0xff]
    %v298 = vld [vmem:[#allocation6 + $0xf0] sm:$0xff]
    %v299 = vld [vmem:[#allocation6 + $0xf8] sm:$0xff]
    %v300 = vld [vmem:[#allocation6 + $0x100] sm:$0xff]
    %v301 = vld [vmem:[#allocation6 + $0x108] sm:$0xff]
    %v302 = vld [vmem:[#allocation6 + $0x110] sm:$0xff]
    %v303 = vld [vmem:[#allocation6 + $0x118] sm:$0xff]
    %v304 = vld [vmem:[#allocation6 + $0x120] sm:$0xff]
    %v305 = vld [vmem:[#allocation6 + $0x128] sm:$0xff]
    %v306 = vld [vmem:[#allocation6 + $0x130] sm:$0xff]
    %v307 = vld [vmem:[#allocation6 + $0x138] sm:$0xff]
    %v308 = vld [vmem:[#allocation6 + $0x140] sm:$0xff]
    %v309 = vld [vmem:[#allocation6 + $0x148] sm:$0xff]
    %v310 = vld [vmem:[#allocation6 + $0x150] sm:$0xff]
    %v311 = vld [vmem:[#allocation6 + $0x158] sm:$0xff]
    %v312 = vld [vmem:[#allocation6 + $0x160] sm:$0xff]
    %v313 = vld [vmem:[#allocation6 + $0x168] sm:$0xff]
    %v314 = vld [vmem:[#allocation6 + $0x170] sm:$0xff]
    %v315 = vld [vmem:[#allocation6 + $0x178] sm:$0xff]
    %v316 = vld [vmem:[#allocation6 + $0x180] sm:$0xff]
    %v317 = vld [vmem:[#allocation6 + $0x188] sm:$0xff]
    %v318 = vld [vmem:[#allocation6 + $0x190] sm:$0xff]
    %v319 = vld [vmem:[#allocation6 + $0x198] sm:$0xff]
    %v320 = vld [vmem:[#allocation6 + $0x1a0] sm:$0xff]
    %v321 = vld [vmem:[#allocation6 + $0x1a8] sm:$0xff]
    %v322 = vld [vmem:[#allocation6 + $0x1b0] sm:$0xff]
    %v323 = vld [vmem:[#allocation6 + $0x1b8] sm:$0xff]
    %v324 = vld [vmem:[#allocation6 + $0x1c0] sm:$0xff]
    %v325 = vld [vmem:[#allocation6 + $0x1c8] sm:$0xff]
    %v326 = vld [vmem:[#allocation6 + $0x1d0] sm:$0xff]
    %v327 = vld [vmem:[#allocation6 + $0x1d8] sm:$0xff]
    %v328 = vld [vmem:[#allocation6 + $0x1e0] sm:$0xff]
    %v329 = vld [vmem:[#allocation6 + $0x1e8] sm:$0xff]
    %v330 = vld [vmem:[#allocation6 + $0x1f0] sm:$0xff]
    %v331 = vld [vmem:[#allocation6 + $0x1f8] sm:$0xff]
    %v332 = vld [vmem:[#allocation6 + $0x200] sm:$0xff]
    %v333 = vld [vmem:[#allocation6 + $0x208] sm:$0xff]
    %v334 = vld [vmem:[#allocation6 + $0x210] sm:$0xff]
    %v335 = vld [vmem:[#allocation6 + $0x218] sm:$0xff]
    %v336 = vld [vmem:[#allocation6 + $0x220] sm:$0xff]
    %v337 = vld [vmem:[#allocation6 + $0x228] sm:$0xff]
    %v338 = vld [vmem:[#allocation6 + $0x230] sm:$0xff]
    %v339 = vld [vmem:[#allocation6 + $0x238] sm:$0xff]
    %v340 = vld [vmem:[#allocation6 + $0x240] sm:$0xff]
    %v341 = vld [vmem:[#allocation6 + $0x248] sm:$0xff]
    %v342 = vld [vmem:[#allocation6 + $0x250] sm:$0xff]
    %v343 = vld [vmem:[#allocation6 + $0x258] sm:$0xff]
    %v344 = vld [vmem:[#allocation6 + $0x260] sm:$0xff]
    %v345 = vld [vmem:[#allocation6 + $0x268] sm:$0xff]
    %v346 = vld [vmem:[#allocation6 + $0x270] sm:$0xff]
    %v347 = vld [vmem:[#allocation6 + $0x278] sm:$0xff]
    %v348 = vld [vmem:[#allocation6 + $0x280] sm:$0xff]
    %v349 = vld [vmem:[#allocation6 + $0x288] sm:$0xff]
    %v350 = vld [vmem:[#allocation6 + $0x290] sm:$0xff]
    %v351 = vld [vmem:[#allocation6 + $0x298] sm:$0xff]
    %v352 = vld [vmem:[#allocation6 + $0x2a0] sm:$0xff]
    %v353 = vld [vmem:[#allocation6 + $0x2a8] sm:$0xff]
    %v354 = vld [vmem:[#allocation6 + $0x2b0] sm:$0xff]
    %v355 = vld [vmem:[#allocation6 + $0x2b8] sm:$0xff]
    %v356 = vld [vmem:[#allocation6 + $0x2c0] sm:$0xff]
    %v357 = vld [vmem:[#allocation6 + $0x2c8] sm:$0xff]
    %v358 = vld [vmem:[#allocation6 + $0x2d0] sm:$0xff]
    %v359 = vld [vmem:[#allocation6 + $0x2d8] sm:$0xff]
    %v360 = vld [vmem:[#allocation6 + $0x2e0] sm:$0xff]
    %v361 = vld [vmem:[#allocation6 + $0x2e8] sm:$0xff]
    %v362 = vld [vmem:[#allocation6 + $0x2f0] sm:$0xff]
    %v363 = vld [vmem:[#allocation6 + $0x2f8] sm:$0xff]
    %v364 = vld [vmem:[#allocation6 + $0x300] sm:$0xff]
    %v365 = vld [vmem:[#allocation6 + $0x308] sm:$0xff]
    %v366 = vld [vmem:[#allocation6 + $0x310] sm:$0xff]
    %v367 = vld [vmem:[#allocation6 + $0x318] sm:$0xff]
    %v368 = vld [vmem:[#allocation6 + $0x320] sm:$0xff]
    %v369 = vld [vmem:[#allocation6 + $0x328] sm:$0xff]
    %v370 = vld [vmem:[#allocation6 + $0x330] sm:$0xff]
    %v371 = vld [vmem:[#allocation6 + $0x338] sm:$0xff]
    %v372 = vld [vmem:[#allocation6 + $0x340] sm:$0xff]
    %v373 = vld [vmem:[#allocation6 + $0x348] sm:$0xff]
    %v374 = vld [vmem:[#allocation6 + $0x350] sm:$0xff]
    %v375 = vld [vmem:[#allocation6 + $0x358] sm:$0xff]
    %v376 = vld [vmem:[#allocation6 + $0x360] sm:$0xff]
    %v377 = vld [vmem:[#allocation6 + $0x368] sm:$0xff]
    %v378 = vld [vmem:[#allocation6 + $0x370] sm:$0xff]
    %v379 = vld [vmem:[#allocation6 + $0x378] sm:$0xff]
    %v380 = vld [vmem:[#allocation6 + $0x380] sm:$0xff]
    %v381 = vld [vmem:[#allocation6 + $0x388] sm:$0xff]
    %v382 = vld [vmem:[#allocation6 + $0x390] sm:$0xff]
    %v383 = vld [vmem:[#allocation6 + $0x398] sm:$0xff]
    %v384 = vld [vmem:[#allocation6 + $0x3a0] sm:$0xff]
    %v385 = vld [vmem:[#allocation6 + $0x3a8] sm:$0xff]
    %v386 = vld [vmem:[#allocation6 + $0x3b0] sm:$0xff]
    %v387 = vld [vmem:[#allocation6 + $0x3b8] sm:$0xff]
    %v388 = vld [vmem:[#allocation6 + $0x3c0] sm:$0xff]
    %v389 = vld [vmem:[#allocation6 + $0x3c8] sm:$0xff]
    %v390 = vld [vmem:[#allocation6 + $0x3d0] sm:$0xff]
    %v391 = vld [vmem:[#allocation6 + $0x3d8] sm:$0xff]
    %v392 = vld [vmem:[#allocation6 + $0x3e0] sm:$0xff]
    %v393 = vld [vmem:[#allocation6 + $0x3e8] sm:$0xff]
    %v394 = vld [vmem:[#allocation6 + $0x3f0] sm:$0xff]
    %v395 = vld [vmem:[#allocation6 + $0x3f8] sm:$0xff]
    %v396 = vld [vmem:[#allocation6 + $0x400] sm:$0xff]
    %v397 = vld [vmem:[#allocation6 + $0x408] sm:$0xff]
    %v398 = vld [vmem:[#allocation6 + $0x410] sm:$0xff]
    %v399 = vld [vmem:[#allocation6 + $0x418] sm:$0xff]
    %v400 = vld [vmem:[#allocation6 + $0x420] sm:$0xff]
    %v401 = vld [vmem:[#allocation6 + $0x428] sm:$0xff]
    %v402 = vld [vmem:[#allocation6 + $0x430] sm:$0xff]
    %v403 = vld [vmem:[#allocation6 + $0x438] sm:$0xff]
    %v404 = vld [vmem:[#allocation6 + $0x440] sm:$0xff]
    %v405 = vld [vmem:[#allocation6 + $0x448] sm:$0xff]
    %v406 = vld [vmem:[#allocation6 + $0x450] sm:$0xff]
    %v407 = vld [vmem:[#allocation6 + $0x458] sm:$0xff]
    %v408 = vld [vmem:[#allocation6 + $0x460] sm:$0xff]
    %v409 = vld [vmem:[#allocation6 + $0x468] sm:$0xff]
    %v410 = vld [vmem:[#allocation6 + $0x470] sm:$0xff]
    %v411 = vld [vmem:[#allocation6 + $0x478] sm:$0xff]
    %v412 = vld [vmem:[#allocation6 + $0x480] sm:$0xff]
    %v413 = vld [vmem:[#allocation6 + $0x488] sm:$0xff]
    %v414 = vld [vmem:[#allocation6 + $0x490] sm:$0xff]
    %v415 = vld [vmem:[#allocation6 + $0x498] sm:$0xff]
    %v416 = vld [vmem:[#allocation6 + $0x4a0] sm:$0xff]
    %v417 = vld [vmem:[#allocation6 + $0x4a8] sm:$0xff]
    %v418 = vld [vmem:[#allocation6 + $0x4b0] sm:$0xff]
    %v419 = vld [vmem:[#allocation6 + $0x4b8] sm:$0xff]
    %v420 = vld [vmem:[#allocation6 + $0x4c0] sm:$0xff]
    %v421 = vld [vmem:[#allocation6 + $0x4c8] sm:$0xff]
    %v422 = vld [vmem:[#allocation6 + $0x4d0] sm:$0xff]
    %v423 = vld [vmem:[#allocation6 + $0x4d8] sm:$0xff]
    %v424 = vld [vmem:[#allocation6 + $0x4e0] sm:$0xff]
    %v425 = vld [vmem:[#allocation6 + $0x4e8] sm:$0xff]
    %v426 = vld [vmem:[#allocation6 + $0x4f0] sm:$0xff]
    %v427 = vld [vmem:[#allocation6 + $0x4f8] sm:$0xff]
    %v428 = vld [vmem:[#allocation6 + $0x500] sm:$0xff]
    %v429 = vld [vmem:[#allocation6 + $0x508] sm:$0xff]
    %v430 = vld [vmem:[#allocation6 + $0x510] sm:$0xff]
    %v431 = vld [vmem:[#allocation6 + $0x518] sm:$0xff]
    %v432 = vld [vmem:[#allocation6 + $0x520] sm:$0xff]
    %v433 = vld [vmem:[#allocation6 + $0x528] sm:$0xff]
    %v434 = vld [vmem:[#allocation6 + $0x530] sm:$0xff]
    %v435 = vld [vmem:[#allocation6 + $0x538] sm:$0xff]
    %v436 = vld [vmem:[#allocation6 + $0x540] sm:$0xff]
    %v437 = vld [vmem:[#allocation6 + $0x548] sm:$0xff]
    %v438 = vld [vmem:[#allocation6 + $0x550] sm:$0xff]
    %v439 = vld [vmem:[#allocation6 + $0x558] sm:$0xff]
    %v440 = vld [vmem:[#allocation6 + $0x560] sm:$0xff]
    %v441 = vld [vmem:[#allocation6 + $0x568] sm:$0xff]
    %v442 = vld [vmem:[#allocation6 + $0x570] sm:$0xff]
    %v443 = vld [vmem:[#allocation6 + $0x578] sm:$0xff]
    %v444 = vld [vmem:[#allocation6 + $0x580] sm:$0xff]
    %v445 = vld [vmem:[#allocation6 + $0x588] sm:$0xff]
    %v446 = vld [vmem:[#allocation6 + $0x590] sm:$0xff]
    %v447 = vld [vmem:[#allocation6 + $0x598] sm:$0xff]
    %v448 = vld [vmem:[#allocation6 + $0x5a0] sm:$0xff]
    %v449 = vld [vmem:[#allocation6 + $0x5a8] sm:$0xff]
    %v450 = vld [vmem:[#allocation6 + $0x5b0] sm:$0xff]
    %v451 = vld [vmem:[#allocation6 + $0x5b8] sm:$0xff]
    %v452 = vld [vmem:[#allocation6 + $0x5c0] sm:$0xff]
    %v453 = vld [vmem:[#allocation6 + $0x5c8] sm:$0xff]
    %v454 = vld [vmem:[#allocation6 + $0x5d0] sm:$0xff]
    %v455 = vld [vmem:[#allocation6 + $0x5d8] sm:$0xff]
    %v456 = vld [vmem:[#allocation6 + $0x5e0] sm:$0xff]
    %v457 = vld [vmem:[#allocation6 + $0x5e8] sm:$0xff]
    %v458 = vld [vmem:[#allocation6 + $0x5f0] sm:$0xff]
    %v459 = vld [vmem:[#allocation6 + $0x5f8] sm:$0xff]
    %v460 = vld [vmem:[#allocation6 + $0x600] sm:$0xff]
    %v461 = vld [vmem:[#allocation6 + $0x608] sm:$0xff]
    %v462 = vld [vmem:[#allocation6 + $0x610] sm:$0xff]
    %v463 = vld [vmem:[#allocation6 + $0x618] sm:$0xff]
    %v464 = vld [vmem:[#allocation6 + $0x620] sm:$0xff]
    %v465 = vld [vmem:[#allocation6 + $0x628] sm:$0xff]
    %v466 = vld [vmem:[#allocation6 + $0x630] sm:$0xff]
    %v467 = vld [vmem:[#allocation6 + $0x638] sm:$0xff]
    %v468 = vld [vmem:[#allocation6 + $0x640] sm:$0xff]
    %v469 = vld [vmem:[#allocation6 + $0x648] sm:$0xff]
    %v470 = vld [vmem:[#allocation6 + $0x650] sm:$0xff]
    %v471 = vld [vmem:[#allocation6 + $0x658] sm:$0xff]
    %v472 = vld [vmem:[#allocation6 + $0x660] sm:$0xff]
    %v473 = vld [vmem:[#allocation6 + $0x668] sm:$0xff]
    %v474 = vld [vmem:[#allocation6 + $0x670] sm:$0xff]
    %v475 = vld [vmem:[#allocation6 + $0x678] sm:$0xff]
    %v476 = vld [vmem:[#allocation6 + $0x680] sm:$0xff]
    %v477 = vld [vmem:[#allocation6 + $0x688] sm:$0xff]
    %v478 = vld [vmem:[#allocation6 + $0x690] sm:$0xff]
    %v479 = vld [vmem:[#allocation6 + $0x698] sm:$0xff]
    %v480 = vld [vmem:[#allocation6 + $0x6a0] sm:$0xff]
    %v481 = vld [vmem:[#allocation6 + $0x6a8] sm:$0xff]
    %v482 = vld [vmem:[#allocation6 + $0x6b0] sm:$0xff]
    %v483 = vld [vmem:[#allocation6 + $0x6b8] sm:$0xff]
    %v484 = vld [vmem:[#allocation6 + $0x6c0] sm:$0xff]
    %v485 = vld [vmem:[#allocation6 + $0x6c8] sm:$0xff]
    %v486 = vld [vmem:[#allocation6 + $0x6d0] sm:$0xff]
    %v487 = vld [vmem:[#allocation6 + $0x6d8] sm:$0xff]
    %v488 = vld [vmem:[#allocation6 + $0x6e0] sm:$0xff]
    %v489 = vld [vmem:[#allocation6 + $0x6e8] sm:$0xff]
    %v490 = vld [vmem:[#allocation6 + $0x6f0] sm:$0xff]
    %v491 = vld [vmem:[#allocation6 + $0x6f8] sm:$0xff]
    %v492 = vld [vmem:[#allocation6 + $0x700] sm:$0xff]
    %v493 = vld [vmem:[#allocation6 + $0x708] sm:$0xff]
    %v494 = vld [vmem:[#allocation6 + $0x710] sm:$0xff]
    %v495 = vld [vmem:[#allocation6 + $0x718] sm:$0xff]
    %v496 = vld [vmem:[#allocation6 + $0x720] sm:$0xff]
    %v497 = vld [vmem:[#allocation6 + $0x728] sm:$0xff]
    %v498 = vld [vmem:[#allocation6 + $0x730] sm:$0xff]
    %v499 = vld [vmem:[#allocation6 + $0x738] sm:$0xff]
    %v500 = vld [vmem:[#allocation6 + $0x740] sm:$0xff]
    %v501 = vld [vmem:[#allocation6 + $0x748] sm:$0xff]
    %v502 = vld [vmem:[#allocation6 + $0x750] sm:$0xff]
    %v503 = vld [vmem:[#allocation6 + $0x758] sm:$0xff]
    %v504 = vld [vmem:[#allocation6 + $0x760] sm:$0xff]
    %v505 = vld [vmem:[#allocation6 + $0x768] sm:$0xff]
    %v506 = vld [vmem:[#allocation6 + $0x770] sm:$0xff]
    %v507 = vld [vmem:[#allocation6 + $0x778] sm:$0xff]
    %v508 = vld [vmem:[#allocation6 + $0x780] sm:$0xff]
    %v509 = vld [vmem:[#allocation6 + $0x788] sm:$0xff]
    %v510 = vld [vmem:[#allocation6 + $0x790] sm:$0xff]
    %v511 = vld [vmem:[#allocation6 + $0x798] sm:$0xff]
    %v512 = vld [vmem:[#allocation6 + $0x7a0] sm:$0xff]
    %v513 = vld [vmem:[#allocation6 + $0x7a8] sm:$0xff]
    %v514 = vld [vmem:[#allocation6 + $0x7b0] sm:$0xff]
    %v515 = vld [vmem:[#allocation6 + $0x7b8] sm:$0xff]
    %v516 = vld [vmem:[#allocation6 + $0x7c0] sm:$0xff]
    %v517 = vld [vmem:[#allocation6 + $0x7c8] sm:$0xff]
    %v518 = vld [vmem:[#allocation6 + $0x7d0] sm:$0xff]
    %v519 = vld [vmem:[#allocation6 + $0x7d8] sm:$0xff]
    %v520 = vld [vmem:[#allocation6 + $0x7e0] sm:$0xff]
    %v521 = vld [vmem:[#allocation6 + $0x7e8] sm:$0xff]
    %v522 = vld [vmem:[#allocation6 + $0x7f0] sm:$0xff]
    %v523 = vld [vmem:[#allocation6 + $0x7f8] sm:$0xff]
    %v524 = vld [vmem:[%s2] sm:$0xf]
    %v526 = vlaneseq
    %v527 = vshrl.u32 %v526, 7
    %v528 = vsub.s32 0, %v527
    %v529 = vrot.slane %v524, %v528
    %v530 = vlaneseq
    %v531 = vshrl.u32 %v530, 7
    %v532 = vsub.s32 1, %v531
    %v533 = vrot.slane %v524, %v532
    %v534 = vlaneseq
    %v535 = vshrl.u32 %v534, 7
    %v536 = vsub.s32 2, %v535
    %v537 = vrot.slane %v524, %v536
    %v538 = vlaneseq
    %v539 = vshrl.u32 %v538, 7
    %v540 = vsub.s32 3, %v539
    %v541 = vrot.slane %v524, %v540
    %v802 = vunpack.c.l.b16 %v268
    %v803 = vunpack.c.h.b16 %v268
    %v804 = vunpack.c.l.b16 %v269
    %v805 = vunpack.c.h.b16 %v269
    %v806 = vunpack.c.l.b16 %v270
    %v807 = vunpack.c.h.b16 %v270
    %v808 = vunpack.c.l.b16 %v271
    %v809 = vunpack.c.h.b16 %v271
    %v810 = vunpack.c.l.b16 %v272
    %v811 = vunpack.c.h.b16 %v272
    %v812 = vunpack.c.l.b16 %v273
    %v813 = vunpack.c.h.b16 %v273
    %v814 = vunpack.c.l.b16 %v274
    %v815 = vunpack.c.h.b16 %v274
    %v816 = vunpack.c.l.b16 %v275
    %v817 = vunpack.c.h.b16 %v275
    %v818 = vunpack.c.l.b16 %v276
    %v819 = vunpack.c.h.b16 %v276
    %v820 = vunpack.c.l.b16 %v277
    %v821 = vunpack.c.h.b16 %v277
    %v822 = vunpack.c.l.b16 %v278
    %v823 = vunpack.c.h.b16 %v278
    %v824 = vunpack.c.l.b16 %v279
    %v825 = vunpack.c.h.b16 %v279
    %v826 = vunpack.c.l.b16 %v280
    %v827 = vunpack.c.h.b16 %v280
    %v828 = vunpack.c.l.b16 %v281
    %v829 = vunpack.c.h.b16 %v281
    %v830 = vunpack.c.l.b16 %v282
    %v831 = vunpack.c.h.b16 %v282
    %v832 = vunpack.c.l.b16 %v283
    %v833 = vunpack.c.h.b16 %v283
    %v834 = vunpack.c.l.b16 %v284
    %v835 = vunpack.c.h.b16 %v284
    %v836 = vunpack.c.l.b16 %v285
    %v837 = vunpack.c.h.b16 %v285
    %v838 = vunpack.c.l.b16 %v286
    %v839 = vunpack.c.h.b16 %v286
    %v840 = vunpack.c.l.b16 %v287
    %v841 = vunpack.c.h.b16 %v287
    %v842 = vunpack.c.l.b16 %v288
    %v843 = vunpack.c.h.b16 %v288
    %v844 = vunpack.c.l.b16 %v289
    %v845 = vunpack.c.h.b16 %v289
    %v846 = vunpack.c.l.b16 %v290
    %v847 = vunpack.c.h.b16 %v290
    %v848 = vunpack.c.l.b16 %v291
    %v849 = vunpack.c.h.b16 %v291
    %v850 = vunpack.c.l.b16 %v292
    %v851 = vunpack.c.h.b16 %v292
    %v852 = vunpack.c.l.b16 %v293
    %v853 = vunpack.c.h.b16 %v293
    %v854 = vunpack.c.l.b16 %v294
    %v855 = vunpack.c.h.b16 %v294
    %v856 = vunpack.c.l.b16 %v295
    %v857 = vunpack.c.h.b16 %v295
    %v858 = vunpack.c.l.b16 %v296
    %v859 = vunpack.c.h.b16 %v296
    %v860 = vunpack.c.l.b16 %v297
    %v861 = vunpack.c.h.b16 %v297
    %v862 = vunpack.c.l.b16 %v298
    %v863 = vunpack.c.h.b16 %v298
    %v864 = vunpack.c.l.b16 %v299
    %v865 = vunpack.c.h.b16 %v299
    %v866 = vunpack.c.l.b16 %v300
    %v867 = vunpack.c.h.b16 %v300
    %v868 = vunpack.c.l.b16 %v301
    %v869 = vunpack.c.h.b16 %v301
    %v870 = vunpack.c.l.b16 %v302
    %v871 = vunpack.c.h.b16 %v302
    %v872 = vunpack.c.l.b16 %v303
    %v873 = vunpack.c.h.b16 %v303
    %v874 = vunpack.c.l.b16 %v304
    %v875 = vunpack.c.h.b16 %v304
    %v876 = vunpack.c.l.b16 %v305
    %v877 = vunpack.c.h.b16 %v305
    %v878 = vunpack.c.l.b16 %v306
    %v879 = vunpack.c.h.b16 %v306
    %v880 = vunpack.c.l.b16 %v307
    %v881 = vunpack.c.h.b16 %v307
    %v882 = vunpack.c.l.b16 %v308
    %v883 = vunpack.c.h.b16 %v308
    %v884 = vunpack.c.l.b16 %v309
    %v885 = vunpack.c.h.b16 %v309
    %v886 = vunpack.c.l.b16 %v310
    %v887 = vunpack.c.h.b16 %v310
    %v888 = vunpack.c.l.b16 %v311
    %v889 = vunpack.c.h.b16 %v311
    %v890 = vunpack.c.l.b16 %v312
    %v891 = vunpack.c.h.b16 %v312
    %v892 = vunpack.c.l.b16 %v313
    %v893 = vunpack.c.h.b16 %v313
    %v894 = vunpack.c.l.b16 %v314
    %v895 = vunpack.c.h.b16 %v314
    %v896 = vunpack.c.l.b16 %v315
    %v897 = vunpack.c.h.b16 %v315
    %v898 = vunpack.c.l.b16 %v316
    %v899 = vunpack.c.h.b16 %v316
    %v900 = vunpack.c.l.b16 %v317
    %v901 = vunpack.c.h.b16 %v317
    %v902 = vunpack.c.l.b16 %v318
    %v903 = vunpack.c.h.b16 %v318
    %v904 = vunpack.c.l.b16 %v319
    %v905 = vunpack.c.h.b16 %v319
    %v906 = vunpack.c.l.b16 %v320
    %v907 = vunpack.c.h.b16 %v320
    %v908 = vunpack.c.l.b16 %v321
    %v909 = vunpack.c.h.b16 %v321
    %v910 = vunpack.c.l.b16 %v322
    %v911 = vunpack.c.h.b16 %v322
    %v912 = vunpack.c.l.b16 %v323
    %v913 = vunpack.c.h.b16 %v323
    %v914 = vunpack.c.l.b16 %v324
    %v915 = vunpack.c.h.b16 %v324
    %v916 = vunpack.c.l.b16 %v325
    %v917 = vunpack.c.h.b16 %v325
    %v918 = vunpack.c.l.b16 %v326
    %v919 = vunpack.c.h.b16 %v326
    %v920 = vunpack.c.l.b16 %v327
    %v921 = vunpack.c.h.b16 %v327
    %v922 = vunpack.c.l.b16 %v328
    %v923 = vunpack.c.h.b16 %v328
    %v924 = vunpack.c.l.b16 %v329
    %v925 = vunpack.c.h.b16 %v329
    %v926 = vunpack.c.l.b16 %v330
    %v927 = vunpack.c.h.b16 %v330
    %v928 = vunpack.c.l.b16 %v331
    %v929 = vunpack.c.h.b16 %v331
    %v930 = vunpack.c.l.b16 %v332
    %v931 = vunpack.c.h.b16 %v332
    %v932 = vunpack.c.l.b16 %v333
    %v933 = vunpack.c.h.b16 %v333
    %v934 = vunpack.c.l.b16 %v334
    %v935 = vunpack.c.h.b16 %v334
    %v936 = vunpack.c.l.b16 %v335
    %v937 = vunpack.c.h.b16 %v335
    %v938 = vunpack.c.l.b16 %v336
    %v939 = vunpack.c.h.b16 %v336
    %v940 = vunpack.c.l.b16 %v337
    %v941 = vunpack.c.h.b16 %v337
    %v942 = vunpack.c.l.b16 %v338
    %v943 = vunpack.c.h.b16 %v338
    %v944 = vunpack.c.l.b16 %v339
    %v945 = vunpack.c.h.b16 %v339
    %v946 = vunpack.c.l.b16 %v340
    %v947 = vunpack.c.h.b16 %v340
    %v948 = vunpack.c.l.b16 %v341
    %v949 = vunpack.c.h.b16 %v341
    %v950 = vunpack.c.l.b16 %v342
    %v951 = vunpack.c.h.b16 %v342
    %v952 = vunpack.c.l.b16 %v343
    %v953 = vunpack.c.h.b16 %v343
    %v954 = vunpack.c.l.b16 %v344
    %v955 = vunpack.c.h.b16 %v344
    %v956 = vunpack.c.l.b16 %v345
    %v957 = vunpack.c.h.b16 %v345
    %v958 = vunpack.c.l.b16 %v346
    %v959 = vunpack.c.h.b16 %v346
    %v960 = vunpack.c.l.b16 %v347
    %v961 = vunpack.c.h.b16 %v347
    %v962 = vunpack.c.l.b16 %v348
    %v963 = vunpack.c.h.b16 %v348
    %v964 = vunpack.c.l.b16 %v349
    %v965 = vunpack.c.h.b16 %v349
    %v966 = vunpack.c.l.b16 %v350
    %v967 = vunpack.c.h.b16 %v350
    %v968 = vunpack.c.l.b16 %v351
    %v969 = vunpack.c.h.b16 %v351
    %v970 = vunpack.c.l.b16 %v352
    %v971 = vunpack.c.h.b16 %v352
    %v972 = vunpack.c.l.b16 %v353
    %v973 = vunpack.c.h.b16 %v353
    %v974 = vunpack.c.l.b16 %v354
    %v975 = vunpack.c.h.b16 %v354
    %v976 = vunpack.c.l.b16 %v355
    %v977 = vunpack.c.h.b16 %v355
    %v978 = vunpack.c.l.b16 %v356
    %v979 = vunpack.c.h.b16 %v356
    %v980 = vunpack.c.l.b16 %v357
    %v981 = vunpack.c.h.b16 %v357
    %v982 = vunpack.c.l.b16 %v358
    %v983 = vunpack.c.h.b16 %v358
    %v984 = vunpack.c.l.b16 %v359
    %v985 = vunpack.c.h.b16 %v359
    %v986 = vunpack.c.l.b16 %v360
    %v987 = vunpack.c.h.b16 %v360
    %v988 = vunpack.c.l.b16 %v361
    %v989 = vunpack.c.h.b16 %v361
    %v990 = vunpack.c.l.b16 %v362
    %v991 = vunpack.c.h.b16 %v362
    %v992 = vunpack.c.l.b16 %v363
    %v993 = vunpack.c.h.b16 %v363
    %v994 = vunpack.c.l.b16 %v364
    %v995 = vunpack.c.h.b16 %v364
    %v996 = vunpack.c.l.b16 %v365
    %v997 = vunpack.c.h.b16 %v365
    %v998 = vunpack.c.l.b16 %v366
    %v999 = vunpack.c.h.b16 %v366
    %v1000 = vunpack.c.l.b16 %v367
    %v1001 = vunpack.c.h.b16 %v367
    %v1002 = vunpack.c.l.b16 %v368
    %v1003 = vunpack.c.h.b16 %v368
    %v1004 = vunpack.c.l.b16 %v369
    %v1005 = vunpack.c.h.b16 %v369
    %v1006 = vunpack.c.l.b16 %v370
    %v1007 = vunpack.c.h.b16 %v370
    %v1008 = vunpack.c.l.b16 %v371
    %v1009 = vunpack.c.h.b16 %v371
    %v1010 = vunpack.c.l.b16 %v372
    %v1011 = vunpack.c.h.b16 %v372
    %v1012 = vunpack.c.l.b16 %v373
    %v1013 = vunpack.c.h.b16 %v373
    %v1014 = vunpack.c.l.b16 %v374
    %v1015 = vunpack.c.h.b16 %v374
    %v1016 = vunpack.c.l.b16 %v375
    %v1017 = vunpack.c.h.b16 %v375
    %v1018 = vunpack.c.l.b16 %v376
    %v1019 = vunpack.c.h.b16 %v376
    %v1020 = vunpack.c.l.b16 %v377
    %v1021 = vunpack.c.h.b16 %v377
    %v1022 = vunpack.c.l.b16 %v378
    %v1023 = vunpack.c.h.b16 %v378
    %v1024 = vunpack.c.l.b16 %v379
    %v1025 = vunpack.c.h.b16 %v379
    %v1026 = vunpack.c.l.b16 %v380
    %v1027 = vunpack.c.h.b16 %v380
    %v1028 = vunpack.c.l.b16 %v381
    %v1029 = vunpack.c.h.b16 %v381
    %v1030 = vunpack.c.l.b16 %v382
    %v1031 = vunpack.c.h.b16 %v382
    %v1032 = vunpack.c.l.b16 %v383
    %v1033 = vunpack.c.h.b16 %v383
    %v1034 = vunpack.c.l.b16 %v384
    %v1035 = vunpack.c.h.b16 %v384
    %v1036 = vunpack.c.l.b16 %v385
    %v1037 = vunpack.c.h.b16 %v385
    %v1038 = vunpack.c.l.b16 %v386
    %v1039 = vunpack.c.h.b16 %v386
    %v1040 = vunpack.c.l.b16 %v387
    %v1041 = vunpack.c.h.b16 %v387
    %v1042 = vunpack.c.l.b16 %v388
    %v1043 = vunpack.c.h.b16 %v388
    %v1044 = vunpack.c.l.b16 %v389
    %v1045 = vunpack.c.h.b16 %v389
    %v1046 = vunpack.c.l.b16 %v390
    %v1047 = vunpack.c.h.b16 %v390
    %v1048 = vunpack.c.l.b16 %v391
    %v1049 = vunpack.c.h.b16 %v391
    %v1050 = vunpack.c.l.b16 %v392
    %v1051 = vunpack.c.h.b16 %v392
    %v1052 = vunpack.c.l.b16 %v393
    %v1053 = vunpack.c.h.b16 %v393
    %v1054 = vunpack.c.l.b16 %v394
    %v1055 = vunpack.c.h.b16 %v394
    %v1056 = vunpack.c.l.b16 %v395
    %v1057 = vunpack.c.h.b16 %v395
    %v1058 = vunpack.c.l.b16 %v396
    %v1059 = vunpack.c.h.b16 %v396
    %v1060 = vunpack.c.l.b16 %v397
    %v1061 = vunpack.c.h.b16 %v397
    %v1062 = vunpack.c.l.b16 %v398
    %v1063 = vunpack.c.h.b16 %v398
    %v1064 = vunpack.c.l.b16 %v399
    %v1065 = vunpack.c.h.b16 %v399
    %v1066 = vunpack.c.l.b16 %v400
    %v1067 = vunpack.c.h.b16 %v400
    %v1068 = vunpack.c.l.b16 %v401
    %v1069 = vunpack.c.h.b16 %v401
    %v1070 = vunpack.c.l.b16 %v402
    %v1071 = vunpack.c.h.b16 %v402
    %v1072 = vunpack.c.l.b16 %v403
    %v1073 = vunpack.c.h.b16 %v403
    %v1074 = vunpack.c.l.b16 %v404
    %v1075 = vunpack.c.h.b16 %v404
    %v1076 = vunpack.c.l.b16 %v405
    %v1077 = vunpack.c.h.b16 %v405
    %v1078 = vunpack.c.l.b16 %v406
    %v1079 = vunpack.c.h.b16 %v406
    %v1080 = vunpack.c.l.b16 %v407
    %v1081 = vunpack.c.h.b16 %v407
    %v1082 = vunpack.c.l.b16 %v408
    %v1083 = vunpack.c.h.b16 %v408
    %v1084 = vunpack.c.l.b16 %v409
    %v1085 = vunpack.c.h.b16 %v409
    %v1086 = vunpack.c.l.b16 %v410
    %v1087 = vunpack.c.h.b16 %v410
    %v1088 = vunpack.c.l.b16 %v411
    %v1089 = vunpack.c.h.b16 %v411
    %v1090 = vunpack.c.l.b16 %v412
    %v1091 = vunpack.c.h.b16 %v412
    %v1092 = vunpack.c.l.b16 %v413
    %v1093 = vunpack.c.h.b16 %v413
    %v1094 = vunpack.c.l.b16 %v414
    %v1095 = vunpack.c.h.b16 %v414
    %v1096 = vunpack.c.l.b16 %v415
    %v1097 = vunpack.c.h.b16 %v415
    %v1098 = vunpack.c.l.b16 %v416
    %v1099 = vunpack.c.h.b16 %v416
    %v1100 = vunpack.c.l.b16 %v417
    %v1101 = vunpack.c.h.b16 %v417
    %v1102 = vunpack.c.l.b16 %v418
    %v1103 = vunpack.c.h.b16 %v418
    %v1104 = vunpack.c.l.b16 %v419
    %v1105 = vunpack.c.h.b16 %v419
    %v1106 = vunpack.c.l.b16 %v420
    %v1107 = vunpack.c.h.b16 %v420
    %v1108 = vunpack.c.l.b16 %v421
    %v1109 = vunpack.c.h.b16 %v421
    %v1110 = vunpack.c.l.b16 %v422
    %v1111 = vunpack.c.h.b16 %v422
    %v1112 = vunpack.c.l.b16 %v423
    %v1113 = vunpack.c.h.b16 %v423
    %v1114 = vunpack.c.l.b16 %v424
    %v1115 = vunpack.c.h.b16 %v424
    %v1116 = vunpack.c.l.b16 %v425
    %v1117 = vunpack.c.h.b16 %v425
    %v1118 = vunpack.c.l.b16 %v426
    %v1119 = vunpack.c.h.b16 %v426
    %v1120 = vunpack.c.l.b16 %v427
    %v1121 = vunpack.c.h.b16 %v427
    %v1122 = vunpack.c.l.b16 %v428
    %v1123 = vunpack.c.h.b16 %v428
    %v1124 = vunpack.c.l.b16 %v429
    %v1125 = vunpack.c.h.b16 %v429
    %v1126 = vunpack.c.l.b16 %v430
    %v1127 = vunpack.c.h.b16 %v430
    %v1128 = vunpack.c.l.b16 %v431
    %v1129 = vunpack.c.h.b16 %v431
    %v1130 = vunpack.c.l.b16 %v432
    %v1131 = vunpack.c.h.b16 %v432
    %v1132 = vunpack.c.l.b16 %v433
    %v1133 = vunpack.c.h.b16 %v433
    %v1134 = vunpack.c.l.b16 %v434
    %v1135 = vunpack.c.h.b16 %v434
    %v1136 = vunpack.c.l.b16 %v435
    %v1137 = vunpack.c.h.b16 %v435
    %v1138 = vunpack.c.l.b16 %v436
    %v1139 = vunpack.c.h.b16 %v436
    %v1140 = vunpack.c.l.b16 %v437
    %v1141 = vunpack.c.h.b16 %v437
    %v1142 = vunpack.c.l.b16 %v438
    %v1143 = vunpack.c.h.b16 %v438
    %v1144 = vunpack.c.l.b16 %v439
    %v1145 = vunpack.c.h.b16 %v439
    %v1146 = vunpack.c.l.b16 %v440
    %v1147 = vunpack.c.h.b16 %v440
    %v1148 = vunpack.c.l.b16 %v441
    %v1149 = vunpack.c.h.b16 %v441
    %v1150 = vunpack.c.l.b16 %v442
    %v1151 = vunpack.c.h.b16 %v442
    %v1152 = vunpack.c.l.b16 %v443
    %v1153 = vunpack.c.h.b16 %v443
    %v1154 = vunpack.c.l.b16 %v444
    %v1155 = vunpack.c.h.b16 %v444
    %v1156 = vunpack.c.l.b16 %v445
    %v1157 = vunpack.c.h.b16 %v445
    %v1158 = vunpack.c.l.b16 %v446
    %v1159 = vunpack.c.h.b16 %v446
    %v1160 = vunpack.c.l.b16 %v447
    %v1161 = vunpack.c.h.b16 %v447
    %v1162 = vunpack.c.l.b16 %v448
    %v1163 = vunpack.c.h.b16 %v448
    %v1164 = vunpack.c.l.b16 %v449
    %v1165 = vunpack.c.h.b16 %v449
    %v1166 = vunpack.c.l.b16 %v450
    %v1167 = vunpack.c.h.b16 %v450
    %v1168 = vunpack.c.l.b16 %v451
    %v1169 = vunpack.c.h.b16 %v451
    %v1170 = vunpack.c.l.b16 %v452
    %v1171 = vunpack.c.h.b16 %v452
    %v1172 = vunpack.c.l.b16 %v453
    %v1173 = vunpack.c.h.b16 %v453
    %v1174 = vunpack.c.l.b16 %v454
    %v1175 = vunpack.c.h.b16 %v454
    %v1176 = vunpack.c.l.b16 %v455
    %v1177 = vunpack.c.h.b16 %v455
    %v1178 = vunpack.c.l.b16 %v456
    %v1179 = vunpack.c.h.b16 %v456
    %v1180 = vunpack.c.l.b16 %v457
    %v1181 = vunpack.c.h.b16 %v457
    %v1182 = vunpack.c.l.b16 %v458
    %v1183 = vunpack.c.h.b16 %v458
    %v1184 = vunpack.c.l.b16 %v459
    %v1185 = vunpack.c.h.b16 %v459
    %v1186 = vunpack.c.l.b16 %v460
    %v1187 = vunpack.c.h.b16 %v460
    %v1188 = vunpack.c.l.b16 %v461
    %v1189 = vunpack.c.h.b16 %v461
    %v1190 = vunpack.c.l.b16 %v462
    %v1191 = vunpack.c.h.b16 %v462
    %v1192 = vunpack.c.l.b16 %v463
    %v1193 = vunpack.c.h.b16 %v463
    %v1194 = vunpack.c.l.b16 %v464
    %v1195 = vunpack.c.h.b16 %v464
    %v1196 = vunpack.c.l.b16 %v465
    %v1197 = vunpack.c.h.b16 %v465
    %v1198 = vunpack.c.l.b16 %v466
    %v1199 = vunpack.c.h.b16 %v466
    %v1200 = vunpack.c.l.b16 %v467
    %v1201 = vunpack.c.h.b16 %v467
    %v1202 = vunpack.c.l.b16 %v468
    %v1203 = vunpack.c.h.b16 %v468
    %v1204 = vunpack.c.l.b16 %v469
    %v1205 = vunpack.c.h.b16 %v469
    %v1206 = vunpack.c.l.b16 %v470
    %v1207 = vunpack.c.h.b16 %v470
    %v1208 = vunpack.c.l.b16 %v471
    %v1209 = vunpack.c.h.b16 %v471
    %v1210 = vunpack.c.l.b16 %v472
    %v1211 = vunpack.c.h.b16 %v472
    %v1212 = vunpack.c.l.b16 %v473
    %v1213 = vunpack.c.h.b16 %v473
    %v1214 = vunpack.c.l.b16 %v474
    %v1215 = vunpack.c.h.b16 %v474
    %v1216 = vunpack.c.l.b16 %v475
    %v1217 = vunpack.c.h.b16 %v475
    %v1218 = vunpack.c.l.b16 %v476
    %v1219 = vunpack.c.h.b16 %v476
    %v1220 = vunpack.c.l.b16 %v477
    %v1221 = vunpack.c.h.b16 %v477
    %v1222 = vunpack.c.l.b16 %v478
    %v1223 = vunpack.c.h.b16 %v478
    %v1224 = vunpack.c.l.b16 %v479
    %v1225 = vunpack.c.h.b16 %v479
    %v1226 = vunpack.c.l.b16 %v480
    %v1227 = vunpack.c.h.b16 %v480
    %v1228 = vunpack.c.l.b16 %v481
    %v1229 = vunpack.c.h.b16 %v481
    %v1230 = vunpack.c.l.b16 %v482
    %v1231 = vunpack.c.h.b16 %v482
    %v1232 = vunpack.c.l.b16 %v483
    %v1233 = vunpack.c.h.b16 %v483
    %v1234 = vunpack.c.l.b16 %v484
    %v1235 = vunpack.c.h.b16 %v484
    %v1236 = vunpack.c.l.b16 %v485
    %v1237 = vunpack.c.h.b16 %v485
    %v1238 = vunpack.c.l.b16 %v486
    %v1239 = vunpack.c.h.b16 %v486
    %v1240 = vunpack.c.l.b16 %v487
    %v1241 = vunpack.c.h.b16 %v487
    %v1242 = vunpack.c.l.b16 %v488
    %v1243 = vunpack.c.h.b16 %v488
    %v1244 = vunpack.c.l.b16 %v489
    %v1245 = vunpack.c.h.b16 %v489
    %v1246 = vunpack.c.l.b16 %v490
    %v1247 = vunpack.c.h.b16 %v490
    %v1248 = vunpack.c.l.b16 %v491
    %v1249 = vunpack.c.h.b16 %v491
    %v1250 = vunpack.c.l.b16 %v492
    %v1251 = vunpack.c.h.b16 %v492
    %v1252 = vunpack.c.l.b16 %v493
    %v1253 = vunpack.c.h.b16 %v493
    %v1254 = vunpack.c.l.b16 %v494
    %v1255 = vunpack.c.h.b16 %v494
    %v1256 = vunpack.c.l.b16 %v495
    %v1257 = vunpack.c.h.b16 %v495
    %v1258 = vunpack.c.l.b16 %v496
    %v1259 = vunpack.c.h.b16 %v496
    %v1260 = vunpack.c.l.b16 %v497
    %v1261 = vunpack.c.h.b16 %v497
    %v1262 = vunpack.c.l.b16 %v498
    %v1263 = vunpack.c.h.b16 %v498
    %v1264 = vunpack.c.l.b16 %v499
    %v1265 = vunpack.c.h.b16 %v499
    %v1266 = vunpack.c.l.b16 %v500
    %v1267 = vunpack.c.h.b16 %v500
    %v1268 = vunpack.c.l.b16 %v501
    %v1269 = vunpack.c.h.b16 %v501
    %v1270 = vunpack.c.l.b16 %v502
    %v1271 = vunpack.c.h.b16 %v502
    %v1272 = vunpack.c.l.b16 %v503
    %v1273 = vunpack.c.h.b16 %v503
    %v1274 = vunpack.c.l.b16 %v504
    %v1275 = vunpack.c.h.b16 %v504
    %v1276 = vunpack.c.l.b16 %v505
    %v1277 = vunpack.c.h.b16 %v505
    %v1278 = vunpack.c.l.b16 %v506
    %v1279 = vunpack.c.h.b16 %v506
    %v1280 = vunpack.c.l.b16 %v507
    %v1281 = vunpack.c.h.b16 %v507
    %v1282 = vunpack.c.l.b16 %v508
    %v1283 = vunpack.c.h.b16 %v508
    %v1284 = vunpack.c.l.b16 %v509
    %v1285 = vunpack.c.h.b16 %v509
    %v1286 = vunpack.c.l.b16 %v510
    %v1287 = vunpack.c.h.b16 %v510
    %v1288 = vunpack.c.l.b16 %v511
    %v1289 = vunpack.c.h.b16 %v511
    %v1290 = vunpack.c.l.b16 %v512
    %v1291 = vunpack.c.h.b16 %v512
    %v1292 = vunpack.c.l.b16 %v513
    %v1293 = vunpack.c.h.b16 %v513
    %v1294 = vunpack.c.l.b16 %v514
    %v1295 = vunpack.c.h.b16 %v514
    %v1296 = vunpack.c.l.b16 %v515
    %v1297 = vunpack.c.h.b16 %v515
    %v1298 = vunpack.c.l.b16 %v516
    %v1299 = vunpack.c.h.b16 %v516
    %v1300 = vunpack.c.l.b16 %v517
    %v1301 = vunpack.c.h.b16 %v517
    %v1302 = vunpack.c.l.b16 %v518
    %v1303 = vunpack.c.h.b16 %v518
    %v1304 = vunpack.c.l.b16 %v519
    %v1305 = vunpack.c.h.b16 %v519
    %v1306 = vunpack.c.l.b16 %v520
    %v1307 = vunpack.c.h.b16 %v520
    %v1308 = vunpack.c.l.b16 %v521
    %v1309 = vunpack.c.h.b16 %v521
    %v1310 = vunpack.c.l.b16 %v522
    %v1311 = vunpack.c.h.b16 %v522
    %v1312 = vunpack.c.l.b16 %v523
    %v1313 = vunpack.c.h.b16 %v523
    %v1314 = vpack.c.b16 %v806, %v802
    %v1315 = vpack.c.b16 %v807, %v803
    %v1316 = vpack.c.b16 %v808, %v804
    %v1317 = vpack.c.b16 %v809, %v805
    %v1318 = vpack.c.b16 %v814, %v810
    %v1319 = vpack.c.b16 %v815, %v811
    %v1320 = vpack.c.b16 %v816, %v812
    %v1321 = vpack.c.b16 %v817, %v813
    %v1322 = vpack.c.b16 %v822, %v818
    %v1323 = vpack.c.b16 %v823, %v819
    %v1324 = vpack.c.b16 %v824, %v820
    %v1325 = vpack.c.b16 %v825, %v821
    %v1326 = vpack.c.b16 %v830, %v826
    %v1327 = vpack.c.b16 %v831, %v827
    %v1328 = vpack.c.b16 %v832, %v828
    %v1329 = vpack.c.b16 %v833, %v829
    %v1330 = vpack.c.b16 %v838, %v834
    %v1331 = vpack.c.b16 %v839, %v835
    %v1332 = vpack.c.b16 %v840, %v836
    %v1333 = vpack.c.b16 %v841, %v837
    %v1334 = vpack.c.b16 %v846, %v842
    %v1335 = vpack.c.b16 %v847, %v843
    %v1336 = vpack.c.b16 %v848, %v844
    %v1337 = vpack.c.b16 %v849, %v845
    %v1338 = vpack.c.b16 %v854, %v850
    %v1339 = vpack.c.b16 %v855, %v851
    %v1340 = vpack.c.b16 %v856, %v852
    %v1341 = vpack.c.b16 %v857, %v853
    %v1342 = vpack.c.b16 %v862, %v858
    %v1343 = vpack.c.b16 %v863, %v859
    %v1344 = vpack.c.b16 %v864, %v860
    %v1345 = vpack.c.b16 %v865, %v861
    %v1346 = vpack.c.b16 %v870, %v866
    %v1347 = vpack.c.b16 %v871, %v867
    %v1348 = vpack.c.b16 %v872, %v868
    %v1349 = vpack.c.b16 %v873, %v869
    %v1350 = vpack.c.b16 %v878, %v874
    %v1351 = vpack.c.b16 %v879, %v875
    %v1352 = vpack.c.b16 %v880, %v876
    %v1353 = vpack.c.b16 %v881, %v877
    %v1354 = vpack.c.b16 %v886, %v882
    %v1355 = vpack.c.b16 %v887, %v883
    %v1356 = vpack.c.b16 %v888, %v884
    %v1357 = vpack.c.b16 %v889, %v885
    %v1358 = vpack.c.b16 %v894, %v890
    %v1359 = vpack.c.b16 %v895, %v891
    %v1360 = vpack.c.b16 %v896, %v892
    %v1361 = vpack.c.b16 %v897, %v893
    %v1362 = vpack.c.b16 %v902, %v898
    %v1363 = vpack.c.b16 %v903, %v899
    %v1364 = vpack.c.b16 %v904, %v900
    %v1365 = vpack.c.b16 %v905, %v901
    %v1366 = vpack.c.b16 %v910, %v906
    %v1367 = vpack.c.b16 %v911, %v907
    %v1368 = vpack.c.b16 %v912, %v908
    %v1369 = vpack.c.b16 %v913, %v909
    %v1370 = vpack.c.b16 %v918, %v914
    %v1371 = vpack.c.b16 %v919, %v915
    %v1372 = vpack.c.b16 %v920, %v916
    %v1373 = vpack.c.b16 %v921, %v917
    %v1374 = vpack.c.b16 %v926, %v922
    %v1375 = vpack.c.b16 %v927, %v923
    %v1376 = vpack.c.b16 %v928, %v924
    %v1377 = vpack.c.b16 %v929, %v925
    %v1378 = vpack.c.b16 %v934, %v930
    %v1379 = vpack.c.b16 %v935, %v931
    %v1380 = vpack.c.b16 %v936, %v932
    %v1381 = vpack.c.b16 %v937, %v933
    %v1382 = vpack.c.b16 %v942, %v938
    %v1383 = vpack.c.b16 %v943, %v939
    %v1384 = vpack.c.b16 %v944, %v940
    %v1385 = vpack.c.b16 %v945, %v941
    %v1386 = vpack.c.b16 %v950, %v946
    %v1387 = vpack.c.b16 %v951, %v947
    %v1388 = vpack.c.b16 %v952, %v948
    %v1389 = vpack.c.b16 %v953, %v949
    %v1390 = vpack.c.b16 %v958, %v954
    %v1391 = vpack.c.b16 %v959, %v955
    %v1392 = vpack.c.b16 %v960, %v956
    %v1393 = vpack.c.b16 %v961, %v957
    %v1394 = vpack.c.b16 %v966, %v962
    %v1395 = vpack.c.b16 %v967, %v963
    %v1396 = vpack.c.b16 %v968, %v964
    %v1397 = vpack.c.b16 %v969, %v965
    %v1398 = vpack.c.b16 %v974, %v970
    %v1399 = vpack.c.b16 %v975, %v971
    %v1400 = vpack.c.b16 %v976, %v972
    %v1401 = vpack.c.b16 %v977, %v973
    %v1402 = vpack.c.b16 %v982, %v978
    %v1403 = vpack.c.b16 %v983, %v979
    %v1404 = vpack.c.b16 %v984, %v980
    %v1405 = vpack.c.b16 %v985, %v981
    %v1406 = vpack.c.b16 %v990, %v986
    %v1407 = vpack.c.b16 %v991, %v987
    %v1408 = vpack.c.b16 %v992, %v988
    %v1409 = vpack.c.b16 %v993, %v989
    %v1410 = vpack.c.b16 %v998, %v994
    %v1411 = vpack.c.b16 %v999, %v995
    %v1412 = vpack.c.b16 %v1000, %v996
    %v1413 = vpack.c.b16 %v1001, %v997
    %v1414 = vpack.c.b16 %v1006, %v1002
    %v1415 = vpack.c.b16 %v1007, %v1003
    %v1416 = vpack.c.b16 %v1008, %v1004
    %v1417 = vpack.c.b16 %v1009, %v1005
    %v1418 = vpack.c.b16 %v1014, %v1010
    %v1419 = vpack.c.b16 %v1015, %v1011
    %v1420 = vpack.c.b16 %v1016, %v1012
    %v1421 = vpack.c.b16 %v1017, %v1013
    %v1422 = vpack.c.b16 %v1022, %v1018
    %v1423 = vpack.c.b16 %v1023, %v1019
    %v1424 = vpack.c.b16 %v1024, %v1020
    %v1425 = vpack.c.b16 %v1025, %v1021
    %v1426 = vpack.c.b16 %v1030, %v1026
    %v1427 = vpack.c.b16 %v1031, %v1027
    %v1428 = vpack.c.b16 %v1032, %v1028
    %v1429 = vpack.c.b16 %v1033, %v1029
    %v1430 = vpack.c.b16 %v1038, %v1034
    %v1431 = vpack.c.b16 %v1039, %v1035
    %v1432 = vpack.c.b16 %v1040, %v1036
    %v1433 = vpack.c.b16 %v1041, %v1037
    %v1434 = vpack.c.b16 %v1046, %v1042
    %v1435 = vpack.c.b16 %v1047, %v1043
    %v1436 = vpack.c.b16 %v1048, %v1044
    %v1437 = vpack.c.b16 %v1049, %v1045
    %v1438 = vpack.c.b16 %v1054, %v1050
    %v1439 = vpack.c.b16 %v1055, %v1051
    %v1440 = vpack.c.b16 %v1056, %v1052
    %v1441 = vpack.c.b16 %v1057, %v1053
    %v1442 = vpack.c.b16 %v1062, %v1058
    %v1443 = vpack.c.b16 %v1063, %v1059
    %v1444 = vpack.c.b16 %v1064, %v1060
    %v1445 = vpack.c.b16 %v1065, %v1061
    %v1446 = vpack.c.b16 %v1070, %v1066
    %v1447 = vpack.c.b16 %v1071, %v1067
    %v1448 = vpack.c.b16 %v1072, %v1068
    %v1449 = vpack.c.b16 %v1073, %v1069
    %v1450 = vpack.c.b16 %v1078, %v1074
    %v1451 = vpack.c.b16 %v1079, %v1075
    %v1452 = vpack.c.b16 %v1080, %v1076
    %v1453 = vpack.c.b16 %v1081, %v1077
    %v1454 = vpack.c.b16 %v1086, %v1082
    %v1455 = vpack.c.b16 %v1087, %v1083
    %v1456 = vpack.c.b16 %v1088, %v1084
    %v1457 = vpack.c.b16 %v1089, %v1085
    %v1458 = vpack.c.b16 %v1094, %v1090
    %v1459 = vpack.c.b16 %v1095, %v1091
    %v1460 = vpack.c.b16 %v1096, %v1092
    %v1461 = vpack.c.b16 %v1097, %v1093
    %v1462 = vpack.c.b16 %v1102, %v1098
    %v1463 = vpack.c.b16 %v1103, %v1099
    %v1464 = vpack.c.b16 %v1104, %v1100
    %v1465 = vpack.c.b16 %v1105, %v1101
    %v1466 = vpack.c.b16 %v1110, %v1106
    %v1467 = vpack.c.b16 %v1111, %v1107
    %v1468 = vpack.c.b16 %v1112, %v1108
    %v1469 = vpack.c.b16 %v1113, %v1109
    %v1470 = vpack.c.b16 %v1118, %v1114
    %v1471 = vpack.c.b16 %v1119, %v1115
    %v1472 = vpack.c.b16 %v1120, %v1116
    %v1473 = vpack.c.b16 %v1121, %v1117
    %v1474 = vpack.c.b16 %v1126, %v1122
    %v1475 = vpack.c.b16 %v1127, %v1123
    %v1476 = vpack.c.b16 %v1128, %v1124
    %v1477 = vpack.c.b16 %v1129, %v1125
    %v1478 = vpack.c.b16 %v1134, %v1130
    %v1479 = vpack.c.b16 %v1135, %v1131
    %v1480 = vpack.c.b16 %v1136, %v1132
    %v1481 = vpack.c.b16 %v1137, %v1133
    %v1482 = vpack.c.b16 %v1142, %v1138
    %v1483 = vpack.c.b16 %v1143, %v1139
    %v1484 = vpack.c.b16 %v1144, %v1140
    %v1485 = vpack.c.b16 %v1145, %v1141
    %v1486 = vpack.c.b16 %v1150, %v1146
    %v1487 = vpack.c.b16 %v1151, %v1147
    %v1488 = vpack.c.b16 %v1152, %v1148
    %v1489 = vpack.c.b16 %v1153, %v1149
    %v1490 = vpack.c.b16 %v1158, %v1154
    %v1491 = vpack.c.b16 %v1159, %v1155
    %v1492 = vpack.c.b16 %v1160, %v1156
    %v1493 = vpack.c.b16 %v1161, %v1157
    %v1494 = vpack.c.b16 %v1166, %v1162
    %v1495 = vpack.c.b16 %v1167, %v1163
    %v1496 = vpack.c.b16 %v1168, %v1164
    %v1497 = vpack.c.b16 %v1169, %v1165
    %v1498 = vpack.c.b16 %v1174, %v1170
    %v1499 = vpack.c.b16 %v1175, %v1171
    %v1500 = vpack.c.b16 %v1176, %v1172
    %v1501 = vpack.c.b16 %v1177, %v1173
    %v1502 = vpack.c.b16 %v1182, %v1178
    %v1503 = vpack.c.b16 %v1183, %v1179
    %v1504 = vpack.c.b16 %v1184, %v1180
    %v1505 = vpack.c.b16 %v1185, %v1181
    %v1506 = vpack.c.b16 %v1190, %v1186
    %v1507 = vpack.c.b16 %v1191, %v1187
    %v1508 = vpack.c.b16 %v1192, %v1188
    %v1509 = vpack.c.b16 %v1193, %v1189
    %v1510 = vpack.c.b16 %v1198, %v1194
    %v1511 = vpack.c.b16 %v1199, %v1195
    %v1512 = vpack.c.b16 %v1200, %v1196
    %v1513 = vpack.c.b16 %v1201, %v1197
    %v1514 = vpack.c.b16 %v1206, %v1202
    %v1515 = vpack.c.b16 %v1207, %v1203
    %v1516 = vpack.c.b16 %v1208, %v1204
    %v1517 = vpack.c.b16 %v1209, %v1205
    %v1518 = vpack.c.b16 %v1214, %v1210
    %v1519 = vpack.c.b16 %v1215, %v1211
    %v1520 = vpack.c.b16 %v1216, %v1212
    %v1521 = vpack.c.b16 %v1217, %v1213
    %v1522 = vpack.c.b16 %v1222, %v1218
    %v1523 = vpack.c.b16 %v1223, %v1219
    %v1524 = vpack.c.b16 %v1224, %v1220
    %v1525 = vpack.c.b16 %v1225, %v1221
    %v1526 = vpack.c.b16 %v1230, %v1226
    %v1527 = vpack.c.b16 %v1231, %v1227
    %v1528 = vpack.c.b16 %v1232, %v1228
    %v1529 = vpack.c.b16 %v1233, %v1229
    %v1530 = vpack.c.b16 %v1238, %v1234
    %v1531 = vpack.c.b16 %v1239, %v1235
    %v1532 = vpack.c.b16 %v1240, %v1236
    %v1533 = vpack.c.b16 %v1241, %v1237
    %v1534 = vpack.c.b16 %v1246, %v1242
    %v1535 = vpack.c.b16 %v1247, %v1243
    %v1536 = vpack.c.b16 %v1248, %v1244
    %v1537 = vpack.c.b16 %v1249, %v1245
    %v1538 = vpack.c.b16 %v1254, %v1250
    %v1539 = vpack.c.b16 %v1255, %v1251
    %v1540 = vpack.c.b16 %v1256, %v1252
    %v1541 = vpack.c.b16 %v1257, %v1253
    %v1542 = vpack.c.b16 %v1262, %v1258
    %v1543 = vpack.c.b16 %v1263, %v1259
    %v1544 = vpack.c.b16 %v1264, %v1260
    %v1545 = vpack.c.b16 %v1265, %v1261
    %v1546 = vpack.c.b16 %v1270, %v1266
    %v1547 = vpack.c.b16 %v1271, %v1267
    %v1548 = vpack.c.b16 %v1272, %v1268
    %v1549 = vpack.c.b16 %v1273, %v1269
    %v1550 = vpack.c.b16 %v1278, %v1274
    %v1551 = vpack.c.b16 %v1279, %v1275
    %v1552 = vpack.c.b16 %v1280, %v1276
    %v1553 = vpack.c.b16 %v1281, %v1277
    %v1554 = vpack.c.b16 %v1286, %v1282
    %v1555 = vpack.c.b16 %v1287, %v1283
    %v1556 = vpack.c.b16 %v1288, %v1284
    %v1557 = vpack.c.b16 %v1289, %v1285
    %v1558 = vpack.c.b16 %v1294, %v1290
    %v1559 = vpack.c.b16 %v1295, %v1291
    %v1560 = vpack.c.b16 %v1296, %v1292
    %v1561 = vpack.c.b16 %v1297, %v1293
    %v1562 = vpack.c.b16 %v1302, %v1298
    %v1563 = vpack.c.b16 %v1303, %v1299
    %v1564 = vpack.c.b16 %v1304, %v1300
    %v1565 = vpack.c.b16 %v1305, %v1301
    %v1566 = vpack.c.b16 %v1310, %v1306
    %v1567 = vpack.c.b16 %v1311, %v1307
    %v1568 = vpack.c.b16 %v1312, %v1308
    %v1569 = vpack.c.b16 %v1313, %v1309
    %1826 = vmatprep.subr.bf16.mxu0 %v1343
    %1827 = vmatpush1.bf16.msra.mxu0 %v1342
    %1828 = vmatprep.subr.bf16.mxu0 %v1339
    %1829 = vmatpush1.bf16.msra.mxu0 %v1338
    %1830 = vmatprep.subr.bf16.mxu0 %v1335
    %1831 = vmatpush1.bf16.msra.mxu0 %v1334
    %1832 = vmatprep.subr.bf16.mxu0 %v1331
    %1833 = vmatpush1.bf16.msra.mxu0 %v1330
    %1834 = vmatprep.subr.bf16.mxu0 %v1327
    %1835 = vmatpush1.bf16.msra.mxu0 %v1326
    %1836 = vmatprep.subr.bf16.mxu0 %v1323
    %1837 = vmatpush1.bf16.msra.mxu0 %v1322
    %1838 = vmatprep.subr.bf16.mxu0 %v1319
    %1839 = vmatpush1.bf16.msra.mxu0 %v1318
    %1840 = vmatprep.subr.bf16.mxu0 %v1315
    %1841 = vmatpush1.bf16.msra.mxu0 %v1314
    %1842 = vmatprep.subr.bf16.mxu0 %v1375
    %1843 = vmatpush2.bf16.msra.mxu0 %v1374
    %1844 = vmatprep.subr.bf16.mxu0 %v1371
    %1845 = vmatpush2.bf16.msra.mxu0 %v1370
    %1846 = vmatprep.subr.bf16.mxu0 %v1367
    %1847 = vmatpush2.bf16.msra.mxu0 %v1366
    %1848 = vmatprep.subr.bf16.mxu0 %v1363
    %1849 = vmatpush2.bf16.msra.mxu0 %v1362
    %1850 = vmatprep.subr.bf16.mxu0 %v1359
    %1851 = vmatpush2.bf16.msra.mxu0 %v1358
    %1852 = vmatprep.subr.bf16.mxu0 %v1355
    %1853 = vmatpush2.bf16.msra.mxu0 %v1354
    %1854 = vmatprep.subr.bf16.mxu0 %v1351
    %1855 = vmatpush2.bf16.msra.mxu0 %v1350
    %1856 = vmatprep.subr.bf16.mxu0 %v1347
    %1857 = vmatpush2.bf16.msra.mxu0 %v1346
    %1858 = vmatprep.mubr.bf16.mxu0 %v205
    %1859 = vmatmul.mubr.bf16.gmra.mxu0 %v204
    %v1860 = vpop.f32.mrf.mxu0
    %v1861 = vadd.f32 %v529, %v1860
    %v1862 = vpop.f32.mrf.mxu0
    %v1863 = vadd.f32 %v533, %v1862
    %v1864 = vpop.f32.mrf.mxu0
    %v1865 = vadd.f32 %v529, %v1864
    %v1866 = vpop.f32.mrf.mxu0
    %v1867 = vadd.f32 %v533, %v1866
    %1868 = vmatprep.mubr.bf16.mxu0 %v213
    %1869 = vmatmul.mubr.bf16.gmra.mxu0 %v212
    %v1870 = vpop.f32.mrf.mxu0
    %v1871 = vadd.f32 %v529, %v1870
    %v1872 = vpop.f32.mrf.mxu0
    %v1873 = vadd.f32 %v533, %v1872
    %v1874 = vpop.f32.mrf.mxu0
    %v1875 = vadd.f32 %v529, %v1874
    %v1876 = vpop.f32.mrf.mxu0
    %v1877 = vadd.f32 %v533, %v1876
    %1878 = vmatprep.mubr.bf16.mxu0 %v221
    %1879 = vmatmul.mubr.bf16.gmra.mxu0 %v220
    %v1880 = vpop.f32.mrf.mxu0
    %v1881 = vadd.f32 %v529, %v1880
    %v1882 = vpop.f32.mrf.mxu0
    %v1883 = vadd.f32 %v533, %v1882
    %v1884 = vpop.f32.mrf.mxu0
    %v1885 = vadd.f32 %v529, %v1884
    %v1886 = vpop.f32.mrf.mxu0
    %v1887 = vadd.f32 %v533, %v1886
    %1888 = vmatprep.mubr.bf16.mxu0 %v229
    %1889 = vmatmul.mubr.bf16.gmra.mxu0 %v228
    %v1890 = vpop.f32.mrf.mxu0
    %v1891 = vadd.f32 %v529, %v1890
    %v1892 = vpop.f32.mrf.mxu0
    %v1893 = vadd.f32 %v533, %v1892
    %v1894 = vpop.f32.mrf.mxu0
    %v1895 = vadd.f32 %v529, %v1894
    %v1896 = vpop.f32.mrf.mxu0
    %v1897 = vadd.f32 %v533, %v1896
    %1898 = vmatprep.mubr.bf16.mxu0 %v237
    %1899 = vmatmul.mubr.bf16.gmra.mxu0 %v236
    %v1900 = vpop.f32.mrf.mxu0
    %v1901 = vadd.f32 %v529, %v1900
    %v1902 = vpop.f32.mrf.mxu0
    %v1903 = vadd.f32 %v533, %v1902
    %v1904 = vpop.f32.mrf.mxu0
    %v1905 = vadd.f32 %v529, %v1904
    %v1906 = vpop.f32.mrf.mxu0
    %v1907 = vadd.f32 %v533, %v1906
    %1908 = vmatprep.mubr.bf16.mxu0 %v245
    %1909 = vmatmul.mubr.bf16.gmra.mxu0 %v244
    %v1910 = vpop.f32.mrf.mxu0
    %v1911 = vadd.f32 %v529, %v1910
    %v1912 = vpop.f32.mrf.mxu0
    %v1913 = vadd.f32 %v533, %v1912
    %v1914 = vpop.f32.mrf.mxu0
    %v1915 = vadd.f32 %v529, %v1914
    %v1916 = vpop.f32.mrf.mxu0
    %v1917 = vadd.f32 %v533, %v1916
    %1918 = vmatprep.mubr.bf16.mxu0 %v253
    %1919 = vmatmul.mubr.bf16.gmra.mxu0 %v252
    %v1920 = vpop.f32.mrf.mxu0
    %v1921 = vadd.f32 %v529, %v1920
    %v1922 = vpop.f32.mrf.mxu0
    %v1923 = vadd.f32 %v533, %v1922
    %v1924 = vpop.f32.mrf.mxu0
    %v1925 = vadd.f32 %v529, %v1924
    %v1926 = vpop.f32.mrf.mxu0
    %v1927 = vadd.f32 %v533, %v1926
    %1928 = vmatprep.mubr.bf16.mxu0 %v261
    %1929 = vmatmul.mubr.bf16.gmra.mxu0 %v260
    %v1930 = vpop.f32.mrf.mxu0
    %v1931 = vadd.f32 %v529, %v1930
    %v1932 = vpop.f32.mrf.mxu0
    %v1933 = vadd.f32 %v533, %v1932
    %v1934 = vpop.f32.mrf.mxu0
    %v1935 = vadd.f32 %v529, %v1934
    %v1936 = vpop.f32.mrf.mxu0
    %v1937 = vadd.f32 %v533, %v1936
    %1938 = vdwg.mxu0
    %1939 = vmatprep.subr.bf16.mxu0 %v1407
    %1940 = vmatpush1.bf16.msra.mxu0 %v1406
    %1941 = vmatprep.subr.bf16.mxu0 %v1403
    %1942 = vmatpush1.bf16.msra.mxu0 %v1402
    %1943 = vmatprep.subr.bf16.mxu0 %v1399
    %1944 = vmatpush1.bf16.msra.mxu0 %v1398
    %1945 = vmatprep.subr.bf16.mxu0 %v1395
    %1946 = vmatpush1.bf16.msra.mxu0 %v1394
    %1947 = vmatprep.subr.bf16.mxu0 %v1391
    %1948 = vmatpush1.bf16.msra.mxu0 %v1390
    %1949 = vmatprep.subr.bf16.mxu0 %v1387
    %1950 = vmatpush1.bf16.msra.mxu0 %v1386
    %1951 = vmatprep.subr.bf16.mxu0 %v1383
    %1952 = vmatpush1.bf16.msra.mxu0 %v1382
    %1953 = vmatprep.subr.bf16.mxu0 %v1379
    %1954 = vmatpush1.bf16.msra.mxu0 %v1378
    %1955 = vmatprep.subr.bf16.mxu0 %v1439
    %1956 = vmatpush2.bf16.msra.mxu0 %v1438
    %1957 = vmatprep.subr.bf16.mxu0 %v1435
    %1958 = vmatpush2.bf16.msra.mxu0 %v1434
    %1959 = vmatprep.subr.bf16.mxu0 %v1431
    %1960 = vmatpush2.bf16.msra.mxu0 %v1430
    %1961 = vmatprep.subr.bf16.mxu0 %v1427
    %1962 = vmatpush2.bf16.msra.mxu0 %v1426
    %1963 = vmatprep.subr.bf16.mxu0 %v1423
    %1964 = vmatpush2.bf16.msra.mxu0 %v1422
    %1965 = vmatprep.subr.bf16.mxu0 %v1419
    %1966 = vmatpush2.bf16.msra.mxu0 %v1418
    %1967 = vmatprep.subr.bf16.mxu0 %v1415
    %1968 = vmatpush2.bf16.msra.mxu0 %v1414
    %1969 = vmatprep.subr.bf16.mxu0 %v1411
    %1970 = vmatpush2.bf16.msra.mxu0 %v1410
    %1971 = vmatprep.mubr.bf16.mxu0 %v207
    %1972 = vmatmul.mubr.bf16.gmra.mxu0 %v206
    %v1973 = vpop.f32.mrf.mxu0
    %v1974 = vadd.f32 %v1861, %v1973
    %v1975 = vpop.f32.mrf.mxu0
    %v1976 = vadd.f32 %v1863, %v1975
    %v1977 = vpop.f32.mrf.mxu0
    %v1978 = vadd.f32 %v1865, %v1977
    %v1979 = vpop.f32.mrf.mxu0
    %v1980 = vadd.f32 %v1867, %v1979
    %1981 = vmatprep.mubr.bf16.mxu0 %v215
    %1982 = vmatmul.mubr.bf16.gmra.mxu0 %v214
    %v1983 = vpop.f32.mrf.mxu0
    %v1984 = vadd.f32 %v1871, %v1983
    %v1985 = vpop.f32.mrf.mxu0
    %v1986 = vadd.f32 %v1873, %v1985
    %v1987 = vpop.f32.mrf.mxu0
    %v1988 = vadd.f32 %v1875, %v1987
    %v1989 = vpop.f32.mrf.mxu0
    %v1990 = vadd.f32 %v1877, %v1989
    %1991 = vmatprep.mubr.bf16.mxu0 %v223
    %1992 = vmatmul.mubr.bf16.gmra.mxu0 %v222
    %v1993 = vpop.f32.mrf.mxu0
    %v1994 = vadd.f32 %v1881, %v1993
    %v1995 = vpop.f32.mrf.mxu0
    %v1996 = vadd.f32 %v1883, %v1995
    %v1997 = vpop.f32.mrf.mxu0
    %v1998 = vadd.f32 %v1885, %v1997
    %v1999 = vpop.f32.mrf.mxu0
    %v2000 = vadd.f32 %v1887, %v1999
    %2001 = vmatprep.mubr.bf16.mxu0 %v231
    %2002 = vmatmul.mubr.bf16.gmra.mxu0 %v230
    %v2003 = vpop.f32.mrf.mxu0
    %v2004 = vadd.f32 %v1891, %v2003
    %v2005 = vpop.f32.mrf.mxu0
    %v2006 = vadd.f32 %v1893, %v2005
    %v2007 = vpop.f32.mrf.mxu0
    %v2008 = vadd.f32 %v1895, %v2007
    %v2009 = vpop.f32.mrf.mxu0
    %v2010 = vadd.f32 %v1897, %v2009
    %2011 = vmatprep.mubr.bf16.mxu0 %v239
    %2012 = vmatmul.mubr.bf16.gmra.mxu0 %v238
    %v2013 = vpop.f32.mrf.mxu0
    %v2014 = vadd.f32 %v1901, %v2013
    %v2015 = vpop.f32.mrf.mxu0
    %v2016 = vadd.f32 %v1903, %v2015
    %v2017 = vpop.f32.mrf.mxu0
    %v2018 = vadd.f32 %v1905, %v2017
    %v2019 = vpop.f32.mrf.mxu0
    %v2020 = vadd.f32 %v1907, %v2019
    %2021 = vmatprep.mubr.bf16.mxu0 %v247
    %2022 = vmatmul.mubr.bf16.gmra.mxu0 %v246
    %v2023 = vpop.f32.mrf.mxu0
    %v2024 = vadd.f32 %v1911, %v2023
    %v2025 = vpop.f32.mrf.mxu0
    %v2026 = vadd.f32 %v1913, %v2025
    %v2027 = vpop.f32.mrf.mxu0
    %v2028 = vadd.f32 %v1915, %v2027
    %v2029 = vpop.f32.mrf.mxu0
    %v2030 = vadd.f32 %v1917, %v2029
    %2031 = vmatprep.mubr.bf16.mxu0 %v255
    %2032 = vmatmul.mubr.bf16.gmra.mxu0 %v254
    %v2033 = vpop.f32.mrf.mxu0
    %v2034 = vadd.f32 %v1921, %v2033
    %v2035 = vpop.f32.mrf.mxu0
    %v2036 = vadd.f32 %v1923, %v2035
    %v2037 = vpop.f32.mrf.mxu0
    %v2038 = vadd.f32 %v1925, %v2037
    %v2039 = vpop.f32.mrf.mxu0
    %v2040 = vadd.f32 %v1927, %v2039
    %2041 = vmatprep.mubr.bf16.mxu0 %v263
    %2042 = vmatmul.mubr.bf16.gmra.mxu0 %v262
    %v2043 = vpop.f32.mrf.mxu0
    %v2044 = vadd.f32 %v1931, %v2043
    %v2045 = vpop.f32.mrf.mxu0
    %v2046 = vadd.f32 %v1933, %v2045
    %v2047 = vpop.f32.mrf.mxu0
    %v2048 = vadd.f32 %v1935, %v2047
    %v2049 = vpop.f32.mrf.mxu0
    %v2050 = vadd.f32 %v1937, %v2049
    %2051 = vdwg.mxu0
    %2052 = vmatprep.subr.bf16.mxu0 %v1471
    %2053 = vmatpush1.bf16.msra.mxu0 %v1470
    %2054 = vmatprep.subr.bf16.mxu0 %v1467
    %2055 = vmatpush1.bf16.msra.mxu0 %v1466
    %2056 = vmatprep.subr.bf16.mxu0 %v1463
    %2057 = vmatpush1.bf16.msra.mxu0 %v1462
    %2058 = vmatprep.subr.bf16.mxu0 %v1459
    %2059 = vmatpush1.bf16.msra.mxu0 %v1458
    %2060 = vmatprep.subr.bf16.mxu0 %v1455
    %2061 = vmatpush1.bf16.msra.mxu0 %v1454
    %2062 = vmatprep.subr.bf16.mxu0 %v1451
    %2063 = vmatpush1.bf16.msra.mxu0 %v1450
    %2064 = vmatprep.subr.bf16.mxu0 %v1447
    %2065 = vmatpush1.bf16.msra.mxu0 %v1446
    %2066 = vmatprep.subr.bf16.mxu0 %v1443
    %2067 = vmatpush1.bf16.msra.mxu0 %v1442
    %2068 = vmatprep.subr.bf16.mxu0 %v1503
    %2069 = vmatpush2.bf16.msra.mxu0 %v1502
    %2070 = vmatprep.subr.bf16.mxu0 %v1499
    %2071 = vmatpush2.bf16.msra.mxu0 %v1498
    %2072 = vmatprep.subr.bf16.mxu0 %v1495
    %2073 = vmatpush2.bf16.msra.mxu0 %v1494
    %2074 = vmatprep.subr.bf16.mxu0 %v1491
    %2075 = vmatpush2.bf16.msra.mxu0 %v1490
    %2076 = vmatprep.subr.bf16.mxu0 %v1487
    %2077 = vmatpush2.bf16.msra.mxu0 %v1486
    %2078 = vmatprep.subr.bf16.mxu0 %v1483
    %2079 = vmatpush2.bf16.msra.mxu0 %v1482
    %2080 = vmatprep.subr.bf16.mxu0 %v1479
    %2081 = vmatpush2.bf16.msra.mxu0 %v1478
    %2082 = vmatprep.subr.bf16.mxu0 %v1475
    %2083 = vmatpush2.bf16.msra.mxu0 %v1474
    %2084 = vmatprep.mubr.bf16.mxu0 %v209
    %2085 = vmatmul.mubr.bf16.gmra.mxu0 %v208
    %v2086 = vpop.f32.mrf.mxu0
    %v2087 = vadd.f32 %v1974, %v2086
    %v2088 = vpop.f32.mrf.mxu0
    %v2089 = vadd.f32 %v1976, %v2088
    %v2090 = vpop.f32.mrf.mxu0
    %v2091 = vadd.f32 %v1978, %v2090
    %v2092 = vpop.f32.mrf.mxu0
    %v2093 = vadd.f32 %v1980, %v2092
    %2094 = vmatprep.mubr.bf16.mxu0 %v217
    %2095 = vmatmul.mubr.bf16.gmra.mxu0 %v216
    %v2096 = vpop.f32.mrf.mxu0
    %v2097 = vadd.f32 %v1984, %v2096
    %v2098 = vpop.f32.mrf.mxu0
    %v2099 = vadd.f32 %v1986, %v2098
    %v2100 = vpop.f32.mrf.mxu0
    %v2101 = vadd.f32 %v1988, %v2100
    %v2102 = vpop.f32.mrf.mxu0
    %v2103 = vadd.f32 %v1990, %v2102
    %2104 = vmatprep.mubr.bf16.mxu0 %v225
    %2105 = vmatmul.mubr.bf16.gmra.mxu0 %v224
    %v2106 = vpop.f32.mrf.mxu0
    %v2107 = vadd.f32 %v1994, %v2106
    %v2108 = vpop.f32.mrf.mxu0
    %v2109 = vadd.f32 %v1996, %v2108
    %v2110 = vpop.f32.mrf.mxu0
    %v2111 = vadd.f32 %v1998, %v2110
    %v2112 = vpop.f32.mrf.mxu0
    %v2113 = vadd.f32 %v2000, %v2112
    %2114 = vmatprep.mubr.bf16.mxu0 %v233
    %2115 = vmatmul.mubr.bf16.gmra.mxu0 %v232
    %v2116 = vpop.f32.mrf.mxu0
    %v2117 = vadd.f32 %v2004, %v2116
    %v2118 = vpop.f32.mrf.mxu0
    %v2119 = vadd.f32 %v2006, %v2118
    %v2120 = vpop.f32.mrf.mxu0
    %v2121 = vadd.f32 %v2008, %v2120
    %v2122 = vpop.f32.mrf.mxu0
    %v2123 = vadd.f32 %v2010, %v2122
    %2124 = vmatprep.mubr.bf16.mxu0 %v241
    %2125 = vmatmul.mubr.bf16.gmra.mxu0 %v240
    %v2126 = vpop.f32.mrf.mxu0
    %v2127 = vadd.f32 %v2014, %v2126
    %v2128 = vpop.f32.mrf.mxu0
    %v2129 = vadd.f32 %v2016, %v2128
    %v2130 = vpop.f32.mrf.mxu0
    %v2131 = vadd.f32 %v2018, %v2130
    %v2132 = vpop.f32.mrf.mxu0
    %v2133 = vadd.f32 %v2020, %v2132
    %2134 = vmatprep.mubr.bf16.mxu0 %v249
    %2135 = vmatmul.mubr.bf16.gmra.mxu0 %v248
    %v2136 = vpop.f32.mrf.mxu0
    %v2137 = vadd.f32 %v2024, %v2136
    %v2138 = vpop.f32.mrf.mxu0
    %v2139 = vadd.f32 %v2026, %v2138
    %v2140 = vpop.f32.mrf.mxu0
    %v2141 = vadd.f32 %v2028, %v2140
    %v2142 = vpop.f32.mrf.mxu0
    %v2143 = vadd.f32 %v2030, %v2142
    %2144 = vmatprep.mubr.bf16.mxu0 %v257
    %2145 = vmatmul.mubr.bf16.gmra.mxu0 %v256
    %v2146 = vpop.f32.mrf.mxu0
    %v2147 = vadd.f32 %v2034, %v2146
    %v2148 = vpop.f32.mrf.mxu0
    %v2149 = vadd.f32 %v2036, %v2148
    %v2150 = vpop.f32.mrf.mxu0
    %v2151 = vadd.f32 %v2038, %v2150
    %v2152 = vpop.f32.mrf.mxu0
    %v2153 = vadd.f32 %v2040, %v2152
    %2154 = vmatprep.mubr.bf16.mxu0 %v265
    %2155 = vmatmul.mubr.bf16.gmra.mxu0 %v264
    %v2156 = vpop.f32.mrf.mxu0
    %v2157 = vadd.f32 %v2044, %v2156
    %v2158 = vpop.f32.mrf.mxu0
    %v2159 = vadd.f32 %v2046, %v2158
    %v2160 = vpop.f32.mrf.mxu0
    %v2161 = vadd.f32 %v2048, %v2160
    %v2162 = vpop.f32.mrf.mxu0
    %v2163 = vadd.f32 %v2050, %v2162
    %2164 = vdwg.mxu0
    %2165 = vmatprep.subr.bf16.mxu0 %v1535
    %2166 = vmatpush1.bf16.msra.mxu0 %v1534
    %2167 = vmatprep.subr.bf16.mxu0 %v1531
    %2168 = vmatpush1.bf16.msra.mxu0 %v1530
    %2169 = vmatprep.subr.bf16.mxu0 %v1527
    %2170 = vmatpush1.bf16.msra.mxu0 %v1526
    %2171 = vmatprep.subr.bf16.mxu0 %v1523
    %2172 = vmatpush1.bf16.msra.mxu0 %v1522
    %2173 = vmatprep.subr.bf16.mxu0 %v1519
    %2174 = vmatpush1.bf16.msra.mxu0 %v1518
    %2175 = vmatprep.subr.bf16.mxu0 %v1515
    %2176 = vmatpush1.bf16.msra.mxu0 %v1514
    %2177 = vmatprep.subr.bf16.mxu0 %v1511
    %2178 = vmatpush1.bf16.msra.mxu0 %v1510
    %2179 = vmatprep.subr.bf16.mxu0 %v1507
    %2180 = vmatpush1.bf16.msra.mxu0 %v1506
    %2181 = vmatprep.subr.bf16.mxu0 %v1567
    %2182 = vmatpush2.bf16.msra.mxu0 %v1566
    %2183 = vmatprep.subr.bf16.mxu0 %v1563
    %2184 = vmatpush2.bf16.msra.mxu0 %v1562
    %2185 = vmatprep.subr.bf16.mxu0 %v1559
    %2186 = vmatpush2.bf16.msra.mxu0 %v1558
    %2187 = vmatprep.subr.bf16.mxu0 %v1555
    %2188 = vmatpush2.bf16.msra.mxu0 %v1554
    %2189 = vmatprep.subr.bf16.mxu0 %v1551
    %2190 = vmatpush2.bf16.msra.mxu0 %v1550
    %2191 = vmatprep.subr.bf16.mxu0 %v1547
    %2192 = vmatpush2.bf16.msra.mxu0 %v1546
    %2193 = vmatprep.subr.bf16.mxu0 %v1543
    %2194 = vmatpush2.bf16.msra.mxu0 %v1542
    %2195 = vmatprep.subr.bf16.mxu0 %v1539
    %2196 = vmatpush2.bf16.msra.mxu0 %v1538
    %2197 = vmatprep.mubr.bf16.mxu0 %v211
    %2198 = vmatmul.mubr.bf16.gmra.mxu0 %v210
    %v2199 = vpop.f32.mrf.mxu0
    %v2200 = vadd.f32 %v2087, %v2199
    %v2201 = vpop.f32.mrf.mxu0
    %v2202 = vadd.f32 %v2089, %v2201
    %v2203 = vpop.f32.mrf.mxu0
    %v2204 = vadd.f32 %v2091, %v2203
    %v2205 = vpop.f32.mrf.mxu0
    %v2206 = vadd.f32 %v2093, %v2205
    %2207 = vmatprep.mubr.bf16.mxu0 %v219
    %2208 = vmatmul.mubr.bf16.gmra.mxu0 %v218
    %v2209 = vpop.f32.mrf.mxu0
    %v2210 = vadd.f32 %v2097, %v2209
    %v2211 = vpop.f32.mrf.mxu0
    %v2212 = vadd.f32 %v2099, %v2211
    %v2213 = vpop.f32.mrf.mxu0
    %v2214 = vadd.f32 %v2101, %v2213
    %v2215 = vpop.f32.mrf.mxu0
    %v2216 = vadd.f32 %v2103, %v2215
    %2217 = vmatprep.mubr.bf16.mxu0 %v227
    %2218 = vmatmul.mubr.bf16.gmra.mxu0 %v226
    %v2219 = vpop.f32.mrf.mxu0
    %v2220 = vadd.f32 %v2107, %v2219
    %v2221 = vpop.f32.mrf.mxu0
    %v2222 = vadd.f32 %v2109, %v2221
    %v2223 = vpop.f32.mrf.mxu0
    %v2224 = vadd.f32 %v2111, %v2223
    %v2225 = vpop.f32.mrf.mxu0
    %v2226 = vadd.f32 %v2113, %v2225
    %2227 = vmatprep.mubr.bf16.mxu0 %v235
    %2228 = vmatmul.mubr.bf16.gmra.mxu0 %v234
    %v2229 = vpop.f32.mrf.mxu0
    %v2230 = vadd.f32 %v2117, %v2229
    %v2231 = vpop.f32.mrf.mxu0
    %v2232 = vadd.f32 %v2119, %v2231
    %v2233 = vpop.f32.mrf.mxu0
    %v2234 = vadd.f32 %v2121, %v2233
    %v2235 = vpop.f32.mrf.mxu0
    %v2236 = vadd.f32 %v2123, %v2235
    %2237 = vmatprep.mubr.bf16.mxu0 %v243
    %2238 = vmatmul.mubr.bf16.gmra.mxu0 %v242
    %v2239 = vpop.f32.mrf.mxu0
    %v2240 = vadd.f32 %v2127, %v2239
    %v2241 = vpop.f32.mrf.mxu0
    %v2242 = vadd.f32 %v2129, %v2241
    %v2243 = vpop.f32.mrf.mxu0
    %v2244 = vadd.f32 %v2131, %v2243
    %v2245 = vpop.f32.mrf.mxu0
    %v2246 = vadd.f32 %v2133, %v2245
    %2247 = vmatprep.mubr.bf16.mxu0 %v251
    %2248 = vmatmul.mubr.bf16.gmra.mxu0 %v250
    %v2249 = vpop.f32.mrf.mxu0
    %v2250 = vadd.f32 %v2137, %v2249
    %v2251 = vpop.f32.mrf.mxu0
    %v2252 = vadd.f32 %v2139, %v2251
    %v2253 = vpop.f32.mrf.mxu0
    %v2254 = vadd.f32 %v2141, %v2253
    %v2255 = vpop.f32.mrf.mxu0
    %v2256 = vadd.f32 %v2143, %v2255
    %2257 = vmatprep.mubr.bf16.mxu0 %v259
    %2258 = vmatmul.mubr.bf16.gmra.mxu0 %v258
    %v2259 = vpop.f32.mrf.mxu0
    %v2260 = vadd.f32 %v2147, %v2259
    %v2261 = vpop.f32.mrf.mxu0
    %v2262 = vadd.f32 %v2149, %v2261
    %v2263 = vpop.f32.mrf.mxu0
    %v2264 = vadd.f32 %v2151, %v2263
    %v2265 = vpop.f32.mrf.mxu0
    %v2266 = vadd.f32 %v2153, %v2265
    %2267 = vmatprep.mubr.bf16.mxu0 %v267
    %2268 = vmatmul.mubr.bf16.gmra.mxu0 %v266
    %v2269 = vpop.f32.mrf.mxu0
    %v2270 = vadd.f32 %v2157, %v2269
    %v2271 = vpop.f32.mrf.mxu0
    %v2272 = vadd.f32 %v2159, %v2271
    %v2273 = vpop.f32.mrf.mxu0
    %v2274 = vadd.f32 %v2161, %v2273
    %v2275 = vpop.f32.mrf.mxu0
    %v2276 = vadd.f32 %v2163, %v2275
    %2277 = vdwg.mxu0
    %2278 = vmatprep.subr.bf16.mxu0 %v1345
    %2279 = vmatpush1.bf16.msra.mxu0 %v1344
    %2280 = vmatprep.subr.bf16.mxu0 %v1341
    %2281 = vmatpush1.bf16.msra.mxu0 %v1340
    %2282 = vmatprep.subr.bf16.mxu0 %v1337
    %2283 = vmatpush1.bf16.msra.mxu0 %v1336
    %2284 = vmatprep.subr.bf16.mxu0 %v1333
    %2285 = vmatpush1.bf16.msra.mxu0 %v1332
    %2286 = vmatprep.subr.bf16.mxu0 %v1329
    %2287 = vmatpush1.bf16.msra.mxu0 %v1328
    %2288 = vmatprep.subr.bf16.mxu0 %v1325
    %2289 = vmatpush1.bf16.msra.mxu0 %v1324
    %2290 = vmatprep.subr.bf16.mxu0 %v1321
    %2291 = vmatpush1.bf16.msra.mxu0 %v1320
    %2292 = vmatprep.subr.bf16.mxu0 %v1317
    %2293 = vmatpush1.bf16.msra.mxu0 %v1316
    %2294 = vmatprep.subr.bf16.mxu0 %v1377
    %2295 = vmatpush2.bf16.msra.mxu0 %v1376
    %2296 = vmatprep.subr.bf16.mxu0 %v1373
    %2297 = vmatpush2.bf16.msra.mxu0 %v1372
    %2298 = vmatprep.subr.bf16.mxu0 %v1369
    %2299 = vmatpush2.bf16.msra.mxu0 %v1368
    %2300 = vmatprep.subr.bf16.mxu0 %v1365
    %2301 = vmatpush2.bf16.msra.mxu0 %v1364
    %2302 = vmatprep.subr.bf16.mxu0 %v1361
    %2303 = vmatpush2.bf16.msra.mxu0 %v1360
    %2304 = vmatprep.subr.bf16.mxu0 %v1357
    %2305 = vmatpush2.bf16.msra.mxu0 %v1356
    %2306 = vmatprep.subr.bf16.mxu0 %v1353
    %2307 = vmatpush2.bf16.msra.mxu0 %v1352
    %2308 = vmatprep.subr.bf16.mxu0 %v1349
    %2309 = vmatpush2.bf16.msra.mxu0 %v1348
    %2310 = vmatprep.mubr.bf16.mxu0 %v205
    %2311 = vmatmul.mubr.bf16.gmra.mxu0 %v204
    %v2312 = vpop.f32.mrf.mxu0
    %v2313 = vadd.f32 %v537, %v2312
    %v2314 = vpop.f32.mrf.mxu0
    %v2315 = vadd.f32 %v541, %v2314
    %v2316 = vpop.f32.mrf.mxu0
    %v2317 = vadd.f32 %v537, %v2316
    %v2318 = vpop.f32.mrf.mxu0
    %v2319 = vadd.f32 %v541, %v2318
    %2320 = vmatprep.mubr.bf16.mxu0 %v213
    %2321 = vmatmul.mubr.bf16.gmra.mxu0 %v212
    %v2322 = vpop.f32.mrf.mxu0
    %v2323 = vadd.f32 %v537, %v2322
    %v2324 = vpop.f32.mrf.mxu0
    %v2325 = vadd.f32 %v541, %v2324
    %v2326 = vpop.f32.mrf.mxu0
    %v2327 = vadd.f32 %v537, %v2326
    %v2328 = vpop.f32.mrf.mxu0
    %v2329 = vadd.f32 %v541, %v2328
    %2330 = vmatprep.mubr.bf16.mxu0 %v221
    %2331 = vmatmul.mubr.bf16.gmra.mxu0 %v220
    %v2332 = vpop.f32.mrf.mxu0
    %v2333 = vadd.f32 %v537, %v2332
    %v2334 = vpop.f32.mrf.mxu0
    %v2335 = vadd.f32 %v541, %v2334
    %v2336 = vpop.f32.mrf.mxu0
    %v2337 = vadd.f32 %v537, %v2336
    %v2338 = vpop.f32.mrf.mxu0
    %v2339 = vadd.f32 %v541, %v2338
    %2340 = vmatprep.mubr.bf16.mxu0 %v229
    %2341 = vmatmul.mubr.bf16.gmra.mxu0 %v228
    %v2342 = vpop.f32.mrf.mxu0
    %v2343 = vadd.f32 %v537, %v2342
    %v2344 = vpop.f32.mrf.mxu0
    %v2345 = vadd.f32 %v541, %v2344
    %v2346 = vpop.f32.mrf.mxu0
    %v2347 = vadd.f32 %v537, %v2346
    %v2348 = vpop.f32.mrf.mxu0
    %v2349 = vadd.f32 %v541, %v2348
    %2350 = vmatprep.mubr.bf16.mxu0 %v237
    %2351 = vmatmul.mubr.bf16.gmra.mxu0 %v236
    %v2352 = vpop.f32.mrf.mxu0
    %v2353 = vadd.f32 %v537, %v2352
    %v2354 = vpop.f32.mrf.mxu0
    %v2355 = vadd.f32 %v541, %v2354
    %v2356 = vpop.f32.mrf.mxu0
    %v2357 = vadd.f32 %v537, %v2356
    %v2358 = vpop.f32.mrf.mxu0
    %v2359 = vadd.f32 %v541, %v2358
    %2360 = vmatprep.mubr.bf16.mxu0 %v245
    %2361 = vmatmul.mubr.bf16.gmra.mxu0 %v244
    %v2362 = vpop.f32.mrf.mxu0
    %v2363 = vadd.f32 %v537, %v2362
    %v2364 = vpop.f32.mrf.mxu0
    %v2365 = vadd.f32 %v541, %v2364
    %v2366 = vpop.f32.mrf.mxu0
    %v2367 = vadd.f32 %v537, %v2366
    %v2368 = vpop.f32.mrf.mxu0
    %v2369 = vadd.f32 %v541, %v2368
    %2370 = vmatprep.mubr.bf16.mxu0 %v253
    %2371 = vmatmul.mubr.bf16.gmra.mxu0 %v252
    %v2372 = vpop.f32.mrf.mxu0
    %v2373 = vadd.f32 %v537, %v2372
    %v2374 = vpop.f32.mrf.mxu0
    %v2375 = vadd.f32 %v541, %v2374
    %v2376 = vpop.f32.mrf.mxu0
    %v2377 = vadd.f32 %v537, %v2376
    %v2378 = vpop.f32.mrf.mxu0
    %v2379 = vadd.f32 %v541, %v2378
    %2380 = vmatprep.mubr.bf16.mxu0 %v261
    %2381 = vmatmul.mubr.bf16.gmra.mxu0 %v260
    %v2382 = vpop.f32.mrf.mxu0
    %v2383 = vadd.f32 %v537, %v2382
    %v2384 = vpop.f32.mrf.mxu0
    %v2385 = vadd.f32 %v541, %v2384
    %v2386 = vpop.f32.mrf.mxu0
    %v2387 = vadd.f32 %v537, %v2386
    %v2388 = vpop.f32.mrf.mxu0
    %v2389 = vadd.f32 %v541, %v2388
    %2390 = vdwg.mxu0
    %2391 = vmatprep.subr.bf16.mxu0 %v1409
    %2392 = vmatpush1.bf16.msra.mxu0 %v1408
    %2393 = vmatprep.subr.bf16.mxu0 %v1405
    %2394 = vmatpush1.bf16.msra.mxu0 %v1404
    %2395 = vmatprep.subr.bf16.mxu0 %v1401
    %2396 = vmatpush1.bf16.msra.mxu0 %v1400
    %2397 = vmatprep.subr.bf16.mxu0 %v1397
    %2398 = vmatpush1.bf16.msra.mxu0 %v1396
    %2399 = vmatprep.subr.bf16.mxu0 %v1393
    %2400 = vmatpush1.bf16.msra.mxu0 %v1392
    %2401 = vmatprep.subr.bf16.mxu0 %v1389
    %2402 = vmatpush1.bf16.msra.mxu0 %v1388
    %2403 = vmatprep.subr.bf16.mxu0 %v1385
    %2404 = vmatpush1.bf16.msra.mxu0 %v1384
    %2405 = vmatprep.subr.bf16.mxu0 %v1381
    %2406 = vmatpush1.bf16.msra.mxu0 %v1380
    %2407 = vmatprep.subr.bf16.mxu0 %v1441
    %2408 = vmatpush2.bf16.msra.mxu0 %v1440
    %2409 = vmatprep.subr.bf16.mxu0 %v1437
    %2410 = vmatpush2.bf16.msra.mxu0 %v1436
    %2411 = vmatprep.subr.bf16.mxu0 %v1433
    %2412 = vmatpush2.bf16.msra.mxu0 %v1432
    %2413 = vmatprep.subr.bf16.mxu0 %v1429
    %2414 = vmatpush2.bf16.msra.mxu0 %v1428
    %2415 = vmatprep.subr.bf16.mxu0 %v1425
    %2416 = vmatpush2.bf16.msra.mxu0 %v1424
    %2417 = vmatprep.subr.bf16.mxu0 %v1421
    %2418 = vmatpush2.bf16.msra.mxu0 %v1420
    %2419 = vmatprep.subr.bf16.mxu0 %v1417
    %2420 = vmatpush2.bf16.msra.mxu0 %v1416
    %2421 = vmatprep.subr.bf16.mxu0 %v1413
    %2422 = vmatpush2.bf16.msra.mxu0 %v1412
    %2423 = vmatprep.mubr.bf16.mxu0 %v207
    %2424 = vmatmul.mubr.bf16.gmra.mxu0 %v206
    %v2425 = vpop.f32.mrf.mxu0
    %v2426 = vadd.f32 %v2313, %v2425
    %v2427 = vpop.f32.mrf.mxu0
    %v2428 = vadd.f32 %v2315, %v2427
    %v2429 = vpop.f32.mrf.mxu0
    %v2430 = vadd.f32 %v2317, %v2429
    %v2431 = vpop.f32.mrf.mxu0
    %v2432 = vadd.f32 %v2319, %v2431
    %2433 = vmatprep.mubr.bf16.mxu0 %v215
    %2434 = vmatmul.mubr.bf16.gmra.mxu0 %v214
    %v2435 = vpop.f32.mrf.mxu0
    %v2436 = vadd.f32 %v2323, %v2435
    %v2437 = vpop.f32.mrf.mxu0
    %v2438 = vadd.f32 %v2325, %v2437
    %v2439 = vpop.f32.mrf.mxu0
    %v2440 = vadd.f32 %v2327, %v2439
    %v2441 = vpop.f32.mrf.mxu0
    %v2442 = vadd.f32 %v2329, %v2441
    %2443 = vmatprep.mubr.bf16.mxu0 %v223
    %2444 = vmatmul.mubr.bf16.gmra.mxu0 %v222
    %v2445 = vpop.f32.mrf.mxu0
    %v2446 = vadd.f32 %v2333, %v2445
    %v2447 = vpop.f32.mrf.mxu0
    %v2448 = vadd.f32 %v2335, %v2447
    %v2449 = vpop.f32.mrf.mxu0
    %v2450 = vadd.f32 %v2337, %v2449
    %v2451 = vpop.f32.mrf.mxu0
    %v2452 = vadd.f32 %v2339, %v2451
    %2453 = vmatprep.mubr.bf16.mxu0 %v231
    %2454 = vmatmul.mubr.bf16.gmra.mxu0 %v230
    %v2455 = vpop.f32.mrf.mxu0
    %v2456 = vadd.f32 %v2343, %v2455
    %v2457 = vpop.f32.mrf.mxu0
    %v2458 = vadd.f32 %v2345, %v2457
    %v2459 = vpop.f32.mrf.mxu0
    %v2460 = vadd.f32 %v2347, %v2459
    %v2461 = vpop.f32.mrf.mxu0
    %v2462 = vadd.f32 %v2349, %v2461
    %2463 = vmatprep.mubr.bf16.mxu0 %v239
    %2464 = vmatmul.mubr.bf16.gmra.mxu0 %v238
    %v2465 = vpop.f32.mrf.mxu0
    %v2466 = vadd.f32 %v2353, %v2465
    %v2467 = vpop.f32.mrf.mxu0
    %v2468 = vadd.f32 %v2355, %v2467
    %v2469 = vpop.f32.mrf.mxu0
    %v2470 = vadd.f32 %v2357, %v2469
    %v2471 = vpop.f32.mrf.mxu0
    %v2472 = vadd.f32 %v2359, %v2471
    %2473 = vmatprep.mubr.bf16.mxu0 %v247
    %2474 = vmatmul.mubr.bf16.gmra.mxu0 %v246
    %v2475 = vpop.f32.mrf.mxu0
    %v2476 = vadd.f32 %v2363, %v2475
    %v2477 = vpop.f32.mrf.mxu0
    %v2478 = vadd.f32 %v2365, %v2477
    %v2479 = vpop.f32.mrf.mxu0
    %v2480 = vadd.f32 %v2367, %v2479
    %v2481 = vpop.f32.mrf.mxu0
    %v2482 = vadd.f32 %v2369, %v2481
    %2483 = vmatprep.mubr.bf16.mxu0 %v255
    %2484 = vmatmul.mubr.bf16.gmra.mxu0 %v254
    %v2485 = vpop.f32.mrf.mxu0
    %v2486 = vadd.f32 %v2373, %v2485
    %v2487 = vpop.f32.mrf.mxu0
    %v2488 = vadd.f32 %v2375, %v2487
    %v2489 = vpop.f32.mrf.mxu0
    %v2490 = vadd.f32 %v2377, %v2489
    %v2491 = vpop.f32.mrf.mxu0
    %v2492 = vadd.f32 %v2379, %v2491
    %2493 = vmatprep.mubr.bf16.mxu0 %v263
    %2494 = vmatmul.mubr.bf16.gmra.mxu0 %v262
    %v2495 = vpop.f32.mrf.mxu0
    %v2496 = vadd.f32 %v2383, %v2495
    %v2497 = vpop.f32.mrf.mxu0
    %v2498 = vadd.f32 %v2385, %v2497
    %v2499 = vpop.f32.mrf.mxu0
    %v2500 = vadd.f32 %v2387, %v2499
    %v2501 = vpop.f32.mrf.mxu0
    %v2502 = vadd.f32 %v2389, %v2501
    %2503 = vdwg.mxu0
    %2504 = vmatprep.subr.bf16.mxu0 %v1473
    %2505 = vmatpush1.bf16.msra.mxu0 %v1472
    %2506 = vmatprep.subr.bf16.mxu0 %v1469
    %2507 = vmatpush1.bf16.msra.mxu0 %v1468
    %2508 = vmatprep.subr.bf16.mxu0 %v1465
    %2509 = vmatpush1.bf16.msra.mxu0 %v1464
    %2510 = vmatprep.subr.bf16.mxu0 %v1461
    %2511 = vmatpush1.bf16.msra.mxu0 %v1460
    %2512 = vmatprep.subr.bf16.mxu0 %v1457
    %2513 = vmatpush1.bf16.msra.mxu0 %v1456
    %2514 = vmatprep.subr.bf16.mxu0 %v1453
    %2515 = vmatpush1.bf16.msra.mxu0 %v1452
    %2516 = vmatprep.subr.bf16.mxu0 %v1449
    %2517 = vmatpush1.bf16.msra.mxu0 %v1448
    %2518 = vmatprep.subr.bf16.mxu0 %v1445
    %2519 = vmatpush1.bf16.msra.mxu0 %v1444
    %2520 = vmatprep.subr.bf16.mxu0 %v1505
    %2521 = vmatpush2.bf16.msra.mxu0 %v1504
    %2522 = vmatprep.subr.bf16.mxu0 %v1501
    %2523 = vmatpush2.bf16.msra.mxu0 %v1500
    %2524 = vmatprep.subr.bf16.mxu0 %v1497
    %2525 = vmatpush2.bf16.msra.mxu0 %v1496
    %2526 = vmatprep.subr.bf16.mxu0 %v1493
    %2527 = vmatpush2.bf16.msra.mxu0 %v1492
    %2528 = vmatprep.subr.bf16.mxu0 %v1489
    %2529 = vmatpush2.bf16.msra.mxu0 %v1488
    %2530 = vmatprep.subr.bf16.mxu0 %v1485
    %2531 = vmatpush2.bf16.msra.mxu0 %v1484
    %2532 = vmatprep.subr.bf16.mxu0 %v1481
    %2533 = vmatpush2.bf16.msra.mxu0 %v1480
    %2534 = vmatprep.subr.bf16.mxu0 %v1477
    %2535 = vmatpush2.bf16.msra.mxu0 %v1476
    %2536 = vmatprep.mubr.bf16.mxu0 %v209
    %2537 = vmatmul.mubr.bf16.gmra.mxu0 %v208
    %v2538 = vpop.f32.mrf.mxu0
    %v2539 = vadd.f32 %v2426, %v2538
    %v2540 = vpop.f32.mrf.mxu0
    %v2541 = vadd.f32 %v2428, %v2540
    %v2542 = vpop.f32.mrf.mxu0
    %v2543 = vadd.f32 %v2430, %v2542
    %v2544 = vpop.f32.mrf.mxu0
    %v2545 = vadd.f32 %v2432, %v2544
    %2546 = vmatprep.mubr.bf16.mxu0 %v217
    %2547 = vmatmul.mubr.bf16.gmra.mxu0 %v216
    %v2548 = vpop.f32.mrf.mxu0
    %v2549 = vadd.f32 %v2436, %v2548
    %v2550 = vpop.f32.mrf.mxu0
    %v2551 = vadd.f32 %v2438, %v2550
    %v2552 = vpop.f32.mrf.mxu0
    %v2553 = vadd.f32 %v2440, %v2552
    %v2554 = vpop.f32.mrf.mxu0
    %v2555 = vadd.f32 %v2442, %v2554
    %2556 = vmatprep.mubr.bf16.mxu0 %v225
    %2557 = vmatmul.mubr.bf16.gmra.mxu0 %v224
    %v2558 = vpop.f32.mrf.mxu0
    %v2559 = vadd.f32 %v2446, %v2558
    %v2560 = vpop.f32.mrf.mxu0
    %v2561 = vadd.f32 %v2448, %v2560
    %v2562 = vpop.f32.mrf.mxu0
    %v2563 = vadd.f32 %v2450, %v2562
    %v2564 = vpop.f32.mrf.mxu0
    %v2565 = vadd.f32 %v2452, %v2564
    %2566 = vmatprep.mubr.bf16.mxu0 %v233
    %2567 = vmatmul.mubr.bf16.gmra.mxu0 %v232
    %v2568 = vpop.f32.mrf.mxu0
    %v2569 = vadd.f32 %v2456, %v2568
    %v2570 = vpop.f32.mrf.mxu0
    %v2571 = vadd.f32 %v2458, %v2570
    %v2572 = vpop.f32.mrf.mxu0
    %v2573 = vadd.f32 %v2460, %v2572
    %v2574 = vpop.f32.mrf.mxu0
    %v2575 = vadd.f32 %v2462, %v2574
    %2576 = vmatprep.mubr.bf16.mxu0 %v241
    %2577 = vmatmul.mubr.bf16.gmra.mxu0 %v240
    %v2578 = vpop.f32.mrf.mxu0
    %v2579 = vadd.f32 %v2466, %v2578
    %v2580 = vpop.f32.mrf.mxu0
    %v2581 = vadd.f32 %v2468, %v2580
    %v2582 = vpop.f32.mrf.mxu0
    %v2583 = vadd.f32 %v2470, %v2582
    %v2584 = vpop.f32.mrf.mxu0
    %v2585 = vadd.f32 %v2472, %v2584
    %2586 = vmatprep.mubr.bf16.mxu0 %v249
    %2587 = vmatmul.mubr.bf16.gmra.mxu0 %v248
    %v2588 = vpop.f32.mrf.mxu0
    %v2589 = vadd.f32 %v2476, %v2588
    %v2590 = vpop.f32.mrf.mxu0
    %v2591 = vadd.f32 %v2478, %v2590
    %v2592 = vpop.f32.mrf.mxu0
    %v2593 = vadd.f32 %v2480, %v2592
    %v2594 = vpop.f32.mrf.mxu0
    %v2595 = vadd.f32 %v2482, %v2594
    %2596 = vmatprep.mubr.bf16.mxu0 %v257
    %2597 = vmatmul.mubr.bf16.gmra.mxu0 %v256
    %v2598 = vpop.f32.mrf.mxu0
    %v2599 = vadd.f32 %v2486, %v2598
    %v2600 = vpop.f32.mrf.mxu0
    %v2601 = vadd.f32 %v2488, %v2600
    %v2602 = vpop.f32.mrf.mxu0
    %v2603 = vadd.f32 %v2490, %v2602
    %v2604 = vpop.f32.mrf.mxu0
    %v2605 = vadd.f32 %v2492, %v2604
    %2606 = vmatprep.mubr.bf16.mxu0 %v265
    %2607 = vmatmul.mubr.bf16.gmra.mxu0 %v264
    %v2608 = vpop.f32.mrf.mxu0
    %v2609 = vadd.f32 %v2496, %v2608
    %v2610 = vpop.f32.mrf.mxu0
    %v2611 = vadd.f32 %v2498, %v2610
    %v2612 = vpop.f32.mrf.mxu0
    %v2613 = vadd.f32 %v2500, %v2612
    %v2614 = vpop.f32.mrf.mxu0
    %v2615 = vadd.f32 %v2502, %v2614
    %2616 = vdwg.mxu0
    %2617 = vmatprep.subr.bf16.mxu0 %v1537
    %2618 = vmatpush1.bf16.msra.mxu0 %v1536
    %2619 = vmatprep.subr.bf16.mxu0 %v1533
    %2620 = vmatpush1.bf16.msra.mxu0 %v1532
    %2621 = vmatprep.subr.bf16.mxu0 %v1529
    %2622 = vmatpush1.bf16.msra.mxu0 %v1528
    %2623 = vmatprep.subr.bf16.mxu0 %v1525
    %2624 = vmatpush1.bf16.msra.mxu0 %v1524
    %2625 = vmatprep.subr.bf16.mxu0 %v1521
    %2626 = vmatpush1.bf16.msra.mxu0 %v1520
    %2627 = vmatprep.subr.bf16.mxu0 %v1517
    %2628 = vmatpush1.bf16.msra.mxu0 %v1516
    %2629 = vmatprep.subr.bf16.mxu0 %v1513
    %2630 = vmatpush1.bf16.msra.mxu0 %v1512
    %2631 = vmatprep.subr.bf16.mxu0 %v1509
    %2632 = vmatpush1.bf16.msra.mxu0 %v1508
    %2633 = vmatprep.subr.bf16.mxu0 %v1569
    %2634 = vmatpush2.bf16.msra.mxu0 %v1568
    %2635 = vmatprep.subr.bf16.mxu0 %v1565
    %2636 = vmatpush2.bf16.msra.mxu0 %v1564
    %2637 = vmatprep.subr.bf16.mxu0 %v1561
    %2638 = vmatpush2.bf16.msra.mxu0 %v1560
    %2639 = vmatprep.subr.bf16.mxu0 %v1557
    %2640 = vmatpush2.bf16.msra.mxu0 %v1556
    %2641 = vmatprep.subr.bf16.mxu0 %v1553
    %2642 = vmatpush2.bf16.msra.mxu0 %v1552
    %2643 = vmatprep.subr.bf16.mxu0 %v1549
    %2644 = vmatpush2.bf16.msra.mxu0 %v1548
    %2645 = vmatprep.subr.bf16.mxu0 %v1545
    %2646 = vmatpush2.bf16.msra.mxu0 %v1544
    %2647 = vmatprep.subr.bf16.mxu0 %v1541
    %2648 = vmatpush2.bf16.msra.mxu0 %v1540
    %2649 = vmatprep.mubr.bf16.mxu0 %v211
    %2650 = vmatmul.mubr.bf16.gmra.mxu0 %v210
    %v2651 = vpop.f32.mrf.mxu0
    %v2652 = vadd.f32 %v2539, %v2651
    %v2653 = vpop.f32.mrf.mxu0
    %v2654 = vadd.f32 %v2541, %v2653
    %v2655 = vpop.f32.mrf.mxu0
    %v2656 = vadd.f32 %v2543, %v2655
    %v2657 = vpop.f32.mrf.mxu0
    %v2658 = vadd.f32 %v2545, %v2657
    %2659 = vmatprep.mubr.bf16.mxu0 %v219
    %2660 = vmatmul.mubr.bf16.gmra.mxu0 %v218
    %v2661 = vpop.f32.mrf.mxu0
    %v2662 = vadd.f32 %v2549, %v2661
    %v2663 = vpop.f32.mrf.mxu0
    %v2664 = vadd.f32 %v2551, %v2663
    %v2665 = vpop.f32.mrf.mxu0
    %v2666 = vadd.f32 %v2553, %v2665
    %v2667 = vpop.f32.mrf.mxu0
    %v2668 = vadd.f32 %v2555, %v2667
    %2669 = vmatprep.mubr.bf16.mxu0 %v227
    %2670 = vmatmul.mubr.bf16.gmra.mxu0 %v226
    %v2671 = vpop.f32.mrf.mxu0
    %v2672 = vadd.f32 %v2559, %v2671
    %v2673 = vpop.f32.mrf.mxu0
    %v2674 = vadd.f32 %v2561, %v2673
    %v2675 = vpop.f32.mrf.mxu0
    %v2676 = vadd.f32 %v2563, %v2675
    %v2677 = vpop.f32.mrf.mxu0
    %v2678 = vadd.f32 %v2565, %v2677
    %2679 = vmatprep.mubr.bf16.mxu0 %v235
    %2680 = vmatmul.mubr.bf16.gmra.mxu0 %v234
    %v2681 = vpop.f32.mrf.mxu0
    %v2682 = vadd.f32 %v2569, %v2681
    %v2683 = vpop.f32.mrf.mxu0
    %v2684 = vadd.f32 %v2571, %v2683
    %v2685 = vpop.f32.mrf.mxu0
    %v2686 = vadd.f32 %v2573, %v2685
    %v2687 = vpop.f32.mrf.mxu0
    %v2688 = vadd.f32 %v2575, %v2687
    %2689 = vmatprep.mubr.bf16.mxu0 %v243
    %2690 = vmatmul.mubr.bf16.gmra.mxu0 %v242
    %v2691 = vpop.f32.mrf.mxu0
    %v2692 = vadd.f32 %v2579, %v2691
    %v2693 = vpop.f32.mrf.mxu0
    %v2694 = vadd.f32 %v2581, %v2693
    %v2695 = vpop.f32.mrf.mxu0
    %v2696 = vadd.f32 %v2583, %v2695
    %v2697 = vpop.f32.mrf.mxu0
    %v2698 = vadd.f32 %v2585, %v2697
    %2699 = vmatprep.mubr.bf16.mxu0 %v251
    %2700 = vmatmul.mubr.bf16.gmra.mxu0 %v250
    %v2701 = vpop.f32.mrf.mxu0
    %v2702 = vadd.f32 %v2589, %v2701
    %v2703 = vpop.f32.mrf.mxu0
    %v2704 = vadd.f32 %v2591, %v2703
    %v2705 = vpop.f32.mrf.mxu0
    %v2706 = vadd.f32 %v2593, %v2705
    %v2707 = vpop.f32.mrf.mxu0
    %v2708 = vadd.f32 %v2595, %v2707
    %2709 = vmatprep.mubr.bf16.mxu0 %v259
    %2710 = vmatmul.mubr.bf16.gmra.mxu0 %v258
    %v2711 = vpop.f32.mrf.mxu0
    %v2712 = vadd.f32 %v2599, %v2711
    %v2713 = vpop.f32.mrf.mxu0
    %v2714 = vadd.f32 %v2601, %v2713
    %v2715 = vpop.f32.mrf.mxu0
    %v2716 = vadd.f32 %v2603, %v2715
    %v2717 = vpop.f32.mrf.mxu0
    %v2718 = vadd.f32 %v2605, %v2717
    %2719 = vmatprep.mubr.bf16.mxu0 %v267
    %2720 = vmatmul.mubr.bf16.gmra.mxu0 %v266
    %v2721 = vpop.f32.mrf.mxu0
    %v2722 = vadd.f32 %v2609, %v2721
    %v2723 = vpop.f32.mrf.mxu0
    %v2724 = vadd.f32 %v2611, %v2723
    %v2725 = vpop.f32.mrf.mxu0
    %v2726 = vadd.f32 %v2613, %v2725
    %v2727 = vpop.f32.mrf.mxu0
    %v2728 = vadd.f32 %v2615, %v2727
    %2729 = vdwg.mxu0
    %v2730 = vmax.f32 %v2200, 0.0
    %v2731 = vmax.f32 %v2202, 0.0
    %v2732 = vmax.f32 %v2652, 0.0
    %v2733 = vmax.f32 %v2654, 0.0
    %v2734 = vmax.f32 %v2204, 0.0
    %v2735 = vmax.f32 %v2206, 0.0
    %v2736 = vmax.f32 %v2656, 0.0
    %v2737 = vmax.f32 %v2658, 0.0
    %v2738 = vmax.f32 %v2210, 0.0
    %v2739 = vmax.f32 %v2212, 0.0
    %v2740 = vmax.f32 %v2662, 0.0
    %v2741 = vmax.f32 %v2664, 0.0
    %v2742 = vmax.f32 %v2214, 0.0
    %v2743 = vmax.f32 %v2216, 0.0
    %v2744 = vmax.f32 %v2666, 0.0
    %v2745 = vmax.f32 %v2668, 0.0
    %v2746 = vmax.f32 %v2220, 0.0
    %v2747 = vmax.f32 %v2222, 0.0
    %v2748 = vmax.f32 %v2672, 0.0
    %v2749 = vmax.f32 %v2674, 0.0
    %v2750 = vmax.f32 %v2224, 0.0
    %v2751 = vmax.f32 %v2226, 0.0
    %v2752 = vmax.f32 %v2676, 0.0
    %v2753 = vmax.f32 %v2678, 0.0
    %v2754 = vmax.f32 %v2230, 0.0
    %v2755 = vmax.f32 %v2232, 0.0
    %v2756 = vmax.f32 %v2682, 0.0
    %v2757 = vmax.f32 %v2684, 0.0
    %v2758 = vmax.f32 %v2234, 0.0
    %v2759 = vmax.f32 %v2236, 0.0
    %v2760 = vmax.f32 %v2686, 0.0
    %v2761 = vmax.f32 %v2688, 0.0
    %v2762 = vmax.f32 %v2240, 0.0
    %v2763 = vmax.f32 %v2242, 0.0
    %v2764 = vmax.f32 %v2692, 0.0
    %v2765 = vmax.f32 %v2694, 0.0
    %v2766 = vmax.f32 %v2244, 0.0
    %v2767 = vmax.f32 %v2246, 0.0
    %v2768 = vmax.f32 %v2696, 0.0
    %v2769 = vmax.f32 %v2698, 0.0
    %v2770 = vmax.f32 %v2250, 0.0
    %v2771 = vmax.f32 %v2252, 0.0
    %v2772 = vmax.f32 %v2702, 0.0
    %v2773 = vmax.f32 %v2704, 0.0
    %v2774 = vmax.f32 %v2254, 0.0
    %v2775 = vmax.f32 %v2256, 0.0
    %v2776 = vmax.f32 %v2706, 0.0
    %v2777 = vmax.f32 %v2708, 0.0
    %v2778 = vmax.f32 %v2260, 0.0
    %v2779 = vmax.f32 %v2262, 0.0
    %v2780 = vmax.f32 %v2712, 0.0
    %v2781 = vmax.f32 %v2714, 0.0
    %v2782 = vmax.f32 %v2264, 0.0
    %v2783 = vmax.f32 %v2266, 0.0
    %v2784 = vmax.f32 %v2716, 0.0
    %v2785 = vmax.f32 %v2718, 0.0
    %v2786 = vmax.f32 %v2270, 0.0
    %v2787 = vmax.f32 %v2272, 0.0
    %v2788 = vmax.f32 %v2722, 0.0
    %v2789 = vmax.f32 %v2724, 0.0
    %v2790 = vmax.f32 %v2274, 0.0
    %v2791 = vmax.f32 %v2276, 0.0
    %v2792 = vmax.f32 %v2726, 0.0
    %v2793 = vmax.f32 %v2728, 0.0
    %v2794 = vpack.c.bf16 %v2734, %v2730
    %v2795 = vpack.c.bf16 %v2735, %v2731
    %v2796 = vpack.c.bf16 %v2736, %v2732
    %v2797 = vpack.c.bf16 %v2737, %v2733
    %v2798 = vpack.c.bf16 %v2742, %v2738
    %v2799 = vpack.c.bf16 %v2743, %v2739
    %v2800 = vpack.c.bf16 %v2744, %v2740
    %v2801 = vpack.c.bf16 %v2745, %v2741
    %v2802 = vpack.c.bf16 %v2750, %v2746
    %v2803 = vpack.c.bf16 %v2751, %v2747
    %v2804 = vpack.c.bf16 %v2752, %v2748
    %v2805 = vpack.c.bf16 %v2753, %v2749
    %v2806 = vpack.c.bf16 %v2758, %v2754
    %v2807 = vpack.c.bf16 %v2759, %v2755
    %v2808 = vpack.c.bf16 %v2760, %v2756
    %v2809 = vpack.c.bf16 %v2761, %v2757
    %v2810 = vpack.c.bf16 %v2766, %v2762
    %v2811 = vpack.c.bf16 %v2767, %v2763
    %v2812 = vpack.c.bf16 %v2768, %v2764
    %v2813 = vpack.c.bf16 %v2769, %v2765
    %v2814 = vpack.c.bf16 %v2774, %v2770
    %v2815 = vpack.c.bf16 %v2775, %v2771
    %v2816 = vpack.c.bf16 %v2776, %v2772
    %v2817 = vpack.c.bf16 %v2777, %v2773
    %v2818 = vpack.c.bf16 %v2782, %v2778
    %v2819 = vpack.c.bf16 %v2783, %v2779
    %v2820 = vpack.c.bf16 %v2784, %v2780
    %v2821 = vpack.c.bf16 %v2785, %v2781
    %v2822 = vpack.c.bf16 %v2790, %v2786
    %v2823 = vpack.c.bf16 %v2791, %v2787
    %v2824 = vpack.c.bf16 %v2792, %v2788
    %v2825 = vpack.c.bf16 %v2793, %v2789
    %v2826 = vld [vmem:[#allocation8] sm:$0xf]
    %v2827 = vld [vmem:[#allocation8 + $0x4] sm:$0xf]
    %v2828 = vld [vmem:[#allocation8 + $0x8] sm:$0xf]
    %v2829 = vld [vmem:[#allocation8 + $0xc] sm:$0xf]
    %v2830 = vld [vmem:[#allocation8 + $0x10] sm:$0xf]
    %v2831 = vld [vmem:[#allocation8 + $0x14] sm:$0xf]
    %v2832 = vld [vmem:[#allocation8 + $0x18] sm:$0xf]
    %v2833 = vld [vmem:[#allocation8 + $0x1c] sm:$0xf]
    %v2834 = vld [vmem:[#allocation8 + $0x20] sm:$0xf]
    %v2835 = vld [vmem:[#allocation8 + $0x24] sm:$0xf]
    %v2836 = vld [vmem:[#allocation8 + $0x28] sm:$0xf]
    %v2837 = vld [vmem:[#allocation8 + $0x2c] sm:$0xf]
    %v2838 = vld [vmem:[#allocation8 + $0x30] sm:$0xf]
    %v2839 = vld [vmem:[#allocation8 + $0x34] sm:$0xf]
    %v2840 = vld [vmem:[#allocation8 + $0x38] sm:$0xf]
    %v2841 = vld [vmem:[#allocation8 + $0x3c] sm:$0xf]
    %v2842 = vld [vmem:[#allocation8 + $0x40] sm:$0xf]
    %v2843 = vld [vmem:[#allocation8 + $0x44] sm:$0xf]
    %v2844 = vld [vmem:[#allocation8 + $0x48] sm:$0xf]
    %v2845 = vld [vmem:[#allocation8 + $0x4c] sm:$0xf]
    %v2846 = vld [vmem:[#allocation8 + $0x50] sm:$0xf]
    %v2847 = vld [vmem:[#allocation8 + $0x54] sm:$0xf]
    %v2848 = vld [vmem:[#allocation8 + $0x58] sm:$0xf]
    %v2849 = vld [vmem:[#allocation8 + $0x5c] sm:$0xf]
    %v2850 = vld [vmem:[#allocation8 + $0x60] sm:$0xf]
    %v2851 = vld [vmem:[#allocation8 + $0x64] sm:$0xf]
    %v2852 = vld [vmem:[#allocation8 + $0x68] sm:$0xf]
    %v2853 = vld [vmem:[#allocation8 + $0x6c] sm:$0xf]
    %v2854 = vld [vmem:[#allocation8 + $0x70] sm:$0xf]
    %v2855 = vld [vmem:[#allocation8 + $0x74] sm:$0xf]
    %v2856 = vld [vmem:[#allocation8 + $0x78] sm:$0xf]
    %v2857 = vld [vmem:[#allocation8 + $0x7c] sm:$0xf]
    %v2858 = vld [vmem:[#allocation8 + $0x80] sm:$0xf]
    %v2859 = vld [vmem:[#allocation8 + $0x84] sm:$0xf]
    %v2860 = vld [vmem:[#allocation8 + $0x88] sm:$0xf]
    %v2861 = vld [vmem:[#allocation8 + $0x8c] sm:$0xf]
    %v2862 = vld [vmem:[#allocation8 + $0x90] sm:$0xf]
    %v2863 = vld [vmem:[#allocation8 + $0x94] sm:$0xf]
    %v2864 = vld [vmem:[#allocation8 + $0x98] sm:$0xf]
    %v2865 = vld [vmem:[#allocation8 + $0x9c] sm:$0xf]
    %v2866 = vld [vmem:[#allocation8 + $0xa0] sm:$0xf]
    %v2867 = vld [vmem:[#allocation8 + $0xa4] sm:$0xf]
    %v2868 = vld [vmem:[#allocation8 + $0xa8] sm:$0xf]
    %v2869 = vld [vmem:[#allocation8 + $0xac] sm:$0xf]
    %v2870 = vld [vmem:[#allocation8 + $0xb0] sm:$0xf]
    %v2871 = vld [vmem:[#allocation8 + $0xb4] sm:$0xf]
    %v2872 = vld [vmem:[#allocation8 + $0xb8] sm:$0xf]
    %v2873 = vld [vmem:[#allocation8 + $0xbc] sm:$0xf]
    %v2874 = vld [vmem:[#allocation8 + $0xc0] sm:$0xf]
    %v2875 = vld [vmem:[#allocation8 + $0xc4] sm:$0xf]
    %v2876 = vld [vmem:[#allocation8 + $0xc8] sm:$0xf]
    %v2877 = vld [vmem:[#allocation8 + $0xcc] sm:$0xf]
    %v2878 = vld [vmem:[#allocation8 + $0xd0] sm:$0xf]
    %v2879 = vld [vmem:[#allocation8 + $0xd4] sm:$0xf]
    %v2880 = vld [vmem:[#allocation8 + $0xd8] sm:$0xf]
    %v2881 = vld [vmem:[#allocation8 + $0xdc] sm:$0xf]
    %v2882 = vld [vmem:[#allocation8 + $0xe0] sm:$0xf]
    %v2883 = vld [vmem:[#allocation8 + $0xe4] sm:$0xf]
    %v2884 = vld [vmem:[#allocation8 + $0xe8] sm:$0xf]
    %v2885 = vld [vmem:[#allocation8 + $0xec] sm:$0xf]
    %v2886 = vld [vmem:[#allocation8 + $0xf0] sm:$0xf]
    %v2887 = vld [vmem:[#allocation8 + $0xf4] sm:$0xf]
    %v2888 = vld [vmem:[#allocation8 + $0xf8] sm:$0xf]
    %v2889 = vld [vmem:[#allocation8 + $0xfc] sm:$0xf]
    %v2890 = vld [vmem:[%s4] sm:$0x1]
    %v2892 = vlaneseq
    %v2893 = vshrl.u32 %v2892, 7
    %v2894 = vsub.s32 0, %v2893
    %v2895 = vrot.slane %v2890, %v2894
    %v2961 = vunpack.c.l.b16 %v2826
    %v2962 = vunpack.c.l.b16 %v2827
    %v2963 = vunpack.c.l.b16 %v2828
    %v2964 = vunpack.c.l.b16 %v2829
    %v2965 = vunpack.c.l.b16 %v2830
    %v2966 = vunpack.c.l.b16 %v2831
    %v2967 = vunpack.c.l.b16 %v2832
    %v2968 = vunpack.c.l.b16 %v2833
    %v2969 = vunpack.c.l.b16 %v2834
    %v2970 = vunpack.c.l.b16 %v2835
    %v2971 = vunpack.c.l.b16 %v2836
    %v2972 = vunpack.c.l.b16 %v2837
    %v2973 = vunpack.c.l.b16 %v2838
    %v2974 = vunpack.c.l.b16 %v2839
    %v2975 = vunpack.c.l.b16 %v2840
    %v2976 = vunpack.c.l.b16 %v2841
    %v2977 = vunpack.c.l.b16 %v2842
    %v2978 = vunpack.c.l.b16 %v2843
    %v2979 = vunpack.c.l.b16 %v2844
    %v2980 = vunpack.c.l.b16 %v2845
    %v2981 = vunpack.c.l.b16 %v2846
    %v2982 = vunpack.c.l.b16 %v2847
    %v2983 = vunpack.c.l.b16 %v2848
    %v2984 = vunpack.c.l.b16 %v2849
    %v2985 = vunpack.c.l.b16 %v2850
    %v2986 = vunpack.c.l.b16 %v2851
    %v2987 = vunpack.c.l.b16 %v2852
    %v2988 = vunpack.c.l.b16 %v2853
    %v2989 = vunpack.c.l.b16 %v2854
    %v2990 = vunpack.c.l.b16 %v2855
    %v2991 = vunpack.c.l.b16 %v2856
    %v2992 = vunpack.c.l.b16 %v2857
    %v2993 = vunpack.c.l.b16 %v2858
    %v2994 = vunpack.c.l.b16 %v2859
    %v2995 = vunpack.c.l.b16 %v2860
    %v2996 = vunpack.c.l.b16 %v2861
    %v2997 = vunpack.c.l.b16 %v2862
    %v2998 = vunpack.c.l.b16 %v2863
    %v2999 = vunpack.c.l.b16 %v2864
    %v3000 = vunpack.c.l.b16 %v2865
    %v3001 = vunpack.c.l.b16 %v2866
    %v3002 = vunpack.c.l.b16 %v2867
    %v3003 = vunpack.c.l.b16 %v2868
    %v3004 = vunpack.c.l.b16 %v2869
    %v3005 = vunpack.c.l.b16 %v2870
    %v3006 = vunpack.c.l.b16 %v2871
    %v3007 = vunpack.c.l.b16 %v2872
    %v3008 = vunpack.c.l.b16 %v2873
    %v3009 = vunpack.c.l.b16 %v2874
    %v3010 = vunpack.c.l.b16 %v2875
    %v3011 = vunpack.c.l.b16 %v2876
    %v3012 = vunpack.c.l.b16 %v2877
    %v3013 = vunpack.c.l.b16 %v2878
    %v3014 = vunpack.c.l.b16 %v2879
    %v3015 = vunpack.c.l.b16 %v2880
    %v3016 = vunpack.c.l.b16 %v2881
    %v3017 = vunpack.c.l.b16 %v2882
    %v3018 = vunpack.c.l.b16 %v2883
    %v3019 = vunpack.c.l.b16 %v2884
    %v3020 = vunpack.c.l.b16 %v2885
    %v3021 = vunpack.c.l.b16 %v2886
    %v3022 = vunpack.c.l.b16 %v2887
    %v3023 = vunpack.c.l.b16 %v2888
    %v3024 = vunpack.c.l.b16 %v2889
    %v3025 = vpack.c.b16 %v2962, %v2961
    %v3026 = vpack.c.b16 %v2964, %v2963
    %v3027 = vpack.c.b16 %v2966, %v2965
    %v3028 = vpack.c.b16 %v2968, %v2967
    %v3029 = vpack.c.b16 %v2970, %v2969
    %v3030 = vpack.c.b16 %v2972, %v2971
    %v3031 = vpack.c.b16 %v2974, %v2973
    %v3032 = vpack.c.b16 %v2976, %v2975
    %v3033 = vpack.c.b16 %v2978, %v2977
    %v3034 = vpack.c.b16 %v2980, %v2979
    %v3035 = vpack.c.b16 %v2982, %v2981
    %v3036 = vpack.c.b16 %v2984, %v2983
    %v3037 = vpack.c.b16 %v2986, %v2985
    %v3038 = vpack.c.b16 %v2988, %v2987
    %v3039 = vpack.c.b16 %v2990, %v2989
    %v3040 = vpack.c.b16 %v2992, %v2991
    %v3041 = vpack.c.b16 %v2994, %v2993
    %v3042 = vpack.c.b16 %v2996, %v2995
    %v3043 = vpack.c.b16 %v2998, %v2997
    %v3044 = vpack.c.b16 %v3000, %v2999
    %v3045 = vpack.c.b16 %v3002, %v3001
    %v3046 = vpack.c.b16 %v3004, %v3003
    %v3047 = vpack.c.b16 %v3006, %v3005
    %v3048 = vpack.c.b16 %v3008, %v3007
    %v3049 = vpack.c.b16 %v3010, %v3009
    %v3050 = vpack.c.b16 %v3012, %v3011
    %v3051 = vpack.c.b16 %v3014, %v3013
    %v3052 = vpack.c.b16 %v3016, %v3015
    %v3053 = vpack.c.b16 %v3018, %v3017
    %v3054 = vpack.c.b16 %v3020, %v3019
    %v3055 = vpack.c.b16 %v3022, %v3021
    %v3056 = vpack.c.b16 %v3024, %v3023
    %3089 = vmatprep.subr.bf16.mxu0 0
    %3090 = vmatpush1.bf16.msra.mxu0 %v3032
    %3091 = vmatprep.subr.bf16.mxu0 0
    %3092 = vmatpush1.bf16.msra.mxu0 %v3031
    %3093 = vmatprep.subr.bf16.mxu0 0
    %3094 = vmatpush1.bf16.msra.mxu0 %v3030
    %3095 = vmatprep.subr.bf16.mxu0 0
    %3096 = vmatpush1.bf16.msra.mxu0 %v3029
    %3097 = vmatprep.subr.bf16.mxu0 0
    %3098 = vmatpush1.bf16.msra.mxu0 %v3028
    %3099 = vmatprep.subr.bf16.mxu0 0
    %3100 = vmatpush1.bf16.msra.mxu0 %v3027
    %3101 = vmatprep.subr.bf16.mxu0 0
    %3102 = vmatpush1.bf16.msra.mxu0 %v3026
    %3103 = vmatprep.subr.bf16.mxu0 0
    %3104 = vmatpush1.bf16.msra.mxu0 %v3025
    %3105 = vmatprep.subr.bf16.mxu0 0
    %3106 = vmatpush2.bf16.msra.mxu0 %v3040
    %3107 = vmatprep.subr.bf16.mxu0 0
    %3108 = vmatpush2.bf16.msra.mxu0 %v3039
    %3109 = vmatprep.subr.bf16.mxu0 0
    %3110 = vmatpush2.bf16.msra.mxu0 %v3038
    %3111 = vmatprep.subr.bf16.mxu0 0
    %3112 = vmatpush2.bf16.msra.mxu0 %v3037
    %3113 = vmatprep.subr.bf16.mxu0 0
    %3114 = vmatpush2.bf16.msra.mxu0 %v3036
    %3115 = vmatprep.subr.bf16.mxu0 0
    %3116 = vmatpush2.bf16.msra.mxu0 %v3035
    %3117 = vmatprep.subr.bf16.mxu0 0
    %3118 = vmatpush2.bf16.msra.mxu0 %v3034
    %3119 = vmatprep.subr.bf16.mxu0 0
    %3120 = vmatpush2.bf16.msra.mxu0 %v3033
    %3121 = vmatprep.mubr.bf16.mxu0 %v2795
    %3122 = vmatmul.mubr.bf16.gmra.mxu0 %v2794
    %v3123 = vpop.f32.mrf.mxu0
    %v3124 = vadd.f32 %v2895, %v3123
    %v3125 = vpop.f32.mrf.mxu0
    %v3126 = vpop.f32.mrf.mxu0
    %v3127 = vadd.f32 %v2895, %v3126
    %v3128 = vpop.f32.mrf.mxu0
    %3129 = vmatprep.mubr.bf16.mxu0 %v2799
    %3130 = vmatmul.mubr.bf16.gmra.mxu0 %v2798
    %v3131 = vpop.f32.mrf.mxu0
    %v3132 = vadd.f32 %v2895, %v3131
    %v3133 = vpop.f32.mrf.mxu0
    %v3134 = vpop.f32.mrf.mxu0
    %v3135 = vadd.f32 %v2895, %v3134
    %v3136 = vpop.f32.mrf.mxu0
    %3137 = vmatprep.mubr.bf16.mxu0 %v2803
    %3138 = vmatmul.mubr.bf16.gmra.mxu0 %v2802
    %v3139 = vpop.f32.mrf.mxu0
    %v3140 = vadd.f32 %v2895, %v3139
    %v3141 = vpop.f32.mrf.mxu0
    %v3142 = vpop.f32.mrf.mxu0
    %v3143 = vadd.f32 %v2895, %v3142
    %v3144 = vpop.f32.mrf.mxu0
    %3145 = vmatprep.mubr.bf16.mxu0 %v2807
    %3146 = vmatmul.mubr.bf16.gmra.mxu0 %v2806
    %v3147 = vpop.f32.mrf.mxu0
    %v3148 = vadd.f32 %v2895, %v3147
    %v3149 = vpop.f32.mrf.mxu0
    %v3150 = vpop.f32.mrf.mxu0
    %v3151 = vadd.f32 %v2895, %v3150
    %v3152 = vpop.f32.mrf.mxu0
    %3153 = vmatprep.mubr.bf16.mxu0 %v2811
    %3154 = vmatmul.mubr.bf16.gmra.mxu0 %v2810
    %v3155 = vpop.f32.mrf.mxu0
    %v3156 = vadd.f32 %v2895, %v3155
    %v3157 = vpop.f32.mrf.mxu0
    %v3158 = vpop.f32.mrf.mxu0
    %v3159 = vadd.f32 %v2895, %v3158
    %v3160 = vpop.f32.mrf.mxu0
    %3161 = vmatprep.mubr.bf16.mxu0 %v2815
    %3162 = vmatmul.mubr.bf16.gmra.mxu0 %v2814
    %v3163 = vpop.f32.mrf.mxu0
    %v3164 = vadd.f32 %v2895, %v3163
    %v3165 = vpop.f32.mrf.mxu0
    %v3166 = vpop.f32.mrf.mxu0
    %v3167 = vadd.f32 %v2895, %v3166
    %v3168 = vpop.f32.mrf.mxu0
    %3169 = vmatprep.mubr.bf16.mxu0 %v2819
    %3170 = vmatmul.mubr.bf16.gmra.mxu0 %v2818
    %v3171 = vpop.f32.mrf.mxu0
    %v3172 = vadd.f32 %v2895, %v3171
    %v3173 = vpop.f32.mrf.mxu0
    %v3174 = vpop.f32.mrf.mxu0
    %v3175 = vadd.f32 %v2895, %v3174
    %v3176 = vpop.f32.mrf.mxu0
    %3177 = vmatprep.mubr.bf16.mxu0 %v2823
    %3178 = vmatmul.mubr.bf16.gmra.mxu0 %v2822
    %v3179 = vpop.f32.mrf.mxu0
    %v3180 = vadd.f32 %v2895, %v3179
    %v3181 = vpop.f32.mrf.mxu0
    %v3182 = vpop.f32.mrf.mxu0
    %v3183 = vadd.f32 %v2895, %v3182
    %v3184 = vpop.f32.mrf.mxu0
    %3185 = vdwg.mxu0
    %3186 = vmatprep.subr.bf16.mxu0 0
    %3187 = vmatpush1.bf16.msra.mxu0 %v3048
    %3188 = vmatprep.subr.bf16.mxu0 0
    %3189 = vmatpush1.bf16.msra.mxu0 %v3047
    %3190 = vmatprep.subr.bf16.mxu0 0
    %3191 = vmatpush1.bf16.msra.mxu0 %v3046
    %3192 = vmatprep.subr.bf16.mxu0 0
    %3193 = vmatpush1.bf16.msra.mxu0 %v3045
    %3194 = vmatprep.subr.bf16.mxu0 0
    %3195 = vmatpush1.bf16.msra.mxu0 %v3044
    %3196 = vmatprep.subr.bf16.mxu0 0
    %3197 = vmatpush1.bf16.msra.mxu0 %v3043
    %3198 = vmatprep.subr.bf16.mxu0 0
    %3199 = vmatpush1.bf16.msra.mxu0 %v3042
    %3200 = vmatprep.subr.bf16.mxu0 0
    %3201 = vmatpush1.bf16.msra.mxu0 %v3041
    %3202 = vmatprep.subr.bf16.mxu0 0
    %3203 = vmatpush2.bf16.msra.mxu0 %v3056
    %3204 = vmatprep.subr.bf16.mxu0 0
    %3205 = vmatpush2.bf16.msra.mxu0 %v3055
    %3206 = vmatprep.subr.bf16.mxu0 0
    %3207 = vmatpush2.bf16.msra.mxu0 %v3054
    %3208 = vmatprep.subr.bf16.mxu0 0
    %3209 = vmatpush2.bf16.msra.mxu0 %v3053
    %3210 = vmatprep.subr.bf16.mxu0 0
    %3211 = vmatpush2.bf16.msra.mxu0 %v3052
    %3212 = vmatprep.subr.bf16.mxu0 0
    %3213 = vmatpush2.bf16.msra.mxu0 %v3051
    %3214 = vmatprep.subr.bf16.mxu0 0
    %3215 = vmatpush2.bf16.msra.mxu0 %v3050
    %3216 = vmatprep.subr.bf16.mxu0 0
    %3217 = vmatpush2.bf16.msra.mxu0 %v3049
    %3218 = vmatprep.mubr.bf16.mxu0 %v2797
    %3219 = vmatmul.mubr.bf16.gmra.mxu0 %v2796
    %v3220 = vpop.f32.mrf.mxu0
    %v3221 = vadd.f32 %v3124, %v3220
    %v3222 = vpop.f32.mrf.mxu0
    %v3223 = vpop.f32.mrf.mxu0
    %v3224 = vadd.f32 %v3127, %v3223
    %v3225 = vpop.f32.mrf.mxu0
    %3226 = vmatprep.mubr.bf16.mxu0 %v2801
    %3227 = vmatmul.mubr.bf16.gmra.mxu0 %v2800
    %v3228 = vpop.f32.mrf.mxu0
    %v3229 = vadd.f32 %v3132, %v3228
    %v3230 = vpop.f32.mrf.mxu0
    %v3231 = vpop.f32.mrf.mxu0
    %v3232 = vadd.f32 %v3135, %v3231
    %v3233 = vpop.f32.mrf.mxu0
    %3234 = vmatprep.mubr.bf16.mxu0 %v2805
    %3235 = vmatmul.mubr.bf16.gmra.mxu0 %v2804
    %v3236 = vpop.f32.mrf.mxu0
    %v3237 = vadd.f32 %v3140, %v3236
    %v3238 = vpop.f32.mrf.mxu0
    %v3239 = vpop.f32.mrf.mxu0
    %v3240 = vadd.f32 %v3143, %v3239
    %v3241 = vpop.f32.mrf.mxu0
    %3242 = vmatprep.mubr.bf16.mxu0 %v2809
    %3243 = vmatmul.mubr.bf16.gmra.mxu0 %v2808
    %v3244 = vpop.f32.mrf.mxu0
    %v3245 = vadd.f32 %v3148, %v3244
    %v3246 = vpop.f32.mrf.mxu0
    %v3247 = vpop.f32.mrf.mxu0
    %v3248 = vadd.f32 %v3151, %v3247
    %v3249 = vpop.f32.mrf.mxu0
    %3250 = vmatprep.mubr.bf16.mxu0 %v2813
    %3251 = vmatmul.mubr.bf16.gmra.mxu0 %v2812
    %v3252 = vpop.f32.mrf.mxu0
    %v3253 = vadd.f32 %v3156, %v3252
    %v3254 = vpop.f32.mrf.mxu0
    %v3255 = vpop.f32.mrf.mxu0
    %v3256 = vadd.f32 %v3159, %v3255
    %v3257 = vpop.f32.mrf.mxu0
    %3258 = vmatprep.mubr.bf16.mxu0 %v2817
    %3259 = vmatmul.mubr.bf16.gmra.mxu0 %v2816
    %v3260 = vpop.f32.mrf.mxu0
    %v3261 = vadd.f32 %v3164, %v3260
    %v3262 = vpop.f32.mrf.mxu0
    %v3263 = vpop.f32.mrf.mxu0
    %v3264 = vadd.f32 %v3167, %v3263
    %v3265 = vpop.f32.mrf.mxu0
    %3266 = vmatprep.mubr.bf16.mxu0 %v2821
    %3267 = vmatmul.mubr.bf16.gmra.mxu0 %v2820
    %v3268 = vpop.f32.mrf.mxu0
    %v3269 = vadd.f32 %v3172, %v3268
    %v3270 = vpop.f32.mrf.mxu0
    %v3271 = vpop.f32.mrf.mxu0
    %v3272 = vadd.f32 %v3175, %v3271
    %v3273 = vpop.f32.mrf.mxu0
    %3274 = vmatprep.mubr.bf16.mxu0 %v2825
    %3275 = vmatmul.mubr.bf16.gmra.mxu0 %v2824
    %v3276 = vpop.f32.mrf.mxu0
    %v3277 = vadd.f32 %v3180, %v3276
    %v3278 = vpop.f32.mrf.mxu0
    %v3279 = vpop.f32.mrf.mxu0
    %v3280 = vadd.f32 %v3183, %v3279
    %v3281 = vpop.f32.mrf.mxu0
    %3282 = vdwg.mxu0
    %v3283 = vmax.f32 %v3221, 0.0
    %v3284 = vmax.f32 %v3224, 0.0
    %v3285 = vmax.f32 %v3229, 0.0
    %v3286 = vmax.f32 %v3232, 0.0
    %v3287 = vmax.f32 %v3237, 0.0
    %v3288 = vmax.f32 %v3240, 0.0
    %v3289 = vmax.f32 %v3245, 0.0
    %v3290 = vmax.f32 %v3248, 0.0
    %v3291 = vmax.f32 %v3253, 0.0
    %v3292 = vmax.f32 %v3256, 0.0
    %v3293 = vmax.f32 %v3261, 0.0
    %v3294 = vmax.f32 %v3264, 0.0
    %v3295 = vmax.f32 %v3269, 0.0
    %v3296 = vmax.f32 %v3272, 0.0
    %v3297 = vmax.f32 %v3277, 0.0
    %v3298 = vmax.f32 %v3280, 0.0
    %v3299 = vpack.c.bf16 %v3284, %v3283
    %v3300 = vpack.c.bf16 %v3286, %v3285
    %v3301 = vpack.c.bf16 %v3288, %v3287
    %v3302 = vpack.c.bf16 %v3290, %v3289
    %v3303 = vpack.c.bf16 %v3292, %v3291
    %v3304 = vpack.c.bf16 %v3294, %v3293
    %v3305 = vpack.c.bf16 %v3296, %v3295
    %v3306 = vpack.c.bf16 %v3298, %v3297
    %v3307 = vld [vmem:[%s5] sm:$0xf]
    %v3308 = vld [vmem:[%s5 + $0x4] sm:$0xf]
    %v3309 = vld [vmem:[%s5 + $0x8] sm:$0xf]
    %v3310 = vld [vmem:[%s5 + $0xc] sm:$0xf]
    %v3311 = vld [vmem:[%s5 + $0x10] sm:$0xf]
    %v3312 = vld [vmem:[%s5 + $0x14] sm:$0xf]
    %v3313 = vld [vmem:[%s5 + $0x18] sm:$0xf]
    %v3314 = vld [vmem:[%s5 + $0x1c] sm:$0xf]
    %v3315 = vld [vmem:[%s5 + $0x20] sm:$0xf]
    %v3316 = vld [vmem:[%s5 + $0x24] sm:$0xf]
    %v3317 = vld [vmem:[%s5 + $0x28] sm:$0xf]
    %v3318 = vld [vmem:[%s5 + $0x2c] sm:$0xf]
    %v3319 = vld [vmem:[%s5 + $0x30] sm:$0xf]
    %v3320 = vld [vmem:[%s5 + $0x34] sm:$0xf]
    %v3321 = vld [vmem:[%s5 + $0x38] sm:$0xf]
    %v3322 = vld [vmem:[%s5 + $0x3c] sm:$0xf]
    %v3323 = vld [vmem:[%s6] sm:$0x1]
    %v3325 = vlaneseq
    %v3326 = vshrl.u32 %v3325, 7
    %v3327 = vsub.s32 0, %v3326
    %v3328 = vrot.slane %v3323, %v3327
    %v3346 = vunpack.c.l.b16 %v3307
    %v3347 = vunpack.c.l.b16 %v3308
    %v3348 = vunpack.c.l.b16 %v3309
    %v3349 = vunpack.c.l.b16 %v3310
    %v3350 = vunpack.c.l.b16 %v3311
    %v3351 = vunpack.c.l.b16 %v3312
    %v3352 = vunpack.c.l.b16 %v3313
    %v3353 = vunpack.c.l.b16 %v3314
    %v3354 = vunpack.c.l.b16 %v3315
    %v3355 = vunpack.c.l.b16 %v3316
    %v3356 = vunpack.c.l.b16 %v3317
    %v3357 = vunpack.c.l.b16 %v3318
    %v3358 = vunpack.c.l.b16 %v3319
    %v3359 = vunpack.c.l.b16 %v3320
    %v3360 = vunpack.c.l.b16 %v3321
    %v3361 = vunpack.c.l.b16 %v3322
    %v3362 = vpack.c.b16 %v3347, %v3346
    %v3363 = vpack.c.b16 %v3349, %v3348
    %v3364 = vpack.c.b16 %v3351, %v3350
    %v3365 = vpack.c.b16 %v3353, %v3352
    %v3366 = vpack.c.b16 %v3355, %v3354
    %v3367 = vpack.c.b16 %v3357, %v3356
    %v3368 = vpack.c.b16 %v3359, %v3358
    %v3369 = vpack.c.b16 %v3361, %v3360
    %3378 = vmatprep.subr.bf16.mxu0 0
    %3379 = vmatpush1.bf16.msra.mxu0 %v3369
    %3380 = vmatprep.subr.bf16.mxu0 0
    %3381 = vmatpush1.bf16.msra.mxu0 %v3368
    %3382 = vmatprep.subr.bf16.mxu0 0
    %3383 = vmatpush1.bf16.msra.mxu0 %v3367
    %3384 = vmatprep.subr.bf16.mxu0 0
    %3385 = vmatpush1.bf16.msra.mxu0 %v3366
    %3386 = vmatprep.subr.bf16.mxu0 0
    %3387 = vmatpush1.bf16.msra.mxu0 %v3365
    %3388 = vmatprep.subr.bf16.mxu0 0
    %3389 = vmatpush1.bf16.msra.mxu0 %v3364
    %3390 = vmatprep.subr.bf16.mxu0 0
    %3391 = vmatpush1.bf16.msra.mxu0 %v3363
    %3392 = vmatprep.subr.bf16.mxu0 0
    %3393 = vmatpush1.bf16.msra.mxu0 %v3362
    %3394 = vmatprep.subr.bf16.mxu0 0
    %3395 = vmatpush2.bf16.msra.mxu0 0
    %3396 = vmatprep.subr.bf16.mxu0 0
    %3397 = vmatpush2.bf16.msra.mxu0 0
    %3398 = vmatprep.subr.bf16.mxu0 0
    %3399 = vmatpush2.bf16.msra.mxu0 0
    %3400 = vmatprep.subr.bf16.mxu0 0
    %3401 = vmatpush2.bf16.msra.mxu0 0
    %3402 = vmatprep.subr.bf16.mxu0 0
    %3403 = vmatpush2.bf16.msra.mxu0 0
    %3404 = vmatprep.subr.bf16.mxu0 0
    %3405 = vmatpush2.bf16.msra.mxu0 0
    %3406 = vmatprep.subr.bf16.mxu0 0
    %3407 = vmatpush2.bf16.msra.mxu0 0
    %3408 = vmatprep.subr.bf16.mxu0 0
    %3409 = vmatpush2.bf16.msra.mxu0 0
    %3410 = vmatprep.mubr.bf16.mxu0 0
    %3411 = vmatmul.mubr.bf16.gmra.mxu0 %v3299
    %v3412 = vpop.f32.mrf.mxu0
    %v3413 = vadd.f32 %v3328, %v3412
    %v3414 = vpop.f32.mrf.mxu0
    %v3415 = vpop.f32.mrf.mxu0
    %v3416 = vadd.f32 %v3328, %v3415
    %v3417 = vpop.f32.mrf.mxu0
    %3418 = vmatprep.mubr.bf16.mxu0 0
    %3419 = vmatmul.mubr.bf16.gmra.mxu0 %v3300
    %v3420 = vpop.f32.mrf.mxu0
    %v3421 = vadd.f32 %v3328, %v3420
    %v3422 = vpop.f32.mrf.mxu0
    %v3423 = vpop.f32.mrf.mxu0
    %v3424 = vadd.f32 %v3328, %v3423
    %v3425 = vpop.f32.mrf.mxu0
    %3426 = vmatprep.mubr.bf16.mxu0 0
    %3427 = vmatmul.mubr.bf16.gmra.mxu0 %v3301
    %v3428 = vpop.f32.mrf.mxu0
    %v3429 = vadd.f32 %v3328, %v3428
    %v3430 = vpop.f32.mrf.mxu0
    %v3431 = vpop.f32.mrf.mxu0
    %v3432 = vadd.f32 %v3328, %v3431
    %v3433 = vpop.f32.mrf.mxu0
    %3434 = vmatprep.mubr.bf16.mxu0 0
    %3435 = vmatmul.mubr.bf16.gmra.mxu0 %v3302
    %v3436 = vpop.f32.mrf.mxu0
    %v3437 = vadd.f32 %v3328, %v3436
    %v3438 = vpop.f32.mrf.mxu0
    %v3439 = vpop.f32.mrf.mxu0
    %v3440 = vadd.f32 %v3328, %v3439
    %v3441 = vpop.f32.mrf.mxu0
    %3442 = vmatprep.mubr.bf16.mxu0 0
    %3443 = vmatmul.mubr.bf16.gmra.mxu0 %v3303
    %v3444 = vpop.f32.mrf.mxu0
    %v3445 = vadd.f32 %v3328, %v3444
    %v3446 = vpop.f32.mrf.mxu0
    %v3447 = vpop.f32.mrf.mxu0
    %v3448 = vadd.f32 %v3328, %v3447
    %v3449 = vpop.f32.mrf.mxu0
    %3450 = vmatprep.mubr.bf16.mxu0 0
    %3451 = vmatmul.mubr.bf16.gmra.mxu0 %v3304
    %v3452 = vpop.f32.mrf.mxu0
    %v3453 = vadd.f32 %v3328, %v3452
    %v3454 = vpop.f32.mrf.mxu0
    %v3455 = vpop.f32.mrf.mxu0
    %v3456 = vadd.f32 %v3328, %v3455
    %v3457 = vpop.f32.mrf.mxu0
    %3458 = vmatprep.mubr.bf16.mxu0 0
    %3459 = vmatmul.mubr.bf16.gmra.mxu0 %v3305
    %v3460 = vpop.f32.mrf.mxu0
    %v3461 = vadd.f32 %v3328, %v3460
    %v3462 = vpop.f32.mrf.mxu0
    %v3463 = vpop.f32.mrf.mxu0
    %v3464 = vadd.f32 %v3328, %v3463
    %v3465 = vpop.f32.mrf.mxu0
    %3466 = vmatprep.mubr.bf16.mxu0 0
    %3467 = vmatmul.mubr.bf16.gmra.mxu0 %v3306
    %v3468 = vpop.f32.mrf.mxu0
    %v3469 = vadd.f32 %v3328, %v3468
    %v3470 = vpop.f32.mrf.mxu0
    %v3471 = vpop.f32.mrf.mxu0
    %v3472 = vadd.f32 %v3328, %v3471
    %v3473 = vpop.f32.mrf.mxu0
    %3474 = vdwg.mxu0
    %v3475 = vmax.f32 %v3413, 0.0
    %v3476 = vmax.f32 %v3416, 0.0
    %v3477 = vmax.f32 %v3421, 0.0
    %v3478 = vmax.f32 %v3424, 0.0
    %v3479 = vmax.f32 %v3429, 0.0
    %v3480 = vmax.f32 %v3432, 0.0
    %v3481 = vmax.f32 %v3437, 0.0
    %v3482 = vmax.f32 %v3440, 0.0
    %v3483 = vmax.f32 %v3445, 0.0
    %v3484 = vmax.f32 %v3448, 0.0
    %v3485 = vmax.f32 %v3453, 0.0
    %v3486 = vmax.f32 %v3456, 0.0
    %v3487 = vmax.f32 %v3461, 0.0
    %v3488 = vmax.f32 %v3464, 0.0
    %v3489 = vmax.f32 %v3469, 0.0
    %v3490 = vmax.f32 %v3472, 0.0
    %v3491 = vld [vmem:[%s7] sm:$0x1]
    %v3492 = vpack.c.bf16 %v3476, %v3475
    %v3493 = vpack.c.bf16 %v3478, %v3477
    %v3494 = vpack.c.bf16 %v3480, %v3479
    %v3495 = vpack.c.bf16 %v3482, %v3481
    %v3496 = vpack.c.bf16 %v3484, %v3483
    %v3497 = vpack.c.bf16 %v3486, %v3485
    %v3498 = vpack.c.bf16 %v3488, %v3487
    %v3499 = vpack.c.bf16 %v3490, %v3489
    %s3500 = sld [smem:[#allocation2]]
    %v3501 = vstv %s3500
    %vm3502 = vcmask 261120
    %v3504 = vsel %vm3502, %v3491, 0
    %v3507 = vsel %vm3502, %v3492, 0
    %v3510 = vsel %vm3502, %v3493, 0
    %v3513 = vsel %vm3502, %v3494, 0
    %v3516 = vsel %vm3502, %v3495, 0
    %v3519 = vsel %vm3502, %v3496, 0
    %v3522 = vsel %vm3502, %v3497, 0
    %v3525 = vsel %vm3502, %v3498, 0
    %v3528 = vsel %vm3502, %v3499, 0
    %3530 = vmatprep.subr.bf16.mxu0 0
    %3531 = vmatpush1.bf16.xpose.msra.mxu0 %v3528
    %3532 = vmatprep.subr.bf16.mxu0 0
    %3533 = vmatpush1.bf16.xpose.msra.mxu0 %v3525
    %3534 = vmatprep.subr.bf16.mxu0 0
    %3535 = vmatpush1.bf16.xpose.msra.mxu0 %v3522
    %3536 = vmatprep.subr.bf16.mxu0 0
    %3537 = vmatpush1.bf16.xpose.msra.mxu0 %v3519
    %3538 = vmatprep.subr.bf16.mxu0 0
    %3539 = vmatpush1.bf16.xpose.msra.mxu0 %v3516
    %3540 = vmatprep.subr.bf16.mxu0 0
    %3541 = vmatpush1.bf16.xpose.msra.mxu0 %v3513
    %3542 = vmatprep.subr.bf16.mxu0 0
    %3543 = vmatpush1.bf16.xpose.msra.mxu0 %v3510
    %3544 = vmatprep.subr.bf16.mxu0 0
    %3545 = vmatpush1.bf16.xpose.msra.mxu0 %v3507
    %3546 = vmatprep.subr.bf16.mxu0 0
    %3547 = vmatpush2.bf16.xpose.msra.mxu0 0
    %3548 = vmatprep.subr.bf16.mxu0 0
    %3549 = vmatpush2.bf16.xpose.msra.mxu0 0
    %3550 = vmatprep.subr.bf16.mxu0 0
    %3551 = vmatpush2.bf16.xpose.msra.mxu0 0
    %3552 = vmatprep.subr.bf16.mxu0 0
    %3553 = vmatpush2.bf16.xpose.msra.mxu0 0
    %3554 = vmatprep.subr.bf16.mxu0 0
    %3555 = vmatpush2.bf16.xpose.msra.mxu0 0
    %3556 = vmatprep.subr.bf16.mxu0 0
    %3557 = vmatpush2.bf16.xpose.msra.mxu0 0
    %3558 = vmatprep.subr.bf16.mxu0 0
    %3559 = vmatpush2.bf16.xpose.msra.mxu0 0
    %3560 = vmatprep.subr.bf16.mxu0 0
    %3561 = vmatpush2.bf16.xpose.msra.mxu0 0
    %3562 = vmatprep.mubr.bf16.mxu0 0
    %3563 = vmatmul.mubr.bf16.gmra.mxu0 %v3504
    %v3564 = vpop.f32.mrf.mxu0
    %v3565 = vadd.f32 %v3501, %v3564
    %v3566 = vpop.f32.mrf.mxu0
    %v3567 = vpop.f32.mrf.mxu0
    %v3568 = vpop.f32.mrf.mxu0
    %3569 = vdwg.mxu0
    %v3570 = vxor.u32 %v3565, 2147483648
    %v3571 = vmul.f32 %v3570, 1.442695
    %v3572 = vpow.pop %v3571
    %v3573 = vadd.f32 %v3572, 1.0
    %v3574 = vrcp.pop %v3573
    %v3575 = vmul.f32 1.0, %v3574
    %3576 = vst [vmem:[#allocation9] sm:$0x1] %v3575
    // Predicated region
    $region50: #{tpu_custom_call.1} parent=1 // pred_check
      _
    $region51: #{tpu_custom_call.1} parent=1 // pred_check_branch
      %3578 = sbr.rel (0) target = $region53
    $region52: #{tpu_custom_call.1} parent=1 // pred_region
      %s3580 = ssub.s32 16, 16
      %3581 = vsyncadd [#allocation5], %s3580
      %s3583 = sshll.u32 [#allocation9], 4
      %s3584 = int_to_ptr.vmem [resolvable:$true] %s3583
      %3586 = dma.vmem_to_hbm [thread:$0]  %s3584, 16, %s9, [#allocation5]
    $region53: #{tpu_custom_call.1} parent=1 // pred_fallthru
      _
    // Predicated region
    $region54: #{tpu_custom_call.1} parent=1 // pred_check
      _
    $region55: #{tpu_custom_call.1} parent=1 // pred_check_branch
      %3588 = sbr.rel (0) target = $region57
    $region56: #{tpu_custom_call.1} parent=1 // pred_region
      %3589 = dma.done [#allocation5], 16
    $region57: #{tpu_custom_call.1} parent=1 // pred_fallthru
      _
    %3590 = vsyncpa [#allocation4], 1
    %3591 = vsyncpa [#allocation7], 1
    %3592 = vsyncpa [#allocation5], 1

</llo_original>
